<compile_context>
chip_gen: v5e
topology: v5e:2x2
jax: 0.10.0
libtpu: 0.0.40
codegen_flags: <defaults>
</compile_context>

<pallas_src>
import jax
import jax.numpy as jnp
from jax.experimental import pallas as pl
from jax.experimental.pallas import tpu as pltpu

D_MODEL = 32
N_HEADS = 2
D_K = D_MODEL // N_HEADS
D_FF = 64
LN_EPS = 1e-6


# ----------------------------- in-kernel helpers ---------------------------

def _layer_norm(v, g, b):
    # Annotated-Transformer LayerNorm: g*(x-mean)/(std+eps)+b, unbiased std,
    # computed in a single fused pass (sum + sum-of-squares).
    n = v.shape[-1]
    s1 = jnp.sum(v, axis=-1, keepdims=True)
    s2 = jnp.sum(v * v, axis=-1, keepdims=True)
    mean = s1 / n
    var = jnp.maximum((s2 - s1 * mean) / (n - 1), 0.0)
    return (v - mean) * (g / (jnp.sqrt(var) + LN_EPS)) + b


def _mha_last_row(q_row, k_all, v_all, add_mask, wo, bo):
    """Multi-head attention for a single query row per batch item.

    q_row: [Bp, D]; k_all, v_all: [Bp, Tk, D]; add_mask: [1, Tk] (additive,
    0 = keep, -1e9 = masked); wo: [D, D]; bo: [1, D].  Returns [Bp, D].
    The per-head output projection is folded in (attn @ Wo == sum_h oh @ Wo_h),
    avoiding any in-kernel concatenate and keeping stores lane-dense at D.
    """
    Bp, D = q_row.shape
    scale = 1.0 / (D_K ** 0.5)
    out = jnp.zeros((Bp, D), jnp.float32)
    for h in range(N_HEADS):                       # static unroll, N_HEADS == 2
        sl = slice(h * D_K, (h + 1) * D_K)
        qh = q_row[:, None, sl]                    # [Bp, 1, dk]
        kh = k_all[:, :, sl]                       # [Bp, Tk, dk]
        vh = v_all[:, :, sl]                       # [Bp, Tk, dk]
        sc = jnp.einsum("bqd,bkd->bqk", qh, kh,
                        preferred_element_type=jnp.float32) * scale
        sc = sc + add_mask[None, :, :]             # additive mask (no where)
        sc = sc - jnp.max(sc, axis=-1, keepdims=True)
        p = jnp.exp(sc)
        p = p * pl.reciprocal(jnp.sum(p, axis=-1, keepdims=True), approx=True)
        oh = jnp.einsum("bqk,bkd->bqd", p, vh,
                        preferred_element_type=jnp.float32)[:, 0, :]  # [Bp, dk]
        out = out + jnp.dot(oh, wo[sl, :], preferred_element_type=jnp.float32)
    return out + bo


# ------------------------------- fused kernel ------------------------------

def _decoder_layer_kernel(
    x_ref, mem_ref, lmask_ref, smask_ref,
    ln0_g_ref, ln0_b_ref, wqkv_s_ref, bqkv_s_ref, wo_s_ref, bo_s_ref,
    ln1_g_ref, ln1_b_ref, wq_x_ref, bq_x_ref, wkv_x_ref, bkv_x_ref,
    wo_x_ref, bo_x_ref,
    ln2_g_ref, ln2_b_ref, w1_ref, b1_ref, w2_ref, b2_ref,
    o_ref,
):
    x = x_ref[...]                                   # [Bp, T, D]
    mem = mem_ref[...]                               # [Bp, Tm, D]
    Bp, T, D = x.shape
    Tm = mem.shape[1]

    # ---- sublayer 0: x_last + self_attn(norm(x))[last query row] ----------
    xn = _layer_norm(x, ln0_g_ref[...], ln0_b_ref[...])              # [Bp,T,D]
    qkv = (jnp.dot(xn.reshape(Bp * T, D), wqkv_s_ref[...],
                   preferred_element_type=jnp.float32)
           + bqkv_s_ref[...]).reshape(Bp, T, 3 * D)                  # fused QKV
    q_last = qkv[:, T - 1, 0:D]                                      # [Bp, D]
    k_s = qkv[:, :, D:2 * D]                                         # [Bp,T,D]
    v_s = qkv[:, :, 2 * D:3 * D]                                     # [Bp,T,D]
    self_out = _mha_last_row(q_last, k_s, v_s, lmask_ref[...],
                             wo_s_ref[...], bo_s_ref[...])
    x1 = x[:, T - 1, :] + self_out                                   # residual + slice

    # ---- sublayer 1: x + src_attn(norm(x), memory, memory) ----------------
    xn1 = _layer_norm(x1, ln1_g_ref[...], ln1_b_ref[...])            # [Bp, D]
    q_x = jnp.dot(xn1, wq_x_ref[...],
                  preferred_element_type=jnp.float32) + bq_x_ref[...]
    kv = (jnp.dot(mem.reshape(Bp * Tm, D), wkv_x_ref[...],
                  preferred_element_type=jnp.float32)
          + bkv_x_ref[...]).reshape(Bp, Tm, 2 * D)                   # fused KV
    k_x = kv[:, :, 0:D]
    v_x = kv[:, :, D:2 * D]
    src_out = _mha_last_row(q_x, k_x, v_x, smask_ref[...],
                            wo_x_ref[...], bo_x_ref[...])
    x2 = x1 + src_out

    # ---- sublayer 2: x + feed_forward(norm(x)) -----------------------------
    xn2 = _layer_norm(x2, ln2_g_ref[...], ln2_b_ref[...])
    h = jnp.maximum(jnp.dot(xn2, w1_ref[...],
                            preferred_element_type=jnp.float32) + b1_ref[...],
                    0.0)
    ffo = jnp.dot(h, w2_ref[...],
                  preferred_element_type=jnp.float32) + b2_ref[...]
    out = x2 + ffo                                                    # [Bp, D]

    o_ref[...] = out[:, None, :]                                      # [Bp,1,D]


# ------------------------------ python wrapper ------------------------------

def decoder_layer(params, x, memory, price_series_mask, local_price_mask,
                  padding_price):
    """x: [B, N, T, D]; memory: [B, N, Tm, D] -> out [B, N, 1, D]."""
    # TODO(synk): RAT's local-context padding_price path inside MultiHeadedAttention
    # is not reproduced; standard scaled-dot-product MHA is used (padding_price unused).
    del padding_price
    B, N, T, D = x.shape
    Tm = memory.shape[2]
    BN = B * N
    x_f = x.reshape(BN, T, D)
    m_f = memory.reshape(BN, Tm, D)

    # Additive masks (1 = keep -> 0, 0 = masked -> -1e9).  Only the last query
    # row of the self-attention mask is needed because the layer keeps x[..., -1:, :].
    neg = jnp.float32(-1e9)
    lmask = jnp.where(local_price_mask[-1:, :] > 0, jnp.float32(0.0), neg)    # [1, T]
    smask = jnp.where(price_series_mask.reshape(1, Tm) > 0,
                      jnp.float32(0.0), neg)                                  # [1, Tm]

    sa, ca, ff = params["self_attn"], params["src_attn"], params["ff"]
    wqkv_s = jnp.concatenate([sa["wq"], sa["wk"], sa["wv"]], axis=1)          # [D, 3D]
    bqkv_s = jnp.concatenate([sa["bq"], sa["bk"], sa["bv"]]).reshape(1, 3 * D)
    wkv_x = jnp.concatenate([ca["wk"], ca["wv"]], axis=1)                     # [D, 2D]
    bkv_x = jnp.concatenate([ca["bk"], ca["bv"]]).reshape(1, 2 * D)

    # 2-way split over batch*assets so v7x's two TensorCores both get work.
    G = 2 if BN % 2 == 0 else 1
    Bp = BN // G
    full2 = lambda i: (0, 0)

    out = pl.pallas_call(
        _decoder_layer_kernel,
        out_shape=jax.ShapeDtypeStruct((BN, 1, D), jnp.float32),
        grid=(G,),
        in_specs=[
            pl.BlockSpec((Bp, T, D), lambda i: (i, 0, 0)),    # x
            pl.BlockSpec((Bp, Tm, D), lambda i: (i, 0, 0)),   # memory
            pl.BlockSpec((1, T), full2),                      # self-attn mask (additive)
            pl.BlockSpec((1, Tm), full2),                     # src-attn mask (additive)
            pl.BlockSpec((1, D), full2),                      # ln0_g
            pl.BlockSpec((1, D), full2),                      # ln0_b
            pl.BlockSpec((D, 3 * D), full2),                  # wqkv_self
            pl.BlockSpec((1, 3 * D), full2),                  # bqkv_self
            pl.BlockSpec((D, D), full2),                      # wo_self
            pl.BlockSpec((1, D), full2),                      # bo_self
            pl.BlockSpec((1, D), full2),                      # ln1_g
            pl.BlockSpec((1, D), full2),                      # ln1_b
            pl.BlockSpec((D, D), full2),                      # wq_src
            pl.BlockSpec((1, D), full2),                      # bq_src
            pl.BlockSpec((D, 2 * D), full2),                  # wkv_src
            pl.BlockSpec((1, 2 * D), full2),                  # bkv_src
            pl.BlockSpec((D, D), full2),                      # wo_src
            pl.BlockSpec((1, D), full2),                      # bo_src
            pl.BlockSpec((1, D), full2),                      # ln2_g
            pl.BlockSpec((1, D), full2),                      # ln2_b
            pl.BlockSpec((D, D_FF), full2),                   # w1
            pl.BlockSpec((1, D_FF), full2),                   # b1
            pl.BlockSpec((D_FF, D), full2),                   # w2
            pl.BlockSpec((1, D), full2),                      # b2
        ],
        out_specs=pl.BlockSpec((Bp, 1, D), lambda i: (i, 0, 0)),
        compiler_params=pltpu.CompilerParams(
            dimension_semantics=("parallel",)),
    )(
        x_f, m_f, lmask, smask,
        params["ln0_g"].reshape(1, D), params["ln0_b"].reshape(1, D),
        wqkv_s, bqkv_s, sa["wo"], sa["bo"].reshape(1, D),
        params["ln1_g"].reshape(1, D), params["ln1_b"].reshape(1, D),
        ca["wq"], ca["bq"].reshape(1, D), wkv_x, bkv_x,
        ca["wo"], ca["bo"].reshape(1, D),
        params["ln2_g"].reshape(1, D), params["ln2_b"].reshape(1, D),
        ff["w1"], ff["b1"].reshape(1, D_FF), ff["w2"], ff["b2"].reshape(1, D),
    )
    return out.reshape(B, N, 1, D)


# --------------------------- params & pure-JAX ref ---------------------------

def init_params(key):
    def lin(k, din, dout):
        k1, k2 = jax.random.split(k)
        w = jax.random.normal(k1, (din, dout), jnp.float32) / jnp.sqrt(din)
        b = jax.random.normal(k2, (dout,), jnp.float32) * 0.01
        return w, b

    def mha(k):
        ks = jax.random.split(k, 4)
        wq, bq = lin(ks[0], D_MODEL, D_MODEL)
        wk, bk = lin(ks[1], D_MODEL, D_MODEL)
        wv, bv = lin(ks[2], D_MODEL, D_MODEL)
        wo, bo = lin(ks[3], D_MODEL, D_MODEL)
        return dict(wq=wq, bq=bq, wk=wk, bk=bk, wv=wv, bv=bv, wo=wo, bo=bo)

    ks = jax.random.split(key, 4)
    w1, b1 = lin(jax.random.split(ks[2])[0], D_MODEL, D_FF)
    w2, b2 = lin(jax.random.split(ks[2])[1], D_FF, D_MODEL)
    ones = jnp.ones((D_MODEL,), jnp.float32)
    zeros = jnp.zeros((D_MODEL,), jnp.float32)
    return dict(
        self_attn=mha(ks[0]),
        src_attn=mha(ks[1]),
        ff=dict(w1=w1, b1=b1, w2=w2, b2=b2),
        ln0_g=ones, ln0_b=zeros,
        ln1_g=ones, ln1_b=zeros,
        ln2_g=ones, ln2_b=zeros,
    )


def _reference(params, x, memory, price_series_mask, local_price_mask):
    """Straightforward JAX implementation of the decoder layer (for checking)."""
    B, N, T, D = x.shape
    Tm = memory.shape[2]
    BN = B * N
    xf = x.reshape(BN, T, D)
    mf = memory.reshape(BN, Tm, D)

    def ln(v, g, b):
        mean = v.mean(-1, keepdims=True)
        d = v - mean
        var = (d * d).sum(-1, keepdims=True) / (v.shape[-1] - 1)
        return g * d / (jnp.sqrt(var) + LN_EPS) + b

    def mha(p, q_in, k_in, v_in, mask):
        BN_, Tq, _ = q_in.shape
        Tk = k_in.shape[1]
        q = (q_in @ p["wq"] + p["bq"]).reshape(BN_, Tq, N_HEADS, D_K).transpose(0, 2, 1, 3)
        k = (k_in @ p["wk"] + p["bk"]).reshape(BN_, Tk, N_HEADS, D_K).transpose(0, 2, 1, 3)
        v = (v_in @ p["wv"] + p["bv"]).reshape(BN_, Tk, N_HEADS, D_K).transpose(0, 2, 1, 3)
        sc = jnp.einsum("bhqd,bhkd->bhqk", q, k) / jnp.sqrt(jnp.float32(D_K))
        sc = jnp.where(mask[None, None] > 0, sc, jnp.float32(-1e9))
        pr = jax.nn.softmax(sc, axis=-1)
        o = jnp.einsum("bhqk,bhkd->bhqd", pr, v).transpose(0, 2, 1, 3).reshape(BN_, Tq, D)
        return o @ p["wo"] + p["bo"]

    xn = ln(xf, params["ln0_g"], params["ln0_b"])
    xf = xf + mha(params["self_attn"], xn, xn, xn, local_price_mask)
    xf = xf[:, -1:, :]
    xn = ln(xf, params["ln1_g"], params["ln1_b"])
    xf = xf + mha(params["src_attn"], xn, mf, mf, price_series_mask.reshape(1, Tm))
    xn = ln(xf, params["ln2_g"], params["ln2_b"])
    ff = params["ff"]
    h = jnp.maximum(xn @ ff["w1"] + ff["b1"], 0.0)
    xf = xf + (h @ ff["w2"] + ff["b2"])
    return xf.reshape(B, N, 1, D)


if __name__ == "__main__":
    B, N_ASSETS, T, TM = 2, 4, 8, 8
    key = jax.random.PRNGKey(0)
    kx, km, kp = jax.random.split(key, 3)

    x = jax.random.normal(kx, (B, N_ASSETS, T, D_MODEL), jnp.float32)
    memory = jax.random.normal(km, (B, N_ASSETS, TM, D_MODEL), jnp.float32)
    local_price_mask = jnp.tril(jnp.ones((T, T), jnp.float32))   # causal self-attn mask
    price_series_mask = jnp.ones((1, TM), jnp.float32)           # no padding in memory
    padding_price = None

    params = init_params(kp)
    run = jax.jit(decoder_layer)
    out = run(params, x, memory, price_series_mask, local_price_mask,
              padding_price)
    out = jax.block_until_ready(out)

    assert out.shape == (B, N_ASSETS, 1, D_MODEL)
    assert bool(jnp.all(jnp.isfinite(out)))
    ref = _reference(params, x, memory, price_series_mask, local_price_mask)
    assert bool(jnp.allclose(out, ref, rtol=1e-2, atol=1e-2)), \
        float(jnp.max(jnp.abs(out - ref)))
    print("KERNEL_OK")
</pallas_src>

<mosaic_0001>
module attributes {stable_mosaic.version = 11 : i64} {
  func.func @_decoder_layer_kernel(%arg0: i32, %arg1: memref<4x8x32xf32, #tpu.memory_space<vmem>>, %arg2: memref<4x8x32xf32, #tpu.memory_space<vmem>>, %arg3: memref<1x8xf32, #tpu.memory_space<vmem>>, %arg4: memref<1x8xf32, #tpu.memory_space<vmem>>, %arg5: memref<1x32xf32, #tpu.memory_space<vmem>>, %arg6: memref<1x32xf32, #tpu.memory_space<vmem>>, %arg7: memref<32x96xf32, #tpu.memory_space<vmem>>, %arg8: memref<1x96xf32, #tpu.memory_space<vmem>>, %arg9: memref<32x32xf32, #tpu.memory_space<vmem>>, %arg10: memref<1x32xf32, #tpu.memory_space<vmem>>, %arg11: memref<1x32xf32, #tpu.memory_space<vmem>>, %arg12: memref<1x32xf32, #tpu.memory_space<vmem>>, %arg13: memref<32x32xf32, #tpu.memory_space<vmem>>, %arg14: memref<1x32xf32, #tpu.memory_space<vmem>>, %arg15: memref<32x64xf32, #tpu.memory_space<vmem>>, %arg16: memref<1x64xf32, #tpu.memory_space<vmem>>, %arg17: memref<32x32xf32, #tpu.memory_space<vmem>>, %arg18: memref<1x32xf32, #tpu.memory_space<vmem>>, %arg19: memref<1x32xf32, #tpu.memory_space<vmem>>, %arg20: memref<1x32xf32, #tpu.memory_space<vmem>>, %arg21: memref<32x64xf32, #tpu.memory_space<vmem>>, %arg22: memref<1x64xf32, #tpu.memory_space<vmem>>, %arg23: memref<64x32xf32, #tpu.memory_space<vmem>>, %arg24: memref<1x32xf32, #tpu.memory_space<vmem>>, %arg25: memref<4x1x32xf32, #tpu.memory_space<vmem>>) attributes {dimension_semantics = [#tpu.dimension_semantics<parallel>], iteration_bounds = array<i64: 2>, scalar_prefetch = 0 : i64, scratch_operands = 0 : i64, tpu.core_type = #tpu.core_type<tc>, window_params = [{transform_indices = @transform_0, window_bounds = array<i64: 4, 8, 32>}, {transform_indices = @transform_1, window_bounds = array<i64: 4, 8, 32>}, {pipeline_mode = #tpu.pipeline_mode<synchronous>, transform_indices = @transform_2, window_bounds = array<i64: 1, 8>}, {pipeline_mode = #tpu.pipeline_mode<synchronous>, transform_indices = @transform_3, window_bounds = array<i64: 1, 8>}, {pipeline_mode = #tpu.pipeline_mode<synchronous>, transform_indices = @transform_4, window_bounds = array<i64: 1, 32>}, {pipeline_mode = #tpu.pipeline_mode<synchronous>, transform_indices = @transform_5, window_bounds = array<i64: 1, 32>}, {pipeline_mode = #tpu.pipeline_mode<synchronous>, transform_indices = @transform_6, window_bounds = array<i64: 32, 96>}, {pipeline_mode = #tpu.pipeline_mode<synchronous>, transform_indices = @transform_7, window_bounds = array<i64: 1, 96>}, {pipeline_mode = #tpu.pipeline_mode<synchronous>, transform_indices = @transform_8, window_bounds = array<i64: 32, 32>}, {pipeline_mode = #tpu.pipeline_mode<synchronous>, transform_indices = @transform_9, window_bounds = array<i64: 1, 32>}, {pipeline_mode = #tpu.pipeline_mode<synchronous>, transform_indices = @transform_10, window_bounds = array<i64: 1, 32>}, {pipeline_mode = #tpu.pipeline_mode<synchronous>, transform_indices = @transform_11, window_bounds = array<i64: 1, 32>}, {pipeline_mode = #tpu.pipeline_mode<synchronous>, transform_indices = @transform_12, window_bounds = array<i64: 32, 32>}, {pipeline_mode = #tpu.pipeline_mode<synchronous>, transform_indices = @transform_13, window_bounds = array<i64: 1, 32>}, {pipeline_mode = #tpu.pipeline_mode<synchronous>, transform_indices = @transform_14, window_bounds = array<i64: 32, 64>}, {pipeline_mode = #tpu.pipeline_mode<synchronous>, transform_indices = @transform_15, window_bounds = array<i64: 1, 64>}, {pipeline_mode = #tpu.pipeline_mode<synchronous>, transform_indices = @transform_16, window_bounds = array<i64: 32, 32>}, {pipeline_mode = #tpu.pipeline_mode<synchronous>, transform_indices = @transform_17, window_bounds = array<i64: 1, 32>}, {pipeline_mode = #tpu.pipeline_mode<synchronous>, transform_indices = @transform_18, window_bounds = array<i64: 1, 32>}, {pipeline_mode = #tpu.pipeline_mode<synchronous>, transform_indices = @transform_19, window_bounds = array<i64: 1, 32>}, {pipeline_mode = #tpu.pipeline_mode<synchronous>, transform_indices = @transform_20, window_bounds = array<i64: 32, 64>}, {pipeline_mode = #tpu.pipeline_mode<synchronous>, transform_indices = @transform_21, window_bounds = array<i64: 1, 64>}, {pipeline_mode = #tpu.pipeline_mode<synchronous>, transform_indices = @transform_22, window_bounds = array<i64: 64, 32>}, {pipeline_mode = #tpu.pipeline_mode<synchronous>, transform_indices = @transform_23, window_bounds = array<i64: 1, 32>}, {transform_indices = @transform_24, window_bounds = array<i64: 4, 1, 32>}]} {
    %c0 = arith.constant 0 : index
    %c0_0 = arith.constant 0 : index
    %c0_1 = arith.constant 0 : index
    %0 = vector.load %arg1[%c0, %c0_0, %c0_1] : memref<4x8x32xf32, #tpu.memory_space<vmem>>, vector<4x8x32xf32>
    %c0_2 = arith.constant 0 : index
    %c0_3 = arith.constant 0 : index
    %c0_4 = arith.constant 0 : index
    %1 = vector.load %arg2[%c0_2, %c0_3, %c0_4] : memref<4x8x32xf32, #tpu.memory_space<vmem>>, vector<4x8x32xf32>
    %c0_5 = arith.constant 0 : index
    %c0_6 = arith.constant 0 : index
    %2 = vector.load %arg5[%c0_5, %c0_6] : memref<1x32xf32, #tpu.memory_space<vmem>>, vector<1x32xf32>
    %c0_7 = arith.constant 0 : index
    %c0_8 = arith.constant 0 : index
    %3 = vector.load %arg6[%c0_7, %c0_8] : memref<1x32xf32, #tpu.memory_space<vmem>>, vector<1x32xf32>
    %cst = arith.constant dense<0.000000e+00> : vector<4x8xf32>
    %4 = vector.multi_reduction <add>, %0, %cst [2] : vector<4x8x32xf32> to vector<4x8xf32>
    %5 = vector.shape_cast %4 : vector<4x8xf32> to vector<4x8x1xf32>
    %6 = arith.mulf %0, %0 : vector<4x8x32xf32>
    %cst_9 = arith.constant dense<0.000000e+00> : vector<4x8xf32>
    %7 = vector.multi_reduction <add>, %6, %cst_9 [2] : vector<4x8x32xf32> to vector<4x8xf32>
    %8 = vector.shape_cast %7 : vector<4x8xf32> to vector<4x8x1xf32>
    %cst_10 = arith.constant 3.200000e+01 : f32
    %9 = vector.broadcast %cst_10 : f32 to vector<4x8x1xf32>
    %10 = arith.divf %5, %9 : vector<4x8x1xf32>
    %11 = arith.mulf %5, %10 : vector<4x8x1xf32>
    %12 = arith.subf %8, %11 : vector<4x8x1xf32>
    %cst_11 = arith.constant 3.100000e+01 : f32
    %13 = vector.broadcast %cst_11 : f32 to vector<4x8x1xf32>
    %14 = arith.divf %12, %13 : vector<4x8x1xf32>
    %cst_12 = arith.constant 0.000000e+00 : f32
    %15 = vector.broadcast %cst_12 : f32 to vector<4x8x1xf32>
    %16 = arith.maximumf %14, %15 : vector<4x8x1xf32>
    %17 = vector.broadcast %10 : vector<4x8x1xf32> to vector<4x8x32xf32>
    %18 = arith.subf %0, %17 : vector<4x8x32xf32>
    %19 = math.sqrt %16 : vector<4x8x1xf32>
    %cst_13 = arith.constant 9.99999997E-7 : f32
    %20 = vector.broadcast %cst_13 : f32 to vector<4x8x1xf32>
    %21 = arith.addf %19, %20 : vector<4x8x1xf32>
    %22 = vector.shape_cast %2 : vector<1x32xf32> to vector<1x1x32xf32>
    %23 = vector.broadcast %22 : vector<1x1x32xf32> to vector<4x8x32xf32>
    %24 = vector.broadcast %21 : vector<4x8x1xf32> to vector<4x8x32xf32>
    %25 = arith.divf %23, %24 : vector<4x8x32xf32>
    %26 = arith.mulf %18, %25 : vector<4x8x32xf32>
    %27 = vector.shape_cast %3 : vector<1x32xf32> to vector<1x1x32xf32>
    %28 = vector.broadcast %27 : vector<1x1x32xf32> to vector<4x8x32xf32>
    %29 = arith.addf %26, %28 : vector<4x8x32xf32>
    %30 = vector.shape_cast %29 : vector<4x8x32xf32> to vector<32x32xf32>
    %c0_14 = arith.constant 0 : index
    %c0_15 = arith.constant 0 : index
    %31 = vector.load %arg7[%c0_14, %c0_15] : memref<32x96xf32, #tpu.memory_space<vmem>>, vector<32x96xf32>
    %cst_16 = arith.constant dense<0.000000e+00> : vector<32x96xf32>
    %32 = tpu.matmul %30, %31, %cst_16 {dimension_numbers = #tpu.dot_dimension_numbers<[1], [0], [0], [1], [0, 0, 1, 1], [], []>} : vector<32x32xf32>, vector<32x96xf32>, vector<32x96xf32> -> vector<32x96xf32>
    %c0_17 = arith.constant 0 : index
    %c0_18 = arith.constant 0 : index
    %33 = vector.load %arg8[%c0_17, %c0_18] : memref<1x96xf32, #tpu.memory_space<vmem>>, vector<1x96xf32>
    %34 = vector.broadcast %33 : vector<1x96xf32> to vector<32x96xf32>
    %35 = arith.addf %32, %34 : vector<32x96xf32>
    %36 = vector.shape_cast %35 : vector<32x96xf32> to vector<4x8x96xf32>
    %37 = vector.extract_strided_slice %36 {offsets = [0, 7, 0], sizes = [4, 1, 32], strides = [1, 1, 1]} : vector<4x8x96xf32> to vector<4x1x32xf32>
    %38 = vector.shape_cast %37 : vector<4x1x32xf32> to vector<4x32xf32>
    %39 = vector.extract_strided_slice %36 {offsets = [0, 0, 32], sizes = [4, 8, 32], strides = [1, 1, 1]} : vector<4x8x96xf32> to vector<4x8x32xf32>
    %40 = vector.extract_strided_slice %36 {offsets = [0, 0, 64], sizes = [4, 8, 32], strides = [1, 1, 1]} : vector<4x8x96xf32> to vector<4x8x32xf32>
    %c0_19 = arith.constant 0 : index
    %c0_20 = arith.constant 0 : index
    %41 = vector.load %arg3[%c0_19, %c0_20] : memref<1x8xf32, #tpu.memory_space<vmem>>, vector<1x8xf32>
    %c0_21 = arith.constant 0 : index
    %c0_22 = arith.constant 0 : index
    %42 = vector.load %arg9[%c0_21, %c0_22] : memref<32x32xf32, #tpu.memory_space<vmem>>, vector<32x32xf32>
    %c0_23 = arith.constant 0 : index
    %c0_24 = arith.constant 0 : index
    %43 = vector.load %arg10[%c0_23, %c0_24] : memref<1x32xf32, #tpu.memory_space<vmem>>, vector<1x32xf32>
    %cst_25 = arith.constant 0.000000e+00 : f32
    %44 = vector.broadcast %cst_25 : f32 to vector<4x32xf32>
    %45 = vector.extract_strided_slice %38 {offsets = [0, 0], sizes = [4, 16], strides = [1, 1]} : vector<4x32xf32> to vector<4x16xf32>
    %46 = vector.shape_cast %45 : vector<4x16xf32> to vector<4x1x16xf32>
    %47 = vector.extract_strided_slice %39 {offsets = [0, 0, 0], sizes = [4, 8, 16], strides = [1, 1, 1]} : vector<4x8x32xf32> to vector<4x8x16xf32>
    %48 = vector.extract_strided_slice %40 {offsets = [0, 0, 0], sizes = [4, 8, 16], strides = [1, 1, 1]} : vector<4x8x32xf32> to vector<4x8x16xf32>
    "tpu.trace_start"() <{level = 10 : i32, message = "bqd,bkd->bqk"}> : () -> ()
    %cst_26 = arith.constant dense<0.000000e+00> : vector<4x1x8xf32>
    %49 = tpu.matmul %46, %47, %cst_26 {dimension_numbers = #tpu.dot_dimension_numbers<[2], [2], [1], [1], [0, 0, 0, 1, 1, 1], [0], [0]>} : vector<4x1x16xf32>, vector<4x8x16xf32>, vector<4x1x8xf32> -> vector<4x1x8xf32>
    "tpu.trace_stop"() : () -> ()
    %cst_27 = arith.constant 2.500000e-01 : f32
    %50 = vector.broadcast %cst_27 : f32 to vector<4x1x8xf32>
    %51 = arith.mulf %49, %50 : vector<4x1x8xf32>
    %52 = vector.shape_cast %41 : vector<1x8xf32> to vector<1x1x8xf32>
    %53 = vector.broadcast %52 : vector<1x1x8xf32> to vector<4x1x8xf32>
    %54 = arith.addf %51, %53 : vector<4x1x8xf32>
    %cst_28 = arith.constant dense<0xFF800000> : vector<4x1xf32>
    %55 = vector.multi_reduction <maximumf>, %54, %cst_28 [2] : vector<4x1x8xf32> to vector<4x1xf32>
    %56 = vector.shape_cast %55 : vector<4x1xf32> to vector<4x1x1xf32>
    %57 = vector.broadcast %56 : vector<4x1x1xf32> to vector<4x1x8xf32>
    %58 = arith.subf %54, %57 : vector<4x1x8xf32>
    %59 = math.exp %58 : vector<4x1x8xf32>
    %cst_29 = arith.constant dense<0.000000e+00> : vector<4x1xf32>
    %60 = vector.multi_reduction <add>, %59, %cst_29 [2] : vector<4x1x8xf32> to vector<4x1xf32>
    %61 = vector.shape_cast %60 : vector<4x1xf32> to vector<4x1x1xf32>
    %62 = tpu.reciprocal %61 {approx = true} : vector<4x1x1xf32> -> vector<4x1x1xf32>
    %63 = vector.broadcast %62 : vector<4x1x1xf32> to vector<4x1x8xf32>
    %64 = arith.mulf %59, %63 : vector<4x1x8xf32>
    "tpu.trace_start"() <{level = 10 : i32, message = "bqk,bkd->bqd"}> : () -> ()
    %cst_30 = arith.constant dense<0.000000e+00> : vector<4x1x16xf32>
    %65 = tpu.matmul %64, %48, %cst_30 {dimension_numbers = #tpu.dot_dimension_numbers<[2], [1], [1], [2], [0, 0, 0, 1, 1, 2], [0], [0]>} : vector<4x1x8xf32>, vector<4x8x16xf32>, vector<4x1x16xf32> -> vector<4x1x16xf32>
    "tpu.trace_stop"() : () -> ()
    %66 = vector.shape_cast %65 : vector<4x1x16xf32> to vector<4x16xf32>
    %67 = vector.extract_strided_slice %42 {offsets = [0, 0], sizes = [16, 32], strides = [1, 1]} : vector<32x32xf32> to vector<16x32xf32>
    %cst_31 = arith.constant dense<0.000000e+00> : vector<4x32xf32>
    %68 = tpu.matmul %66, %67, %cst_31 {dimension_numbers = #tpu.dot_dimension_numbers<[1], [0], [0], [1], [0, 0, 1, 1], [], []>} : vector<4x16xf32>, vector<16x32xf32>, vector<4x32xf32> -> vector<4x32xf32>
    %69 = arith.addf %44, %68 : vector<4x32xf32>
    %70 = vector.extract_strided_slice %38 {offsets = [0, 16], sizes = [4, 16], strides = [1, 1]} : vector<4x32xf32> to vector<4x16xf32>
    %71 = vector.shape_cast %70 : vector<4x16xf32> to vector<4x1x16xf32>
    %72 = vector.extract_strided_slice %39 {offsets = [0, 0, 16], sizes = [4, 8, 16], strides = [1, 1, 1]} : vector<4x8x32xf32> to vector<4x8x16xf32>
    %73 = vector.extract_strided_slice %40 {offsets = [0, 0, 16], sizes = [4, 8, 16], strides = [1, 1, 1]} : vector<4x8x32xf32> to vector<4x8x16xf32>
    "tpu.trace_start"() <{level = 10 : i32, message = "bqd,bkd->bqk"}> : () -> ()
    %cst_32 = arith.constant dense<0.000000e+00> : vector<4x1x8xf32>
    %74 = tpu.matmul %71, %72, %cst_32 {dimension_numbers = #tpu.dot_dimension_numbers<[2], [2], [1], [1], [0, 0, 0, 1, 1, 1], [0], [0]>} : vector<4x1x16xf32>, vector<4x8x16xf32>, vector<4x1x8xf32> -> vector<4x1x8xf32>
    "tpu.trace_stop"() : () -> ()
    %cst_33 = arith.constant 2.500000e-01 : f32
    %75 = vector.broadcast %cst_33 : f32 to vector<4x1x8xf32>
    %76 = arith.mulf %74, %75 : vector<4x1x8xf32>
    %77 = vector.shape_cast %41 : vector<1x8xf32> to vector<1x1x8xf32>
    %78 = vector.broadcast %77 : vector<1x1x8xf32> to vector<4x1x8xf32>
    %79 = arith.addf %76, %78 : vector<4x1x8xf32>
    %cst_34 = arith.constant dense<0xFF800000> : vector<4x1xf32>
    %80 = vector.multi_reduction <maximumf>, %79, %cst_34 [2] : vector<4x1x8xf32> to vector<4x1xf32>
    %81 = vector.shape_cast %80 : vector<4x1xf32> to vector<4x1x1xf32>
    %82 = vector.broadcast %81 : vector<4x1x1xf32> to vector<4x1x8xf32>
    %83 = arith.subf %79, %82 : vector<4x1x8xf32>
    %84 = math.exp %83 : vector<4x1x8xf32>
    %cst_35 = arith.constant dense<0.000000e+00> : vector<4x1xf32>
    %85 = vector.multi_reduction <add>, %84, %cst_35 [2] : vector<4x1x8xf32> to vector<4x1xf32>
    %86 = vector.shape_cast %85 : vector<4x1xf32> to vector<4x1x1xf32>
    %87 = tpu.reciprocal %86 {approx = true} : vector<4x1x1xf32> -> vector<4x1x1xf32>
    %88 = vector.broadcast %87 : vector<4x1x1xf32> to vector<4x1x8xf32>
    %89 = arith.mulf %84, %88 : vector<4x1x8xf32>
    "tpu.trace_start"() <{level = 10 : i32, message = "bqk,bkd->bqd"}> : () -> ()
    %cst_36 = arith.constant dense<0.000000e+00> : vector<4x1x16xf32>
    %90 = tpu.matmul %89, %73, %cst_36 {dimension_numbers = #tpu.dot_dimension_numbers<[2], [1], [1], [2], [0, 0, 0, 1, 1, 2], [0], [0]>} : vector<4x1x8xf32>, vector<4x8x16xf32>, vector<4x1x16xf32> -> vector<4x1x16xf32>
    "tpu.trace_stop"() : () -> ()
    %91 = vector.shape_cast %90 : vector<4x1x16xf32> to vector<4x16xf32>
    %92 = vector.extract_strided_slice %42 {offsets = [16, 0], sizes = [16, 32], strides = [1, 1]} : vector<32x32xf32> to vector<16x32xf32>
    %cst_37 = arith.constant dense<0.000000e+00> : vector<4x32xf32>
    %93 = tpu.matmul %91, %92, %cst_37 {dimension_numbers = #tpu.dot_dimension_numbers<[1], [0], [0], [1], [0, 0, 1, 1], [], []>} : vector<4x16xf32>, vector<16x32xf32>, vector<4x32xf32> -> vector<4x32xf32>
    %94 = arith.addf %69, %93 : vector<4x32xf32>
    %95 = vector.broadcast %43 : vector<1x32xf32> to vector<4x32xf32>
    %96 = arith.addf %94, %95 : vector<4x32xf32>
    %97 = vector.extract_strided_slice %0 {offsets = [0, 7, 0], sizes = [4, 1, 32], strides = [1, 1, 1]} : vector<4x8x32xf32> to vector<4x1x32xf32>
    %98 = vector.shape_cast %97 : vector<4x1x32xf32> to vector<4x32xf32>
    %99 = arith.addf %98, %96 : vector<4x32xf32>
    %c0_38 = arith.constant 0 : index
    %c0_39 = arith.constant 0 : index
    %100 = vector.load %arg11[%c0_38, %c0_39] : memref<1x32xf32, #tpu.memory_space<vmem>>, vector<1x32xf32>
    %c0_40 = arith.constant 0 : index
    %c0_41 = arith.constant 0 : index
    %101 = vector.load %arg12[%c0_40, %c0_41] : memref<1x32xf32, #tpu.memory_space<vmem>>, vector<1x32xf32>
    %cst_42 = arith.constant dense<0.000000e+00> : vector<4xf32>
    %102 = vector.multi_reduction <add>, %99, %cst_42 [1] : vector<4x32xf32> to vector<4xf32>
    %103 = vector.shape_cast %102 : vector<4xf32> to vector<4x1xf32>
    %104 = arith.mulf %99, %99 : vector<4x32xf32>
    %cst_43 = arith.constant dense<0.000000e+00> : vector<4xf32>
    %105 = vector.multi_reduction <add>, %104, %cst_43 [1] : vector<4x32xf32> to vector<4xf32>
    %106 = vector.shape_cast %105 : vector<4xf32> to vector<4x1xf32>
    %cst_44 = arith.constant 3.200000e+01 : f32
    %107 = vector.broadcast %cst_44 : f32 to vector<4x1xf32>
    %108 = arith.divf %103, %107 : vector<4x1xf32>
    %109 = arith.mulf %103, %108 : vector<4x1xf32>
    %110 = arith.subf %106, %109 : vector<4x1xf32>
    %cst_45 = arith.constant 3.100000e+01 : f32
    %111 = vector.broadcast %cst_45 : f32 to vector<4x1xf32>
    %112 = arith.divf %110, %111 : vector<4x1xf32>
    %cst_46 = arith.constant 0.000000e+00 : f32
    %113 = vector.broadcast %cst_46 : f32 to vector<4x1xf32>
    %114 = arith.maximumf %112, %113 : vector<4x1xf32>
    %115 = vector.broadcast %108 : vector<4x1xf32> to vector<4x32xf32>
    %116 = arith.subf %99, %115 : vector<4x32xf32>
    %117 = math.sqrt %114 : vector<4x1xf32>
    %cst_47 = arith.constant 9.99999997E-7 : f32
    %118 = vector.broadcast %cst_47 : f32 to vector<4x1xf32>
    %119 = arith.addf %117, %118 : vector<4x1xf32>
    %120 = vector.broadcast %100 : vector<1x32xf32> to vector<4x32xf32>
    %121 = vector.broadcast %119 : vector<4x1xf32> to vector<4x32xf32>
    %122 = arith.divf %120, %121 : vector<4x32xf32>
    %123 = arith.mulf %116, %122 : vector<4x32xf32>
    %124 = vector.broadcast %101 : vector<1x32xf32> to vector<4x32xf32>
    %125 = arith.addf %123, %124 : vector<4x32xf32>
    %c0_48 = arith.constant 0 : index
    %c0_49 = arith.constant 0 : index
    %126 = vector.load %arg13[%c0_48, %c0_49] : memref<32x32xf32, #tpu.memory_space<vmem>>, vector<32x32xf32>
    %cst_50 = arith.constant dense<0.000000e+00> : vector<4x32xf32>
    %127 = tpu.matmul %125, %126, %cst_50 {dimension_numbers = #tpu.dot_dimension_numbers<[1], [0], [0], [1], [0, 0, 1, 1], [], []>} : vector<4x32xf32>, vector<32x32xf32>, vector<4x32xf32> -> vector<4x32xf32>
    %c0_51 = arith.constant 0 : index
    %c0_52 = arith.constant 0 : index
    %128 = vector.load %arg14[%c0_51, %c0_52] : memref<1x32xf32, #tpu.memory_space<vmem>>, vector<1x32xf32>
    %129 = vector.broadcast %128 : vector<1x32xf32> to vector<4x32xf32>
    %130 = arith.addf %127, %129 : vector<4x32xf32>
    %131 = vector.shape_cast %1 : vector<4x8x32xf32> to vector<32x32xf32>
    %c0_53 = arith.constant 0 : index
    %c0_54 = arith.constant 0 : index
    %132 = vector.load %arg15[%c0_53, %c0_54] : memref<32x64xf32, #tpu.memory_space<vmem>>, vector<32x64xf32>
    %cst_55 = arith.constant dense<0.000000e+00> : vector<32x64xf32>
    %133 = tpu.matmul %131, %132, %cst_55 {dimension_numbers = #tpu.dot_dimension_numbers<[1], [0], [0], [1], [0, 0, 1, 1], [], []>} : vector<32x32xf32>, vector<32x64xf32>, vector<32x64xf32> -> vector<32x64xf32>
    %c0_56 = arith.constant 0 : index
    %c0_57 = arith.constant 0 : index
    %134 = vector.load %arg16[%c0_56, %c0_57] : memref<1x64xf32, #tpu.memory_space<vmem>>, vector<1x64xf32>
    %135 = vector.broadcast %134 : vector<1x64xf32> to vector<32x64xf32>
    %136 = arith.addf %133, %135 : vector<32x64xf32>
    %137 = vector.shape_cast %136 : vector<32x64xf32> to vector<4x8x64xf32>
    %138 = vector.extract_strided_slice %137 {offsets = [0, 0, 0], sizes = [4, 8, 32], strides = [1, 1, 1]} : vector<4x8x64xf32> to vector<4x8x32xf32>
    %139 = vector.extract_strided_slice %137 {offsets = [0, 0, 32], sizes = [4, 8, 32], strides = [1, 1, 1]} : vector<4x8x64xf32> to vector<4x8x32xf32>
    %c0_58 = arith.constant 0 : index
    %c0_59 = arith.constant 0 : index
    %140 = vector.load %arg4[%c0_58, %c0_59] : memref<1x8xf32, #tpu.memory_space<vmem>>, vector<1x8xf32>
    %c0_60 = arith.constant 0 : index
    %c0_61 = arith.constant 0 : index
    %141 = vector.load %arg17[%c0_60, %c0_61] : memref<32x32xf32, #tpu.memory_space<vmem>>, vector<32x32xf32>
    %c0_62 = arith.constant 0 : index
    %c0_63 = arith.constant 0 : index
    %142 = vector.load %arg18[%c0_62, %c0_63] : memref<1x32xf32, #tpu.memory_space<vmem>>, vector<1x32xf32>
    %cst_64 = arith.constant 0.000000e+00 : f32
    %143 = vector.broadcast %cst_64 : f32 to vector<4x32xf32>
    %144 = vector.extract_strided_slice %130 {offsets = [0, 0], sizes = [4, 16], strides = [1, 1]} : vector<4x32xf32> to vector<4x16xf32>
    %145 = vector.shape_cast %144 : vector<4x16xf32> to vector<4x1x16xf32>
    %146 = vector.extract_strided_slice %138 {offsets = [0, 0, 0], sizes = [4, 8, 16], strides = [1, 1, 1]} : vector<4x8x32xf32> to vector<4x8x16xf32>
    %147 = vector.extract_strided_slice %139 {offsets = [0, 0, 0], sizes = [4, 8, 16], strides = [1, 1, 1]} : vector<4x8x32xf32> to vector<4x8x16xf32>
    "tpu.trace_start"() <{level = 10 : i32, message = "bqd,bkd->bqk"}> : () -> ()
    %cst_65 = arith.constant dense<0.000000e+00> : vector<4x1x8xf32>
    %148 = tpu.matmul %145, %146, %cst_65 {dimension_numbers = #tpu.dot_dimension_numbers<[2], [2], [1], [1], [0, 0, 0, 1, 1, 1], [0], [0]>} : vector<4x1x16xf32>, vector<4x8x16xf32>, vector<4x1x8xf32> -> vector<4x1x8xf32>
    "tpu.trace_stop"() : () -> ()
    %cst_66 = arith.constant 2.500000e-01 : f32
    %149 = vector.broadcast %cst_66 : f32 to vector<4x1x8xf32>
    %150 = arith.mulf %148, %149 : vector<4x1x8xf32>
    %151 = vector.shape_cast %140 : vector<1x8xf32> to vector<1x1x8xf32>
    %152 = vector.broadcast %151 : vector<1x1x8xf32> to vector<4x1x8xf32>
    %153 = arith.addf %150, %152 : vector<4x1x8xf32>
    %cst_67 = arith.constant dense<0xFF800000> : vector<4x1xf32>
    %154 = vector.multi_reduction <maximumf>, %153, %cst_67 [2] : vector<4x1x8xf32> to vector<4x1xf32>
    %155 = vector.shape_cast %154 : vector<4x1xf32> to vector<4x1x1xf32>
    %156 = vector.broadcast %155 : vector<4x1x1xf32> to vector<4x1x8xf32>
    %157 = arith.subf %153, %156 : vector<4x1x8xf32>
    %158 = math.exp %157 : vector<4x1x8xf32>
    %cst_68 = arith.constant dense<0.000000e+00> : vector<4x1xf32>
    %159 = vector.multi_reduction <add>, %158, %cst_68 [2] : vector<4x1x8xf32> to vector<4x1xf32>
    %160 = vector.shape_cast %159 : vector<4x1xf32> to vector<4x1x1xf32>
    %161 = tpu.reciprocal %160 {approx = true} : vector<4x1x1xf32> -> vector<4x1x1xf32>
    %162 = vector.broadcast %161 : vector<4x1x1xf32> to vector<4x1x8xf32>
    %163 = arith.mulf %158, %162 : vector<4x1x8xf32>
    "tpu.trace_start"() <{level = 10 : i32, message = "bqk,bkd->bqd"}> : () -> ()
    %cst_69 = arith.constant dense<0.000000e+00> : vector<4x1x16xf32>
    %164 = tpu.matmul %163, %147, %cst_69 {dimension_numbers = #tpu.dot_dimension_numbers<[2], [1], [1], [2], [0, 0, 0, 1, 1, 2], [0], [0]>} : vector<4x1x8xf32>, vector<4x8x16xf32>, vector<4x1x16xf32> -> vector<4x1x16xf32>
    "tpu.trace_stop"() : () -> ()
    %165 = vector.shape_cast %164 : vector<4x1x16xf32> to vector<4x16xf32>
    %166 = vector.extract_strided_slice %141 {offsets = [0, 0], sizes = [16, 32], strides = [1, 1]} : vector<32x32xf32> to vector<16x32xf32>
    %cst_70 = arith.constant dense<0.000000e+00> : vector<4x32xf32>
    %167 = tpu.matmul %165, %166, %cst_70 {dimension_numbers = #tpu.dot_dimension_numbers<[1], [0], [0], [1], [0, 0, 1, 1], [], []>} : vector<4x16xf32>, vector<16x32xf32>, vector<4x32xf32> -> vector<4x32xf32>
    %168 = arith.addf %143, %167 : vector<4x32xf32>
    %169 = vector.extract_strided_slice %130 {offsets = [0, 16], sizes = [4, 16], strides = [1, 1]} : vector<4x32xf32> to vector<4x16xf32>
    %170 = vector.shape_cast %169 : vector<4x16xf32> to vector<4x1x16xf32>
    %171 = vector.extract_strided_slice %138 {offsets = [0, 0, 16], sizes = [4, 8, 16], strides = [1, 1, 1]} : vector<4x8x32xf32> to vector<4x8x16xf32>
    %172 = vector.extract_strided_slice %139 {offsets = [0, 0, 16], sizes = [4, 8, 16], strides = [1, 1, 1]} : vector<4x8x32xf32> to vector<4x8x16xf32>
    "tpu.trace_start"() <{level = 10 : i32, message = "bqd,bkd->bqk"}> : () -> ()
    %cst_71 = arith.constant dense<0.000000e+00> : vector<4x1x8xf32>
    %173 = tpu.matmul %170, %171, %cst_71 {dimension_numbers = #tpu.dot_dimension_numbers<[2], [2], [1], [1], [0, 0, 0, 1, 1, 1], [0], [0]>} : vector<4x1x16xf32>, vector<4x8x16xf32>, vector<4x1x8xf32> -> vector<4x1x8xf32>
    "tpu.trace_stop"() : () -> ()
    %cst_72 = arith.constant 2.500000e-01 : f32
    %174 = vector.broadcast %cst_72 : f32 to vector<4x1x8xf32>
    %175 = arith.mulf %173, %174 : vector<4x1x8xf32>
    %176 = vector.shape_cast %140 : vector<1x8xf32> to vector<1x1x8xf32>
    %177 = vector.broadcast %176 : vector<1x1x8xf32> to vector<4x1x8xf32>
    %178 = arith.addf %175, %177 : vector<4x1x8xf32>
    %cst_73 = arith.constant dense<0xFF800000> : vector<4x1xf32>
    %179 = vector.multi_reduction <maximumf>, %178, %cst_73 [2] : vector<4x1x8xf32> to vector<4x1xf32>
    %180 = vector.shape_cast %179 : vector<4x1xf32> to vector<4x1x1xf32>
    %181 = vector.broadcast %180 : vector<4x1x1xf32> to vector<4x1x8xf32>
    %182 = arith.subf %178, %181 : vector<4x1x8xf32>
    %183 = math.exp %182 : vector<4x1x8xf32>
    %cst_74 = arith.constant dense<0.000000e+00> : vector<4x1xf32>
    %184 = vector.multi_reduction <add>, %183, %cst_74 [2] : vector<4x1x8xf32> to vector<4x1xf32>
    %185 = vector.shape_cast %184 : vector<4x1xf32> to vector<4x1x1xf32>
    %186 = tpu.reciprocal %185 {approx = true} : vector<4x1x1xf32> -> vector<4x1x1xf32>
    %187 = vector.broadcast %186 : vector<4x1x1xf32> to vector<4x1x8xf32>
    %188 = arith.mulf %183, %187 : vector<4x1x8xf32>
    "tpu.trace_start"() <{level = 10 : i32, message = "bqk,bkd->bqd"}> : () -> ()
    %cst_75 = arith.constant dense<0.000000e+00> : vector<4x1x16xf32>
    %189 = tpu.matmul %188, %172, %cst_75 {dimension_numbers = #tpu.dot_dimension_numbers<[2], [1], [1], [2], [0, 0, 0, 1, 1, 2], [0], [0]>} : vector<4x1x8xf32>, vector<4x8x16xf32>, vector<4x1x16xf32> -> vector<4x1x16xf32>
    "tpu.trace_stop"() : () -> ()
    %190 = vector.shape_cast %189 : vector<4x1x16xf32> to vector<4x16xf32>
    %191 = vector.extract_strided_slice %141 {offsets = [16, 0], sizes = [16, 32], strides = [1, 1]} : vector<32x32xf32> to vector<16x32xf32>
    %cst_76 = arith.constant dense<0.000000e+00> : vector<4x32xf32>
    %192 = tpu.matmul %190, %191, %cst_76 {dimension_numbers = #tpu.dot_dimension_numbers<[1], [0], [0], [1], [0, 0, 1, 1], [], []>} : vector<4x16xf32>, vector<16x32xf32>, vector<4x32xf32> -> vector<4x32xf32>
    %193 = arith.addf %168, %192 : vector<4x32xf32>
    %194 = vector.broadcast %142 : vector<1x32xf32> to vector<4x32xf32>
    %195 = arith.addf %193, %194 : vector<4x32xf32>
    %196 = arith.addf %99, %195 : vector<4x32xf32>
    %c0_77 = arith.constant 0 : index
    %c0_78 = arith.constant 0 : index
    %197 = vector.load %arg19[%c0_77, %c0_78] : memref<1x32xf32, #tpu.memory_space<vmem>>, vector<1x32xf32>
    %c0_79 = arith.constant 0 : index
    %c0_80 = arith.constant 0 : index
    %198 = vector.load %arg20[%c0_79, %c0_80] : memref<1x32xf32, #tpu.memory_space<vmem>>, vector<1x32xf32>
    %cst_81 = arith.constant dense<0.000000e+00> : vector<4xf32>
    %199 = vector.multi_reduction <add>, %196, %cst_81 [1] : vector<4x32xf32> to vector<4xf32>
    %200 = vector.shape_cast %199 : vector<4xf32> to vector<4x1xf32>
    %201 = arith.mulf %196, %196 : vector<4x32xf32>
    %cst_82 = arith.constant dense<0.000000e+00> : vector<4xf32>
    %202 = vector.multi_reduction <add>, %201, %cst_82 [1] : vector<4x32xf32> to vector<4xf32>
    %203 = vector.shape_cast %202 : vector<4xf32> to vector<4x1xf32>
    %cst_83 = arith.constant 3.200000e+01 : f32
    %204 = vector.broadcast %cst_83 : f32 to vector<4x1xf32>
    %205 = arith.divf %200, %204 : vector<4x1xf32>
    %206 = arith.mulf %200, %205 : vector<4x1xf32>
    %207 = arith.subf %203, %206 : vector<4x1xf32>
    %cst_84 = arith.constant 3.100000e+01 : f32
    %208 = vector.broadcast %cst_84 : f32 to vector<4x1xf32>
    %209 = arith.divf %207, %208 : vector<4x1xf32>
    %cst_85 = arith.constant 0.000000e+00 : f32
    %210 = vector.broadcast %cst_85 : f32 to vector<4x1xf32>
    %211 = arith.maximumf %209, %210 : vector<4x1xf32>
    %212 = vector.broadcast %205 : vector<4x1xf32> to vector<4x32xf32>
    %213 = arith.subf %196, %212 : vector<4x32xf32>
    %214 = math.sqrt %211 : vector<4x1xf32>
    %cst_86 = arith.constant 9.99999997E-7 : f32
    %215 = vector.broadcast %cst_86 : f32 to vector<4x1xf32>
    %216 = arith.addf %214, %215 : vector<4x1xf32>
    %217 = vector.broadcast %197 : vector<1x32xf32> to vector<4x32xf32>
    %218 = vector.broadcast %216 : vector<4x1xf32> to vector<4x32xf32>
    %219 = arith.divf %217, %218 : vector<4x32xf32>
    %220 = arith.mulf %213, %219 : vector<4x32xf32>
    %221 = vector.broadcast %198 : vector<1x32xf32> to vector<4x32xf32>
    %222 = arith.addf %220, %221 : vector<4x32xf32>
    %c0_87 = arith.constant 0 : index
    %c0_88 = arith.constant 0 : index
    %223 = vector.load %arg21[%c0_87, %c0_88] : memref<32x64xf32, #tpu.memory_space<vmem>>, vector<32x64xf32>
    %cst_89 = arith.constant dense<0.000000e+00> : vector<4x64xf32>
    %224 = tpu.matmul %222, %223, %cst_89 {dimension_numbers = #tpu.dot_dimension_numbers<[1], [0], [0], [1], [0, 0, 1, 1], [], []>} : vector<4x32xf32>, vector<32x64xf32>, vector<4x64xf32> -> vector<4x64xf32>
    %c0_90 = arith.constant 0 : index
    %c0_91 = arith.constant 0 : index
    %225 = vector.load %arg22[%c0_90, %c0_91] : memref<1x64xf32, #tpu.memory_space<vmem>>, vector<1x64xf32>
    %226 = vector.broadcast %225 : vector<1x64xf32> to vector<4x64xf32>
    %227 = arith.addf %224, %226 : vector<4x64xf32>
    %cst_92 = arith.constant 0.000000e+00 : f32
    %228 = vector.broadcast %cst_92 : f32 to vector<4x64xf32>
    %229 = arith.maximumf %227, %228 : vector<4x64xf32>
    %c0_93 = arith.constant 0 : index
    %c0_94 = arith.constant 0 : index
    %230 = vector.load %arg23[%c0_93, %c0_94] : memref<64x32xf32, #tpu.memory_space<vmem>>, vector<64x32xf32>
    %cst_95 = arith.constant dense<0.000000e+00> : vector<4x32xf32>
    %231 = tpu.matmul %229, %230, %cst_95 {dimension_numbers = #tpu.dot_dimension_numbers<[1], [0], [0], [1], [0, 0, 1, 1], [], []>} : vector<4x64xf32>, vector<64x32xf32>, vector<4x32xf32> -> vector<4x32xf32>
    %c0_96 = arith.constant 0 : index
    %c0_97 = arith.constant 0 : index
    %232 = vector.load %arg24[%c0_96, %c0_97] : memref<1x32xf32, #tpu.memory_space<vmem>>, vector<1x32xf32>
    %233 = vector.broadcast %232 : vector<1x32xf32> to vector<4x32xf32>
    %234 = arith.addf %231, %233 : vector<4x32xf32>
    %235 = arith.addf %196, %234 : vector<4x32xf32>
    %236 = vector.shape_cast %235 : vector<4x32xf32> to vector<4x1x32xf32>
    %c0_98 = arith.constant 0 : index
    %c0_99 = arith.constant 0 : index
    %c0_100 = arith.constant 0 : index
    %237 = vector.load %arg25[%c0_98, %c0_99, %c0_100] : memref<4x1x32xf32, #tpu.memory_space<vmem>>, vector<4x1x32xf32>
    tpu.vector_store %arg25[%c0_98, %c0_99, %c0_100], %236 {strides = array<i32>} : memref<4x1x32xf32, #tpu.memory_space<vmem>>, vector<4x1x32xf32>,
    return
  }
  func.func @transform_0(%arg0: i32) -> (i32, i32, i32) {
    %c0_i32 = arith.constant 0 : i32
    %c0_i32_0 = arith.constant 0 : i32
    %c0_i32_1 = arith.constant 0 : i32
    return %arg0, %c0_i32, %c0_i32_0 : i32, i32, i32
  }
  func.func @transform_1(%arg0: i32) -> (i32, i32, i32) {
    %c0_i32 = arith.constant 0 : i32
    %c0_i32_0 = arith.constant 0 : i32
    %c0_i32_1 = arith.constant 0 : i32
    return %arg0, %c0_i32, %c0_i32_0 : i32, i32, i32
  }
  func.func @transform_2(%arg0: i32) -> (i32, i32) {
    %c0_i32 = arith.constant 0 : i32
    %c0_i32_0 = arith.constant 0 : i32
    %c0_i32_1 = arith.constant 0 : i32
    return %c0_i32, %c0_i32_0 : i32, i32
  }
  func.func @transform_3(%arg0: i32) -> (i32, i32) {
    %c0_i32 = arith.constant 0 : i32
    %c0_i32_0 = arith.constant 0 : i32
    %c0_i32_1 = arith.constant 0 : i32
    return %c0_i32, %c0_i32_0 : i32, i32
  }
  func.func @transform_4(%arg0: i32) -> (i32, i32) {
    %c0_i32 = arith.constant 0 : i32
    %c0_i32_0 = arith.constant 0 : i32
    %c0_i32_1 = arith.constant 0 : i32
    return %c0_i32, %c0_i32_0 : i32, i32
  }
  func.func @transform_5(%arg0: i32) -> (i32, i32) {
    %c0_i32 = arith.constant 0 : i32
    %c0_i32_0 = arith.constant 0 : i32
    %c0_i32_1 = arith.constant 0 : i32
    return %c0_i32, %c0_i32_0 : i32, i32
  }
  func.func @transform_6(%arg0: i32) -> (i32, i32) {
    %c0_i32 = arith.constant 0 : i32
    %c0_i32_0 = arith.constant 0 : i32
    %c0_i32_1 = arith.constant 0 : i32
    return %c0_i32, %c0_i32_0 : i32, i32
  }
  func.func @transform_7(%arg0: i32) -> (i32, i32) {
    %c0_i32 = arith.constant 0 : i32
    %c0_i32_0 = arith.constant 0 : i32
    %c0_i32_1 = arith.constant 0 : i32
    return %c0_i32, %c0_i32_0 : i32, i32
  }
  func.func @transform_8(%arg0: i32) -> (i32, i32) {
    %c0_i32 = arith.constant 0 : i32
    %c0_i32_0 = arith.constant 0 : i32
    %c0_i32_1 = arith.constant 0 : i32
    return %c0_i32, %c0_i32_0 : i32, i32
  }
  func.func @transform_9(%arg0: i32) -> (i32, i32) {
    %c0_i32 = arith.constant 0 : i32
    %c0_i32_0 = arith.constant 0 : i32
    %c0_i32_1 = arith.constant 0 : i32
    return %c0_i32, %c0_i32_0 : i32, i32
  }
  func.func @transform_10(%arg0: i32) -> (i32, i32) {
    %c0_i32 = arith.constant 0 : i32
    %c0_i32_0 = arith.constant 0 : i32
    %c0_i32_1 = arith.constant 0 : i32
    return %c0_i32, %c0_i32_0 : i32, i32
  }
  func.func @transform_11(%arg0: i32) -> (i32, i32) {
    %c0_i32 = arith.constant 0 : i32
    %c0_i32_0 = arith.constant 0 : i32
    %c0_i32_1 = arith.constant 0 : i32
    return %c0_i32, %c0_i32_0 : i32, i32
  }
  func.func @transform_12(%arg0: i32) -> (i32, i32) {
    %c0_i32 = arith.constant 0 : i32
    %c0_i32_0 = arith.constant 0 : i32
    %c0_i32_1 = arith.constant 0 : i32
    return %c0_i32, %c0_i32_0 : i32, i32
  }
  func.func @transform_13(%arg0: i32) -> (i32, i32) {
    %c0_i32 = arith.constant 0 : i32
    %c0_i32_0 = arith.constant 0 : i32
    %c0_i32_1 = arith.constant 0 : i32
    return %c0_i32, %c0_i32_0 : i32, i32
  }
  func.func @transform_14(%arg0: i32) -> (i32, i32) {
    %c0_i32 = arith.constant 0 : i32
    %c0_i32_0 = arith.constant 0 : i32
    %c0_i32_1 = arith.constant 0 : i32
    return %c0_i32, %c0_i32_0 : i32, i32
  }
  func.func @transform_15(%arg0: i32) -> (i32, i32) {
    %c0_i32 = arith.constant 0 : i32
    %c0_i32_0 = arith.constant 0 : i32
    %c0_i32_1 = arith.constant 0 : i32
    return %c0_i32, %c0_i32_0 : i32, i32
  }
  func.func @transform_16(%arg0: i32) -> (i32, i32) {
    %c0_i32 = arith.constant 0 : i32
    %c0_i32_0 = arith.constant 0 : i32
    %c0_i32_1 = arith.constant 0 : i32
    return %c0_i32, %c0_i32_0 : i32, i32
  }
  func.func @transform_17(%arg0: i32) -> (i32, i32) {
    %c0_i32 = arith.constant 0 : i32
    %c0_i32_0 = arith.constant 0 : i32
    %c0_i32_1 = arith.constant 0 : i32
    return %c0_i32, %c0_i32_0 : i32, i32
  }
  func.func @transform_18(%arg0: i32) -> (i32, i32) {
    %c0_i32 = arith.constant 0 : i32
    %c0_i32_0 = arith.constant 0 : i32
    %c0_i32_1 = arith.constant 0 : i32
    return %c0_i32, %c0_i32_0 : i32, i32
  }
  func.func @transform_19(%arg0: i32) -> (i32, i32) {
    %c0_i32 = arith.constant 0 : i32
    %c0_i32_0 = arith.constant 0 : i32
    %c0_i32_1 = arith.constant 0 : i32
    return %c0_i32, %c0_i32_0 : i32, i32
  }
  func.func @transform_20(%arg0: i32) -> (i32, i32) {
    %c0_i32 = arith.constant 0 : i32
    %c0_i32_0 = arith.constant 0 : i32
    %c0_i32_1 = arith.constant 0 : i32
    return %c0_i32, %c0_i32_0 : i32, i32
  }
  func.func @transform_21(%arg0: i32) -> (i32, i32) {
    %c0_i32 = arith.constant 0 : i32
    %c0_i32_0 = arith.constant 0 : i32
    %c0_i32_1 = arith.constant 0 : i32
    return %c0_i32, %c0_i32_0 : i32, i32
  }
  func.func @transform_22(%arg0: i32) -> (i32, i32) {
    %c0_i32 = arith.constant 0 : i32
    %c0_i32_0 = arith.constant 0 : i32
    %c0_i32_1 = arith.constant 0 : i32
    return %c0_i32, %c0_i32_0 : i32, i32
  }
  func.func @transform_23(%arg0: i32) -> (i32, i32) {
    %c0_i32 = arith.constant 0 : i32
    %c0_i32_0 = arith.constant 0 : i32
    %c0_i32_1 = arith.constant 0 : i32
    return %c0_i32, %c0_i32_0 : i32, i32
  }
  func.func @transform_24(%arg0: i32) -> (i32, i32, i32) {
    %c0_i32 = arith.constant 0 : i32
    %c0_i32_0 = arith.constant 0 : i32
    %c0_i32_1 = arith.constant 0 : i32
    return %arg0, %c0_i32, %c0_i32_0 : i32, i32, i32
  }
}

</mosaic_0001>

<llo_original>
// kernel: decoder_layer.1
$region0: #{decoder_layer.1}
  #allocation0 [shape = 'u32[]', space=smem, size = 0x4, offset = 0x4, fixed_abs, tag = 'smem constant byte address 0x4 - core index']
  #allocation1 [shape = 'u32[72,128]{1,0:T(1,128)}', space=vmem, size = 0x9000, scoped, tag = 'internal scratch']
  %s0 = inlined_call_operand.vmem [shape: f32[8,8,32], index: 0, kind: input, shape index: {}]
  %s1 = inlined_call_operand.vmem [shape: f32[8,8,32], index: 1, kind: input, shape index: {}]
  %s2 = inlined_call_operand.vmem [shape: f32[1,8], index: 2, kind: input, shape index: {}]
  %s3 = inlined_call_operand.vmem [shape: f32[1,8], index: 3, kind: input, shape index: {}]
  %s4 = inlined_call_operand.vmem [shape: f32[1,32], index: 4, kind: input, shape index: {}]
  %s5 = inlined_call_operand.vmem [shape: f32[1,32], index: 5, kind: input, shape index: {}]
  %s6 = inlined_call_operand.vmem [shape: f32[32,96], index: 6, kind: input, shape index: {}]
  %s7 = inlined_call_operand.vmem [shape: f32[1,96], index: 7, kind: input, shape index: {}]
  %s8 = inlined_call_operand.vmem [shape: f32[32,32], index: 8, kind: input, shape index: {}]
  %s9 = inlined_call_operand.vmem [shape: f32[1,32], index: 9, kind: input, shape index: {}]
  %s10 = inlined_call_operand.vmem [shape: f32[1,32], index: 10, kind: input, shape index: {}]
  %s11 = inlined_call_operand.vmem [shape: f32[1,32], index: 11, kind: input, shape index: {}]
  %s12 = inlined_call_operand.vmem [shape: f32[32,32], index: 12, kind: input, shape index: {}]
  %s13 = inlined_call_operand.vmem [shape: f32[1,32], index: 13, kind: input, shape index: {}]
  %s14 = inlined_call_operand.vmem [shape: f32[32,64], index: 14, kind: input, shape index: {}]
  %s15 = inlined_call_operand.vmem [shape: f32[1,64], index: 15, kind: input, shape index: {}]
  %s16 = inlined_call_operand.vmem [shape: f32[32,32], index: 16, kind: input, shape index: {}]
  %s17 = inlined_call_operand.hbm [shape: f32[1,32], index: 17, kind: input, shape index: {}]
  %s18 = inlined_call_operand.hbm [shape: f32[1,32], index: 18, kind: input, shape index: {}]
  %s19 = inlined_call_operand.hbm [shape: f32[1,32], index: 19, kind: input, shape index: {}]
  %s20 = inlined_call_operand.hbm [shape: f32[32,64], index: 20, kind: input, shape index: {}]
  %s21 = inlined_call_operand.hbm [shape: f32[1,64], index: 21, kind: input, shape index: {}]
  %s22 = inlined_call_operand.vmem [shape: f32[64,32], index: 22, kind: input, shape index: {}]
  %s23 = inlined_call_operand.hbm [shape: f32[1,32], index: 23, kind: input, shape index: {}]
  %s24 = inlined_call_operand.hbm [shape: f32[8,1,32], index: 24, kind: output, shape index: {}]
  %s25 = sld [smem:[#allocation0]]
  $region153: #{decoder_layer.1} parent=0
    _
  %s27 = ssub.s32 1, %s25
  %s28 = scalar_select 0, %s27, %s25
  $region1: #{decoder_layer.1} parent=0
    #allocation2 [shape = 'u8[512]{0}', space=vmem, size = 0x400, scoped, tag = 'input window, operand 17, single buffered']
    #allocation3 [shape = 's32[2]{0}', space=sflag, size = 0x8, scoped, tag = 'scoped memory for decoder_layer.1']
    #allocation4 [shape = 's32[2]{0}', space=sflag, size = 0x8, scoped, tag = 'scoped memory for decoder_layer.1']
    #allocation5 [shape = 'u8[512]{0}', space=vmem, size = 0x400, scoped, tag = 'input window, operand 18, single buffered']
    #allocation6 [shape = 's32[1]{0}', space=sflag, size = 0x4, scoped, tag = 'scoped memory for decoder_layer.1']
    #allocation7 [shape = 'u8[512]{0}', space=vmem, size = 0x400, scoped, tag = 'input window, operand 19, single buffered']
    #allocation8 [shape = 'u8[16384]{0}', space=vmem, size = 0x4000, scoped, tag = 'input window, operand 20, single buffered']
    #allocation9 [shape = 's32[1]{0}', space=sflag, size = 0x4, scoped, tag = 'scoped memory for decoder_layer.1']
    #allocation10 [shape = 'u8[512]{0}', space=vmem, size = 0x400, scoped, tag = 'input window, operand 21, single buffered']
    #allocation11 [shape = 'u8[512]{0}', space=vmem, size = 0x400, scoped, tag = 'input window, operand 23, single buffered']
    #allocation12 [shape = 's32[1]{0}', space=sflag, size = 0x4, scoped, tag = 'scoped memory for decoder_layer.1']
    #allocation13 [shape = 'u8[4096]{0}', space=vmem, size = 0x1000, scoped, tag = 'output window, operand 0']
    %29 = vsyncpa [#allocation3], 0
    %30 = vsyncpa [#allocation6], 0
    %31 = vsyncpa [#allocation9], 0
    %32 = vsyncpa [#allocation12], 0
    %33 = vsyncpa [#allocation4], 0
    %s34 = scalar_lea.sflag [#allocation4], 1
    %35 = vsyncpa %s34, 0
    loop: start=0, step=1, limit=4
    $region2: #{decoder_layer.1} parent=1 // loop_pre_header
      _
    $region3: #{decoder_layer.1} parent=1 // loop_header
      %s37 = sphi 0, %s41
      %p38 = scmp.ge.s32.totalorder %s37, 4
      %s47 = sphi 0, %s49
      %s50 = sphi 0, %s47
      %s51 = sphi 0, %s50
      %s67 = sphi 0, %s51
      %s73 = sphi 0, %s75
      %s76 = sphi 0, %s73
      %s77 = sphi 0, %s76
      %s93 = sphi 0, %s77
      %s97 = sphi 0, %s97
      %s99 = sphi 0, %s97
      %s100 = sphi 0, %s99
      %s114 = sphi 0, %s100
      %s118 = sphi 0, %s118
      %s120 = sphi 0, %s118
      %s121 = sphi 0, %s120
      %s135 = sphi 0, %s121
      %s139 = sphi 0, %s139
      %s141 = sphi 0, %s139
      %s142 = sphi 0, %s141
      %s156 = sphi 0, %s142
      %s160 = sphi 0, %s160
      %s162 = sphi 0, %s160
      %s163 = sphi 0, %s162
      %s177 = sphi 0, %s163
      %s181 = sphi 0, %s181
      %s183 = sphi 0, %s181
      %s184 = sphi 0, %s183
      %s198 = sphi 0, %s184
      %s202 = sphi 0, %s202
      %s204 = sphi 0, %s202
      %s205 = sphi 0, %s204
      %s219 = sphi 0, %s205
      %s223 = sphi 0, %s223
      %s225 = sphi 0, %s223
      %s226 = sphi 0, %s225
      %s240 = sphi 0, %s226
      %s244 = sphi 0, %s244
      %s246 = sphi 0, %s244
      %s247 = sphi 0, %s246
      %s261 = sphi 0, %s247
      %s265 = sphi 0, %s265
      %s267 = sphi 0, %s265
      %s268 = sphi 0, %s267
      %s282 = sphi 0, %s268
      %s286 = sphi 0, %s286
      %s288 = sphi 0, %s286
      %s289 = sphi 0, %s288
      %s303 = sphi 0, %s289
      %s307 = sphi 0, %s307
      %s309 = sphi 0, %s307
      %s310 = sphi 0, %s309
      %s324 = sphi 0, %s310
      %s328 = sphi 0, %s328
      %s330 = sphi 0, %s328
      %s331 = sphi 0, %s330
      %s345 = sphi 0, %s331
      %s349 = sphi 0, %s349
      %s351 = sphi 0, %s349
      %s352 = sphi 0, %s351
      %s366 = sphi 0, %s352
      %s370 = sphi 0, %s370
      %s372 = sphi 0, %s370
      %s373 = sphi 0, %s372
      %s387 = sphi 0, %s373
      %s391 = sphi 0, %s391
      %s393 = sphi 0, %s391
      %s394 = sphi 0, %s393
      %s408 = sphi 0, %s394
      %s412 = sphi 0, %s412
      %s414 = sphi 0, %s412
      %s415 = sphi 0, %s414
      %s429 = sphi 0, %s415
      %s433 = sphi 0, %s433
      %s435 = sphi 0, %s433
      %s436 = sphi 0, %s435
      %s450 = sphi 0, %s436
      %s454 = sphi 0, %s454
      %s456 = sphi 0, %s454
      %s457 = sphi 0, %s456
      %s471 = sphi 0, %s457
      %s475 = sphi 0, %s475
      %s477 = sphi 0, %s475
      %s478 = sphi 0, %s477
      %s492 = sphi 0, %s478
      %s496 = sphi 0, %s496
      %s498 = sphi 0, %s496
      %s499 = sphi 0, %s498
      %s513 = sphi 0, %s499
      %s517 = sphi 0, %s517
      %s519 = sphi 0, %s517
      %s520 = sphi 0, %s519
      %s534 = sphi 0, %s520
      %s538 = sphi 0, %s538
      %s540 = sphi 0, %s538
      %s541 = sphi 0, %s540
      %s555 = sphi 0, %s541
      %s561 = sphi 0, %s563
      %s564 = sphi 0, %s561
      %s565 = sphi 0, %s564
      %s581 = sphi 0, %s565
    $region4: #{decoder_layer.1} parent=1 // loop_header_branch
      %40 = sbr.rel (%p38) target = $region8
    $region5: #{decoder_layer.1} parent=1 // loop_body
      %s42 = ssub.s32 %s37, 1
      %s43 = ssub.s32 %s37, 2
      %s44 = sadd.s32 %s37, 1
      %s45 = ssub.s32 %s37, %s44
      %p46 = scmp.eq.s32.totalorder %s45, 0
      %s48 = sadd.s32 %s47, 1
      %s49 = scalar_select %p46, %s47, %s48
      %p52 = pneg %p46
      %p53 = scmp.eq.s32.totalorder %s37, 1
      %p54 = por %p52, %p53
      %p55 = scmp.ne.s32.totalorder %s47, %s50
      %p56 = scmp.eq.s32.totalorder %s37, 0
      %p57 = por %p55, %p56
      %p58 = scmp.ne.s32.totalorder %s47, %s50
      %p59 = scmp.eq.s32.totalorder %s42, 1
      %p60 = por %p58, %p59
      %p61 = scmp.ne.s32.totalorder %s50, %s51
      %p62 = scmp.eq.s32.totalorder %s42, 0
      %p63 = por %p61, %p62
      %p64 = scmp.ne.s32.totalorder %s50, %s51
      %p65 = scmp.eq.s32.totalorder %s43, 1
      %p66 = por %p64, %p65
      %p68 = scmp.ne.s32.totalorder %s51, %s67
      %p69 = scmp.eq.s32.totalorder %s43, 0
      %p70 = por %p68, %p69
      %s71 = ssub.s32 %s37, %s44
      %p72 = scmp.eq.s32.totalorder %s71, 0
      %s74 = sadd.s32 %s73, 1
      %s75 = scalar_select %p72, %s73, %s74
      %p78 = pneg %p72
      %p79 = scmp.eq.s32.totalorder %s37, 1
      %p80 = por %p78, %p79
      %p81 = scmp.ne.s32.totalorder %s73, %s76
      %p82 = scmp.eq.s32.totalorder %s37, 0
      %p83 = por %p81, %p82
      %p84 = scmp.ne.s32.totalorder %s73, %s76
      %p85 = scmp.eq.s32.totalorder %s42, 1
      %p86 = por %p84, %p85
      %p87 = scmp.ne.s32.totalorder %s76, %s77
      %p88 = scmp.eq.s32.totalorder %s42, 0
      %p89 = por %p87, %p88
      %p90 = scmp.ne.s32.totalorder %s76, %s77
      %p91 = scmp.eq.s32.totalorder %s43, 1
      %p92 = por %p90, %p91
      %p94 = scmp.ne.s32.totalorder %s77, %s93
      %p95 = scmp.eq.s32.totalorder %s43, 0
      %p96 = por %p94, %p95
      %s98 = sadd.s32 %s97, 1
      %p101 = scmp.eq.s32.totalorder %s37, 1
      %p102 = scmp.ne.s32.totalorder %s97, %s99
      %p103 = scmp.eq.s32.totalorder %s37, 0
      %p104 = por %p102, %p103
      %p105 = scmp.ne.s32.totalorder %s97, %s99
      %p106 = scmp.eq.s32.totalorder %s42, 1
      %p107 = por %p105, %p106
      %p108 = scmp.ne.s32.totalorder %s99, %s100
      %p109 = scmp.eq.s32.totalorder %s42, 0
      %p110 = por %p108, %p109
      %p111 = scmp.ne.s32.totalorder %s99, %s100
      %p112 = scmp.eq.s32.totalorder %s43, 1
      %p113 = por %p111, %p112
      %p115 = scmp.ne.s32.totalorder %s100, %s114
      %p116 = scmp.eq.s32.totalorder %s43, 0
      %p117 = por %p115, %p116
      %s119 = sadd.s32 %s118, 1
      %p122 = scmp.eq.s32.totalorder %s37, 1
      %p123 = scmp.ne.s32.totalorder %s118, %s120
      %p124 = scmp.eq.s32.totalorder %s37, 0
      %p125 = por %p123, %p124
      %p126 = scmp.ne.s32.totalorder %s118, %s120
      %p127 = scmp.eq.s32.totalorder %s42, 1
      %p128 = por %p126, %p127
      %p129 = scmp.ne.s32.totalorder %s120, %s121
      %p130 = scmp.eq.s32.totalorder %s42, 0
      %p131 = por %p129, %p130
      %p132 = scmp.ne.s32.totalorder %s120, %s121
      %p133 = scmp.eq.s32.totalorder %s43, 1
      %p134 = por %p132, %p133
      %p136 = scmp.ne.s32.totalorder %s121, %s135
      %p137 = scmp.eq.s32.totalorder %s43, 0
      %p138 = por %p136, %p137
      %s140 = sadd.s32 %s139, 1
      %p143 = scmp.eq.s32.totalorder %s37, 1
      %p144 = scmp.ne.s32.totalorder %s139, %s141
      %p145 = scmp.eq.s32.totalorder %s37, 0
      %p146 = por %p144, %p145
      %p147 = scmp.ne.s32.totalorder %s139, %s141
      %p148 = scmp.eq.s32.totalorder %s42, 1
      %p149 = por %p147, %p148
      %p150 = scmp.ne.s32.totalorder %s141, %s142
      %p151 = scmp.eq.s32.totalorder %s42, 0
      %p152 = por %p150, %p151
      %p153 = scmp.ne.s32.totalorder %s141, %s142
      %p154 = scmp.eq.s32.totalorder %s43, 1
      %p155 = por %p153, %p154
      %p157 = scmp.ne.s32.totalorder %s142, %s156
      %p158 = scmp.eq.s32.totalorder %s43, 0
      %p159 = por %p157, %p158
      %s161 = sadd.s32 %s160, 1
      %p164 = scmp.eq.s32.totalorder %s37, 1
      %p165 = scmp.ne.s32.totalorder %s160, %s162
      %p166 = scmp.eq.s32.totalorder %s37, 0
      %p167 = por %p165, %p166
      %p168 = scmp.ne.s32.totalorder %s160, %s162
      %p169 = scmp.eq.s32.totalorder %s42, 1
      %p170 = por %p168, %p169
      %p171 = scmp.ne.s32.totalorder %s162, %s163
      %p172 = scmp.eq.s32.totalorder %s42, 0
      %p173 = por %p171, %p172
      %p174 = scmp.ne.s32.totalorder %s162, %s163
      %p175 = scmp.eq.s32.totalorder %s43, 1
      %p176 = por %p174, %p175
      %p178 = scmp.ne.s32.totalorder %s163, %s177
      %p179 = scmp.eq.s32.totalorder %s43, 0
      %p180 = por %p178, %p179
      %s182 = sadd.s32 %s181, 1
      %p185 = scmp.eq.s32.totalorder %s37, 1
      %p186 = scmp.ne.s32.totalorder %s181, %s183
      %p187 = scmp.eq.s32.totalorder %s37, 0
      %p188 = por %p186, %p187
      %p189 = scmp.ne.s32.totalorder %s181, %s183
      %p190 = scmp.eq.s32.totalorder %s42, 1
      %p191 = por %p189, %p190
      %p192 = scmp.ne.s32.totalorder %s183, %s184
      %p193 = scmp.eq.s32.totalorder %s42, 0
      %p194 = por %p192, %p193
      %p195 = scmp.ne.s32.totalorder %s183, %s184
      %p196 = scmp.eq.s32.totalorder %s43, 1
      %p197 = por %p195, %p196
      %p199 = scmp.ne.s32.totalorder %s184, %s198
      %p200 = scmp.eq.s32.totalorder %s43, 0
      %p201 = por %p199, %p200
      %s203 = sadd.s32 %s202, 1
      %p206 = scmp.eq.s32.totalorder %s37, 1
      %p207 = scmp.ne.s32.totalorder %s202, %s204
      %p208 = scmp.eq.s32.totalorder %s37, 0
      %p209 = por %p207, %p208
      %p210 = scmp.ne.s32.totalorder %s202, %s204
      %p211 = scmp.eq.s32.totalorder %s42, 1
      %p212 = por %p210, %p211
      %p213 = scmp.ne.s32.totalorder %s204, %s205
      %p214 = scmp.eq.s32.totalorder %s42, 0
      %p215 = por %p213, %p214
      %p216 = scmp.ne.s32.totalorder %s204, %s205
      %p217 = scmp.eq.s32.totalorder %s43, 1
      %p218 = por %p216, %p217
      %p220 = scmp.ne.s32.totalorder %s205, %s219
      %p221 = scmp.eq.s32.totalorder %s43, 0
      %p222 = por %p220, %p221
      %s224 = sadd.s32 %s223, 1
      %p227 = scmp.eq.s32.totalorder %s37, 1
      %p228 = scmp.ne.s32.totalorder %s223, %s225
      %p229 = scmp.eq.s32.totalorder %s37, 0
      %p230 = por %p228, %p229
      %p231 = scmp.ne.s32.totalorder %s223, %s225
      %p232 = scmp.eq.s32.totalorder %s42, 1
      %p233 = por %p231, %p232
      %p234 = scmp.ne.s32.totalorder %s225, %s226
      %p235 = scmp.eq.s32.totalorder %s42, 0
      %p236 = por %p234, %p235
      %p237 = scmp.ne.s32.totalorder %s225, %s226
      %p238 = scmp.eq.s32.totalorder %s43, 1
      %p239 = por %p237, %p238
      %p241 = scmp.ne.s32.totalorder %s226, %s240
      %p242 = scmp.eq.s32.totalorder %s43, 0
      %p243 = por %p241, %p242
      %s245 = sadd.s32 %s244, 1
      %p248 = scmp.eq.s32.totalorder %s37, 1
      %p249 = scmp.ne.s32.totalorder %s244, %s246
      %p250 = scmp.eq.s32.totalorder %s37, 0
      %p251 = por %p249, %p250
      %p252 = scmp.ne.s32.totalorder %s244, %s246
      %p253 = scmp.eq.s32.totalorder %s42, 1
      %p254 = por %p252, %p253
      %p255 = scmp.ne.s32.totalorder %s246, %s247
      %p256 = scmp.eq.s32.totalorder %s42, 0
      %p257 = por %p255, %p256
      %p258 = scmp.ne.s32.totalorder %s246, %s247
      %p259 = scmp.eq.s32.totalorder %s43, 1
      %p260 = por %p258, %p259
      %p262 = scmp.ne.s32.totalorder %s247, %s261
      %p263 = scmp.eq.s32.totalorder %s43, 0
      %p264 = por %p262, %p263
      %s266 = sadd.s32 %s265, 1
      %p269 = scmp.eq.s32.totalorder %s37, 1
      %p270 = scmp.ne.s32.totalorder %s265, %s267
      %p271 = scmp.eq.s32.totalorder %s37, 0
      %p272 = por %p270, %p271
      %p273 = scmp.ne.s32.totalorder %s265, %s267
      %p274 = scmp.eq.s32.totalorder %s42, 1
      %p275 = por %p273, %p274
      %p276 = scmp.ne.s32.totalorder %s267, %s268
      %p277 = scmp.eq.s32.totalorder %s42, 0
      %p278 = por %p276, %p277
      %p279 = scmp.ne.s32.totalorder %s267, %s268
      %p280 = scmp.eq.s32.totalorder %s43, 1
      %p281 = por %p279, %p280
      %p283 = scmp.ne.s32.totalorder %s268, %s282
      %p284 = scmp.eq.s32.totalorder %s43, 0
      %p285 = por %p283, %p284
      %s287 = sadd.s32 %s286, 1
      %p290 = scmp.eq.s32.totalorder %s37, 1
      %p291 = scmp.ne.s32.totalorder %s286, %s288
      %p292 = scmp.eq.s32.totalorder %s37, 0
      %p293 = por %p291, %p292
      %p294 = scmp.ne.s32.totalorder %s286, %s288
      %p295 = scmp.eq.s32.totalorder %s42, 1
      %p296 = por %p294, %p295
      %p297 = scmp.ne.s32.totalorder %s288, %s289
      %p298 = scmp.eq.s32.totalorder %s42, 0
      %p299 = por %p297, %p298
      %p300 = scmp.ne.s32.totalorder %s288, %s289
      %p301 = scmp.eq.s32.totalorder %s43, 1
      %p302 = por %p300, %p301
      %p304 = scmp.ne.s32.totalorder %s289, %s303
      %p305 = scmp.eq.s32.totalorder %s43, 0
      %p306 = por %p304, %p305
      %s308 = sadd.s32 %s307, 1
      %p311 = scmp.eq.s32.totalorder %s37, 1
      %p312 = scmp.ne.s32.totalorder %s307, %s309
      %p313 = scmp.eq.s32.totalorder %s37, 0
      %p314 = por %p312, %p313
      %p315 = scmp.ne.s32.totalorder %s307, %s309
      %p316 = scmp.eq.s32.totalorder %s42, 1
      %p317 = por %p315, %p316
      %p318 = scmp.ne.s32.totalorder %s309, %s310
      %p319 = scmp.eq.s32.totalorder %s42, 0
      %p320 = por %p318, %p319
      %p321 = scmp.ne.s32.totalorder %s309, %s310
      %p322 = scmp.eq.s32.totalorder %s43, 1
      %p323 = por %p321, %p322
      %p325 = scmp.ne.s32.totalorder %s310, %s324
      %p326 = scmp.eq.s32.totalorder %s43, 0
      %p327 = por %p325, %p326
      %s329 = sadd.s32 %s328, 1
      %p332 = scmp.eq.s32.totalorder %s37, 1
      %p333 = scmp.ne.s32.totalorder %s328, %s330
      %p334 = scmp.eq.s32.totalorder %s37, 0
      %p335 = por %p333, %p334
      %p336 = scmp.ne.s32.totalorder %s328, %s330
      %p337 = scmp.eq.s32.totalorder %s42, 1
      %p338 = por %p336, %p337
      %p339 = scmp.ne.s32.totalorder %s330, %s331
      %p340 = scmp.eq.s32.totalorder %s42, 0
      %p341 = por %p339, %p340
      %p342 = scmp.ne.s32.totalorder %s330, %s331
      %p343 = scmp.eq.s32.totalorder %s43, 1
      %p344 = por %p342, %p343
      %p346 = scmp.ne.s32.totalorder %s331, %s345
      %p347 = scmp.eq.s32.totalorder %s43, 0
      %p348 = por %p346, %p347
      %s350 = sadd.s32 %s349, 1
      %p353 = scmp.eq.s32.totalorder %s37, 1
      %p354 = scmp.ne.s32.totalorder %s349, %s351
      %p355 = scmp.eq.s32.totalorder %s37, 0
      %p356 = por %p354, %p355
      %p357 = scmp.ne.s32.totalorder %s349, %s351
      %p358 = scmp.eq.s32.totalorder %s42, 1
      %p359 = por %p357, %p358
      %p360 = scmp.ne.s32.totalorder %s351, %s352
      %p361 = scmp.eq.s32.totalorder %s42, 0
      %p362 = por %p360, %p361
      %p363 = scmp.ne.s32.totalorder %s351, %s352
      %p364 = scmp.eq.s32.totalorder %s43, 1
      %p365 = por %p363, %p364
      %p367 = scmp.ne.s32.totalorder %s352, %s366
      %p368 = scmp.eq.s32.totalorder %s43, 0
      %p369 = por %p367, %p368
      %s371 = sadd.s32 %s370, 1
      %p374 = scmp.eq.s32.totalorder %s37, 1
      %p375 = scmp.ne.s32.totalorder %s370, %s372
      %p376 = scmp.eq.s32.totalorder %s37, 0
      %p377 = por %p375, %p376
      %p378 = scmp.ne.s32.totalorder %s370, %s372
      %p379 = scmp.eq.s32.totalorder %s42, 1
      %p380 = por %p378, %p379
      %p381 = scmp.ne.s32.totalorder %s372, %s373
      %p382 = scmp.eq.s32.totalorder %s42, 0
      %p383 = por %p381, %p382
      %p384 = scmp.ne.s32.totalorder %s372, %s373
      %p385 = scmp.eq.s32.totalorder %s43, 1
      %p386 = por %p384, %p385
      %p388 = scmp.ne.s32.totalorder %s373, %s387
      %p389 = scmp.eq.s32.totalorder %s43, 0
      %p390 = por %p388, %p389
      %s392 = sadd.s32 %s391, 1
      %p395 = scmp.eq.s32.totalorder %s37, 1
      %p396 = scmp.ne.s32.totalorder %s391, %s393
      %p397 = scmp.eq.s32.totalorder %s37, 0
      %p398 = por %p396, %p397
      %p399 = scmp.ne.s32.totalorder %s391, %s393
      %p400 = scmp.eq.s32.totalorder %s42, 1
      %p401 = por %p399, %p400
      %p402 = scmp.ne.s32.totalorder %s393, %s394
      %p403 = scmp.eq.s32.totalorder %s42, 0
      %p404 = por %p402, %p403
      %p405 = scmp.ne.s32.totalorder %s393, %s394
      %p406 = scmp.eq.s32.totalorder %s43, 1
      %p407 = por %p405, %p406
      %p409 = scmp.ne.s32.totalorder %s394, %s408
      %p410 = scmp.eq.s32.totalorder %s43, 0
      %p411 = por %p409, %p410
      %s413 = sadd.s32 %s412, 1
      %p416 = scmp.eq.s32.totalorder %s37, 1
      %p417 = scmp.ne.s32.totalorder %s412, %s414
      %p418 = scmp.eq.s32.totalorder %s37, 0
      %p419 = por %p417, %p418
      %p420 = scmp.ne.s32.totalorder %s412, %s414
      %p421 = scmp.eq.s32.totalorder %s42, 1
      %p422 = por %p420, %p421
      %p423 = scmp.ne.s32.totalorder %s414, %s415
      %p424 = scmp.eq.s32.totalorder %s42, 0
      %p425 = por %p423, %p424
      %p426 = scmp.ne.s32.totalorder %s414, %s415
      %p427 = scmp.eq.s32.totalorder %s43, 1
      %p428 = por %p426, %p427
      %p430 = scmp.ne.s32.totalorder %s415, %s429
      %p431 = scmp.eq.s32.totalorder %s43, 0
      %p432 = por %p430, %p431
      %s434 = sadd.s32 %s433, 1
      %p437 = scmp.eq.s32.totalorder %s37, 1
      %p438 = scmp.ne.s32.totalorder %s433, %s435
      %p439 = scmp.eq.s32.totalorder %s37, 0
      %p440 = por %p438, %p439
      %p441 = scmp.ne.s32.totalorder %s433, %s435
      %p442 = scmp.eq.s32.totalorder %s42, 1
      %p443 = por %p441, %p442
      %p444 = scmp.ne.s32.totalorder %s435, %s436
      %p445 = scmp.eq.s32.totalorder %s42, 0
      %p446 = por %p444, %p445
      %p447 = scmp.ne.s32.totalorder %s435, %s436
      %p448 = scmp.eq.s32.totalorder %s43, 1
      %p449 = por %p447, %p448
      %p451 = scmp.ne.s32.totalorder %s436, %s450
      %p452 = scmp.eq.s32.totalorder %s43, 0
      %p453 = por %p451, %p452
      %s455 = sadd.s32 %s454, 1
      %p458 = scmp.eq.s32.totalorder %s37, 1
      %p459 = scmp.ne.s32.totalorder %s454, %s456
      %p460 = scmp.eq.s32.totalorder %s37, 0
      %p461 = por %p459, %p460
      %p462 = scmp.ne.s32.totalorder %s454, %s456
      %p463 = scmp.eq.s32.totalorder %s42, 1
      %p464 = por %p462, %p463
      %p465 = scmp.ne.s32.totalorder %s456, %s457
      %p466 = scmp.eq.s32.totalorder %s42, 0
      %p467 = por %p465, %p466
      %p468 = scmp.ne.s32.totalorder %s456, %s457
      %p469 = scmp.eq.s32.totalorder %s43, 1
      %p470 = por %p468, %p469
      %p472 = scmp.ne.s32.totalorder %s457, %s471
      %p473 = scmp.eq.s32.totalorder %s43, 0
      %p474 = por %p472, %p473
      %s476 = sadd.s32 %s475, 1
      %p479 = scmp.eq.s32.totalorder %s37, 1
      %p480 = scmp.ne.s32.totalorder %s475, %s477
      %p481 = scmp.eq.s32.totalorder %s37, 0
      %p482 = por %p480, %p481
      %p483 = scmp.ne.s32.totalorder %s475, %s477
      %p484 = scmp.eq.s32.totalorder %s42, 1
      %p485 = por %p483, %p484
      %p486 = scmp.ne.s32.totalorder %s477, %s478
      %p487 = scmp.eq.s32.totalorder %s42, 0
      %p488 = por %p486, %p487
      %p489 = scmp.ne.s32.totalorder %s477, %s478
      %p490 = scmp.eq.s32.totalorder %s43, 1
      %p491 = por %p489, %p490
      %p493 = scmp.ne.s32.totalorder %s478, %s492
      %p494 = scmp.eq.s32.totalorder %s43, 0
      %p495 = por %p493, %p494
      %s497 = sadd.s32 %s496, 1
      %p500 = scmp.eq.s32.totalorder %s37, 1
      %p501 = scmp.ne.s32.totalorder %s496, %s498
      %p502 = scmp.eq.s32.totalorder %s37, 0
      %p503 = por %p501, %p502
      %p504 = scmp.ne.s32.totalorder %s496, %s498
      %p505 = scmp.eq.s32.totalorder %s42, 1
      %p506 = por %p504, %p505
      %p507 = scmp.ne.s32.totalorder %s498, %s499
      %p508 = scmp.eq.s32.totalorder %s42, 0
      %p509 = por %p507, %p508
      %p510 = scmp.ne.s32.totalorder %s498, %s499
      %p511 = scmp.eq.s32.totalorder %s43, 1
      %p512 = por %p510, %p511
      %p514 = scmp.ne.s32.totalorder %s499, %s513
      %p515 = scmp.eq.s32.totalorder %s43, 0
      %p516 = por %p514, %p515
      %s518 = sadd.s32 %s517, 1
      %p521 = scmp.eq.s32.totalorder %s37, 1
      %p522 = scmp.ne.s32.totalorder %s517, %s519
      %p523 = scmp.eq.s32.totalorder %s37, 0
      %p524 = por %p522, %p523
      %p525 = scmp.ne.s32.totalorder %s517, %s519
      %p526 = scmp.eq.s32.totalorder %s42, 1
      %p527 = por %p525, %p526
      %p528 = scmp.ne.s32.totalorder %s519, %s520
      %p529 = scmp.eq.s32.totalorder %s42, 0
      %p530 = por %p528, %p529
      %p531 = scmp.ne.s32.totalorder %s519, %s520
      %p532 = scmp.eq.s32.totalorder %s43, 1
      %p533 = por %p531, %p532
      %p535 = scmp.ne.s32.totalorder %s520, %s534
      %p536 = scmp.eq.s32.totalorder %s43, 0
      %p537 = por %p535, %p536
      %s539 = sadd.s32 %s538, 1
      %p542 = scmp.eq.s32.totalorder %s37, 1
      %p543 = scmp.ne.s32.totalorder %s538, %s540
      %p544 = scmp.eq.s32.totalorder %s37, 0
      %p545 = por %p543, %p544
      %p546 = scmp.ne.s32.totalorder %s538, %s540
      %p547 = scmp.eq.s32.totalorder %s42, 1
      %p548 = por %p546, %p547
      %p549 = scmp.ne.s32.totalorder %s540, %s541
      %p550 = scmp.eq.s32.totalorder %s42, 0
      %p551 = por %p549, %p550
      %p552 = scmp.ne.s32.totalorder %s540, %s541
      %p553 = scmp.eq.s32.totalorder %s43, 1
      %p554 = por %p552, %p553
      %p556 = scmp.ne.s32.totalorder %s541, %s555
      %p557 = scmp.eq.s32.totalorder %s43, 0
      %p558 = por %p556, %p557
      %s559 = ssub.s32 %s37, %s44
      %p560 = scmp.eq.s32.totalorder %s559, 0
      %s562 = sadd.s32 %s561, 1
      %s563 = scalar_select %p560, %s561, %s562
      %p566 = pneg %p560
      %p567 = scmp.eq.s32.totalorder %s37, 1
      %p568 = por %p566, %p567
      %p569 = scmp.ne.s32.totalorder %s561, %s564
      %p570 = scmp.eq.s32.totalorder %s37, 0
      %p571 = por %p569, %p570
      %p572 = scmp.ne.s32.totalorder %s561, %s564
      %p573 = scmp.eq.s32.totalorder %s42, 1
      %p574 = por %p572, %p573
      %p575 = scmp.ne.s32.totalorder %s564, %s565
      %p576 = scmp.eq.s32.totalorder %s42, 0
      %p577 = por %p575, %p576
      %p578 = scmp.ne.s32.totalorder %s564, %s565
      %p579 = scmp.eq.s32.totalorder %s43, 1
      %p580 = por %p578, %p579
      %p582 = scmp.ne.s32.totalorder %s565, %s581
      %p583 = scmp.eq.s32.totalorder %s43, 0
      %p584 = por %p582, %p583
      %p585 = scmp.le.s32.totalorder 1, %s37
      %p586 = scmp.lt.s32.totalorder %s37, 3
      %p587 = pnand %p585, %p586
      %p588 = pneg %p587
      // Predicated region
      $region9: #{decoder_layer.1} parent=5 // pred_check
        _
      $region10: #{decoder_layer.1} parent=5 // pred_check_branch
        %590 = sbr.rel (%p587) target = $region12
      $region11: #{decoder_layer.1} parent=5 // pred_region
        %s591 = ssub.s32 %s37, 1
        // Predicated region
        $region13: #{decoder_layer.1} parent=11 // pred_check
          %p592 = pneg %p110
        $region14: #{decoder_layer.1} parent=11 // pred_check_branch
          %594 = sbr.rel (%p592) target = $region16
        $region15: #{decoder_layer.1} parent=11 // pred_region
          _
        $region16: #{decoder_layer.1} parent=11 // pred_fallthru
          _
        // Predicated region
        $region17: #{decoder_layer.1} parent=11 // pred_check
          %p595 = pneg %p131
        $region18: #{decoder_layer.1} parent=11 // pred_check_branch
          %597 = sbr.rel (%p595) target = $region20
        $region19: #{decoder_layer.1} parent=11 // pred_region
          _
        $region20: #{decoder_layer.1} parent=11 // pred_fallthru
          _
        // Predicated region
        $region21: #{decoder_layer.1} parent=11 // pred_check
          %p598 = pneg %p152
        $region22: #{decoder_layer.1} parent=11 // pred_check_branch
          %600 = sbr.rel (%p598) target = $region24
        $region23: #{decoder_layer.1} parent=11 // pred_region
          _
        $region24: #{decoder_layer.1} parent=11 // pred_fallthru
          _
        // Predicated region
        $region25: #{decoder_layer.1} parent=11 // pred_check
          %p601 = pneg %p173
        $region26: #{decoder_layer.1} parent=11 // pred_check_branch
          %603 = sbr.rel (%p601) target = $region28
        $region27: #{decoder_layer.1} parent=11 // pred_region
          _
        $region28: #{decoder_layer.1} parent=11 // pred_fallthru
          _
        // Predicated region
        $region29: #{decoder_layer.1} parent=11 // pred_check
          %p604 = pneg %p194
        $region30: #{decoder_layer.1} parent=11 // pred_check_branch
          %606 = sbr.rel (%p604) target = $region32
        $region31: #{decoder_layer.1} parent=11 // pred_region
          _
        $region32: #{decoder_layer.1} parent=11 // pred_fallthru
          _
        // Predicated region
        $region33: #{decoder_layer.1} parent=11 // pred_check
          %p607 = pneg %p215
        $region34: #{decoder_layer.1} parent=11 // pred_check_branch
          %609 = sbr.rel (%p607) target = $region36
        $region35: #{decoder_layer.1} parent=11 // pred_region
          _
        $region36: #{decoder_layer.1} parent=11 // pred_fallthru
          _
        // Predicated region
        $region37: #{decoder_layer.1} parent=11 // pred_check
          %p610 = pneg %p236
        $region38: #{decoder_layer.1} parent=11 // pred_check_branch
          %612 = sbr.rel (%p610) target = $region40
        $region39: #{decoder_layer.1} parent=11 // pred_region
          _
        $region40: #{decoder_layer.1} parent=11 // pred_fallthru
          _
        // Predicated region
        $region41: #{decoder_layer.1} parent=11 // pred_check
          %p613 = pneg %p257
        $region42: #{decoder_layer.1} parent=11 // pred_check_branch
          %615 = sbr.rel (%p613) target = $region44
        $region43: #{decoder_layer.1} parent=11 // pred_region
          _
        $region44: #{decoder_layer.1} parent=11 // pred_fallthru
          _
        // Predicated region
        $region45: #{decoder_layer.1} parent=11 // pred_check
          %p616 = pneg %p278
        $region46: #{decoder_layer.1} parent=11 // pred_check_branch
          %618 = sbr.rel (%p616) target = $region48
        $region47: #{decoder_layer.1} parent=11 // pred_region
          _
        $region48: #{decoder_layer.1} parent=11 // pred_fallthru
          _
        // Predicated region
        $region49: #{decoder_layer.1} parent=11 // pred_check
          %p619 = pneg %p299
        $region50: #{decoder_layer.1} parent=11 // pred_check_branch
          %621 = sbr.rel (%p619) target = $region52
        $region51: #{decoder_layer.1} parent=11 // pred_region
          _
        $region52: #{decoder_layer.1} parent=11 // pred_fallthru
          _
        // Predicated region
        $region53: #{decoder_layer.1} parent=11 // pred_check
          %p622 = pneg %p320
        $region54: #{decoder_layer.1} parent=11 // pred_check_branch
          %624 = sbr.rel (%p622) target = $region56
        $region55: #{decoder_layer.1} parent=11 // pred_region
          _
        $region56: #{decoder_layer.1} parent=11 // pred_fallthru
          _
        // Predicated region
        $region57: #{decoder_layer.1} parent=11 // pred_check
          %p625 = pneg %p341
        $region58: #{decoder_layer.1} parent=11 // pred_check_branch
          %627 = sbr.rel (%p625) target = $region60
        $region59: #{decoder_layer.1} parent=11 // pred_region
          _
        $region60: #{decoder_layer.1} parent=11 // pred_fallthru
          _
        // Predicated region
        $region61: #{decoder_layer.1} parent=11 // pred_check
          %p628 = pneg %p362
        $region62: #{decoder_layer.1} parent=11 // pred_check_branch
          %630 = sbr.rel (%p628) target = $region64
        $region63: #{decoder_layer.1} parent=11 // pred_region
          _
        $region64: #{decoder_layer.1} parent=11 // pred_fallthru
          _
        // Predicated region
        $region65: #{decoder_layer.1} parent=11 // pred_check
          %p631 = pneg %p383
        $region66: #{decoder_layer.1} parent=11 // pred_check_branch
          %633 = sbr.rel (%p631) target = $region68
        $region67: #{decoder_layer.1} parent=11 // pred_region
          _
        $region68: #{decoder_layer.1} parent=11 // pred_fallthru
          _
        // Predicated region
        $region69: #{decoder_layer.1} parent=11 // pred_check
          %p634 = pneg %p404
        $region70: #{decoder_layer.1} parent=11 // pred_check_branch
          %636 = sbr.rel (%p634) target = $region72
        $region71: #{decoder_layer.1} parent=11 // pred_region
          _
        $region72: #{decoder_layer.1} parent=11 // pred_fallthru
          _
        // Predicated region
        $region73: #{decoder_layer.1} parent=11 // pred_check
          %p637 = pneg %p425
        $region74: #{decoder_layer.1} parent=11 // pred_check_branch
          %639 = sbr.rel (%p637) target = $region76
        $region75: #{decoder_layer.1} parent=11 // pred_region
          %641 = vsyncadd [#allocation3], 0
          %s643 = sshll.u32 %s17, 4
          %s644 = int_to_ptr.hbm [resolvable:$true] %s643
          %s645 = sshll.u32 [#allocation2], 4
          %s646 = int_to_ptr.vmem [resolvable:$true] %s645
          %648 = dma.hbm_to_vmem [thread:$0]  %s644, 16, %s646, [#allocation3]
        $region76: #{decoder_layer.1} parent=11 // pred_fallthru
          _
        // Predicated region
        $region77: #{decoder_layer.1} parent=11 // pred_check
          %p649 = pneg %p446
        $region78: #{decoder_layer.1} parent=11 // pred_check_branch
          %651 = sbr.rel (%p649) target = $region80
        $region79: #{decoder_layer.1} parent=11 // pred_region
          %653 = vsyncadd [#allocation6], 0
          %s655 = sshll.u32 %s18, 4
          %s656 = int_to_ptr.hbm [resolvable:$true] %s655
          %s657 = sshll.u32 [#allocation5], 4
          %s658 = int_to_ptr.vmem [resolvable:$true] %s657
          %660 = dma.hbm_to_vmem [thread:$0]  %s656, 16, %s658, [#allocation6]
        $region80: #{decoder_layer.1} parent=11 // pred_fallthru
          _
        // Predicated region
        $region81: #{decoder_layer.1} parent=11 // pred_check
          %p661 = pneg %p467
        $region82: #{decoder_layer.1} parent=11 // pred_check_branch
          %663 = sbr.rel (%p661) target = $region84
        $region83: #{decoder_layer.1} parent=11 // pred_region
          %665 = vsyncadd [#allocation6], 0
          %s667 = sshll.u32 %s19, 4
          %s668 = int_to_ptr.hbm [resolvable:$true] %s667
          %s669 = sshll.u32 [#allocation7], 4
          %s670 = int_to_ptr.vmem [resolvable:$true] %s669
          %672 = dma.hbm_to_vmem [thread:$0]  %s668, 16, %s670, [#allocation6]
        $region84: #{decoder_layer.1} parent=11 // pred_fallthru
          _
        // Predicated region
        $region85: #{decoder_layer.1} parent=11 // pred_check
          %p673 = pneg %p488
        $region86: #{decoder_layer.1} parent=11 // pred_check_branch
          %675 = sbr.rel (%p673) target = $region88
        $region87: #{decoder_layer.1} parent=11 // pred_region
          %677 = vsyncadd [#allocation9], 0
          %s678 = sshll.u32 %s20, 4
          %s679 = int_to_ptr.hbm [resolvable:$true] %s678
          %s680 = sshll.u32 [#allocation8], 4
          %s681 = int_to_ptr.vmem [resolvable:$true] %s680
          %686 = dma.hbm_to_vmem [thread:$0]  %s679, 512, %s681, [#allocation9], 128, 128, 8
        $region88: #{decoder_layer.1} parent=11 // pred_fallthru
          _
        // Predicated region
        $region89: #{decoder_layer.1} parent=11 // pred_check
          %p687 = pneg %p509
        $region90: #{decoder_layer.1} parent=11 // pred_check_branch
          %689 = sbr.rel (%p687) target = $region92
        $region91: #{decoder_layer.1} parent=11 // pred_region
          %691 = vsyncadd [#allocation9], 0
          %s693 = sshll.u32 %s21, 4
          %s694 = int_to_ptr.hbm [resolvable:$true] %s693
          %s695 = sshll.u32 [#allocation10], 4
          %s696 = int_to_ptr.vmem [resolvable:$true] %s695
          %698 = dma.hbm_to_vmem [thread:$0]  %s694, 16, %s696, [#allocation9]
        $region92: #{decoder_layer.1} parent=11 // pred_fallthru
          _
        // Predicated region
        $region93: #{decoder_layer.1} parent=11 // pred_check
          %p699 = pneg %p530
        $region94: #{decoder_layer.1} parent=11 // pred_check_branch
          %701 = sbr.rel (%p699) target = $region96
        $region95: #{decoder_layer.1} parent=11 // pred_region
          _
        $region96: #{decoder_layer.1} parent=11 // pred_fallthru
          _
        // Predicated region
        $region97: #{decoder_layer.1} parent=11 // pred_check
          %p702 = pneg %p551
        $region98: #{decoder_layer.1} parent=11 // pred_check_branch
          %704 = sbr.rel (%p702) target = $region100
        $region99: #{decoder_layer.1} parent=11 // pred_region
          %706 = vsyncadd [#allocation12], 0
          %s708 = sshll.u32 %s23, 4
          %s709 = int_to_ptr.hbm [resolvable:$true] %s708
          %s710 = sshll.u32 [#allocation11], 4
          %s711 = int_to_ptr.vmem [resolvable:$true] %s710
          %713 = dma.hbm_to_vmem [thread:$0]  %s709, 16, %s711, [#allocation12]
        $region100: #{decoder_layer.1} parent=11 // pred_fallthru
          _
      $region12: #{decoder_layer.1} parent=5 // pred_fallthru
        _
      %p714 = scmp.lt.s32.totalorder %s37, 2
      // Predicated region
      $region101: #{decoder_layer.1} parent=5 // pred_check
        %p715 = pneg %p714
      $region102: #{decoder_layer.1} parent=5 // pred_check_branch
        %717 = sbr.rel (%p715) target = $region104
      $region103: #{decoder_layer.1} parent=5 // pred_region
        // Predicated region
        $region105: #{decoder_layer.1} parent=103 // pred_check
          %p718 = pneg %p57
        $region106: #{decoder_layer.1} parent=103 // pred_check_branch
          %720 = sbr.rel (%p718) target = $region108
        $region107: #{decoder_layer.1} parent=103 // pred_region
          %s721 = smul.u32 4, %s37
          %p722 = scmp.lt.s32.totalorder %s721, 7
          %s723 = scalar_select %p722, %s721, 7
          %s724 = smul.addr %s723, 8
          %s725 = scalar_lea.vmem %s0, %s724
          %s726 = smul.u32 4, %s37
        $region108: #{decoder_layer.1} parent=103 // pred_fallthru
          _
        // Predicated region
        $region109: #{decoder_layer.1} parent=103 // pred_check
          %p727 = pneg %p83
        $region110: #{decoder_layer.1} parent=103 // pred_check_branch
          %729 = sbr.rel (%p727) target = $region112
        $region111: #{decoder_layer.1} parent=103 // pred_region
          %s730 = smul.u32 4, %s37
          %p731 = scmp.lt.s32.totalorder %s730, 7
          %s732 = scalar_select %p731, %s730, 7
          %s733 = smul.addr %s732, 8
          %s734 = scalar_lea.vmem %s1, %s733
          %s735 = smul.u32 4, %s37
        $region112: #{decoder_layer.1} parent=103 // pred_fallthru
          _
      $region104: #{decoder_layer.1} parent=5 // pred_fallthru
        _
      %p736 = scmp.le.s32.totalorder 1, %s37
      %p737 = scmp.lt.s32.totalorder %s37, 3
      %p738 = pnand %p736, %p737
      %p739 = pneg %p738
      // Predicated region
      $region113: #{decoder_layer.1} parent=5 // pred_check
        _
      $region114: #{decoder_layer.1} parent=5 // pred_check_branch
        %741 = sbr.rel (%p738) target = $region116
      $region115: #{decoder_layer.1} parent=5 // pred_region
        %s742 = ssub.s32 %s37, 1
        // Predicated region
        $region117: #{decoder_layer.1} parent=115 // pred_check
          %p743 = pneg %p425
        $region118: #{decoder_layer.1} parent=115 // pred_check_branch
          %745 = sbr.rel (%p743) target = $region120
        $region119: #{decoder_layer.1} parent=115 // pred_region
          %747 = dma.done [#allocation3], 16
        $region120: #{decoder_layer.1} parent=115 // pred_fallthru
          _
        // Predicated region
        $region121: #{decoder_layer.1} parent=115 // pred_check
          %p748 = pneg %p446
        $region122: #{decoder_layer.1} parent=115 // pred_check_branch
          %750 = sbr.rel (%p748) target = $region124
        $region123: #{decoder_layer.1} parent=115 // pred_region
          %752 = dma.done [#allocation6], 16
        $region124: #{decoder_layer.1} parent=115 // pred_fallthru
          _
        // Predicated region
        $region125: #{decoder_layer.1} parent=115 // pred_check
          %p753 = pneg %p467
        $region126: #{decoder_layer.1} parent=115 // pred_check_branch
          %755 = sbr.rel (%p753) target = $region128
        $region127: #{decoder_layer.1} parent=115 // pred_region
          %757 = dma.done [#allocation6], 16
        $region128: #{decoder_layer.1} parent=115 // pred_fallthru
          _
        // Predicated region
        $region129: #{decoder_layer.1} parent=115 // pred_check
          %p758 = pneg %p488
        $region130: #{decoder_layer.1} parent=115 // pred_check_branch
          %760 = sbr.rel (%p758) target = $region132
        $region131: #{decoder_layer.1} parent=115 // pred_region
          %762 = dma.done [#allocation9], 512
        $region132: #{decoder_layer.1} parent=115 // pred_fallthru
          _
        // Predicated region
        $region133: #{decoder_layer.1} parent=115 // pred_check
          %p763 = pneg %p509
        $region134: #{decoder_layer.1} parent=115 // pred_check_branch
          %765 = sbr.rel (%p763) target = $region136
        $region135: #{decoder_layer.1} parent=115 // pred_region
          %767 = dma.done [#allocation9], 16
        $region136: #{decoder_layer.1} parent=115 // pred_fallthru
          _
        // Predicated region
        $region137: #{decoder_layer.1} parent=115 // pred_check
          %p768 = pneg %p551
        $region138: #{decoder_layer.1} parent=115 // pred_check_branch
          %770 = sbr.rel (%p768) target = $region140
        $region139: #{decoder_layer.1} parent=115 // pred_region
          %772 = dma.done [#allocation12], 16
        $region140: #{decoder_layer.1} parent=115 // pred_fallthru
          _
        %s773 = smul.u32 4, %s42
        %p774 = scmp.lt.s32.totalorder %s773, 7
        %s775 = scalar_select %p774, %s773, 7
        %s776 = smul.addr %s775, 8
        %s777 = scalar_lea.vmem %s0, %s776
        %p778 = pneg %p63
        %p779 = pneg %p60
        %s780 = smul.u32 4, %s42
        %p781 = scmp.lt.s32.totalorder %s780, 7
        %s782 = scalar_select %p781, %s780, 7
        %s783 = smul.addr %s782, 8
        %s784 = scalar_lea.vmem %s1, %s783
        %p785 = pneg %p89
        %p786 = pneg %p86
        %p787 = pneg %p110
        %p788 = pneg %p107
        %p789 = pneg %p131
        %p790 = pneg %p128
        %p791 = pneg %p152
        %p792 = pneg %p149
        %p793 = pneg %p173
        %p794 = pneg %p170
        %p795 = pneg %p194
        %p796 = pneg %p191
        %p797 = pneg %p215
        %p798 = pneg %p212
        %p799 = pneg %p236
        %p800 = pneg %p233
        %p801 = pneg %p257
        %p802 = pneg %p254
        %p803 = pneg %p278
        %p804 = pneg %p275
        %p805 = pneg %p299
        %p806 = pneg %p296
        %p807 = pneg %p320
        %p808 = pneg %p317
        %p809 = pneg %p341
        %p810 = pneg %p338
        %p811 = pneg %p362
        %p812 = pneg %p359
        %p813 = pneg %p383
        %p814 = pneg %p380
        %p815 = pneg %p404
        %p816 = pneg %p401
        %p817 = pneg %p425
        %p818 = pneg %p422
        %p819 = pneg %p446
        %p820 = pneg %p443
        %p821 = pneg %p467
        %p822 = pneg %p464
        %p823 = pneg %p488
        %p824 = pneg %p485
        %p825 = pneg %p509
        %p826 = pneg %p506
        %p827 = pneg %p530
        %p828 = pneg %p527
        %p829 = pneg %p551
        %p830 = pneg %p548
        %p831 = pneg %p577
        %p832 = pneg %p574
        %s833 = sand.u32 %s564, 1
        %s834 = scalar_lea.sflag [#allocation4], %s833
        %s835 = sand.u32 %s564, 1
        %s836 = smul.addr %s835, 4
        %s837 = scalar_lea.vmem [#allocation13], %s836
        %s838 = smul.u32 4, %s42
        %p839 = scmp.lt.s32.totalorder %s838, 7
        %s840 = scalar_select %p839, %s838, 7
        %s841 = smul.addr %s840, 8
        %s842 = scalar_lea.vmem %s0, %s841
        %s843 = smul.u32 4, %s42
        %s844 = smul.u32 4, %s42
        %p845 = scmp.lt.s32.totalorder %s844, 7
        %s846 = scalar_select %p845, %s844, 7
        %s847 = smul.addr %s846, 8
        %s848 = scalar_lea.vmem %s1, %s847
        %s849 = smul.u32 4, %s42
        %s850 = smul.u32 4, %s42
        %v851 = vld [vmem:[%s842] sm:$0xff]
        %v852 = vld [vmem:[%s842 + $0x8] sm:$0xff]
        %v853 = vld [vmem:[%s842 + $0x10] sm:$0xff]
        %v854 = vld [vmem:[%s842 + $0x18] sm:$0xff]
        %v855 = vld [vmem:[%s848] sm:$0xff]
        %v856 = vld [vmem:[%s848 + $0x8] sm:$0xff]
        %v857 = vld [vmem:[%s848 + $0x10] sm:$0xff]
        %v858 = vld [vmem:[%s848 + $0x18] sm:$0xff]
        %v859 = vld [vmem:[%s4] sm:$0x1]
        %v860 = vld [vmem:[%s5] sm:$0x1]
        %vm861 = vcmask 261120
        %v862 = vsel %vm861, %v851, 0.0
        %863 = vadd.xlane.f32.xlu0 %v862
        %v864 = vpop.xlane.xlu0 %863
        %v865 = vsel %vm861, %v852, 0.0
        %866 = vadd.xlane.f32.xlu0 %v865
        %v867 = vpop.xlane.xlu0 %866
        %v868 = vsel %vm861, %v853, 0.0
        %869 = vadd.xlane.f32.xlu0 %v868
        %v870 = vpop.xlane.xlu0 %869
        %v871 = vsel %vm861, %v854, 0.0
        %872 = vadd.xlane.f32.xlu0 %v871
        %v873 = vpop.xlane.xlu0 %872
        %v874 = vmul.f32 %v851, %v851
        %v875 = vmul.f32 %v852, %v852
        %v876 = vmul.f32 %v853, %v853
        %v877 = vmul.f32 %v854, %v854
        %v878 = vsel %vm861, %v874, 0.0
        %879 = vadd.xlane.f32.xlu0 %v878
        %v880 = vpop.xlane.xlu0 %879
        %v881 = vsel %vm861, %v875, 0.0
        %882 = vadd.xlane.f32.xlu0 %v881
        %v883 = vpop.xlane.xlu0 %882
        %v884 = vsel %vm861, %v876, 0.0
        %885 = vadd.xlane.f32.xlu0 %v884
        %v886 = vpop.xlane.xlu0 %885
        %v887 = vsel %vm861, %v877, 0.0
        %888 = vadd.xlane.f32.xlu0 %v887
        %v889 = vpop.xlane.xlu0 %888
        %v890 = vrcp.pop 32.0
        %v891 = vmul.f32 32.0, %v890
        %v892 = vsub.f32 1.0, %v891
        %v893 = vmul.f32 %v890, %v892
        %v894 = vadd.f32 %v890, %v893
        %vm895 = vweird.f32 %v890
        %v896 = vsel %vm895, %v890, %v894
        %v897 = vmul.f32 %v864, %v896
        %v898 = vmul.f32 %v867, %v896
        %v899 = vmul.f32 %v870, %v896
        %v900 = vmul.f32 %v873, %v896
        %v901 = vmul.f32 %v864, %v897
        %v902 = vmul.f32 %v867, %v898
        %v903 = vmul.f32 %v870, %v899
        %v904 = vmul.f32 %v873, %v900
        %v905 = vsub.f32 %v880, %v901
        %v906 = vsub.f32 %v883, %v902
        %v907 = vsub.f32 %v886, %v903
        %v908 = vsub.f32 %v889, %v904
        %v909 = vrcp.pop 31.0
        %v910 = vmul.f32 31.0, %v909
        %v911 = vsub.f32 1.0, %v910
        %v912 = vmul.f32 %v909, %v911
        %v913 = vadd.f32 %v909, %v912
        %vm914 = vweird.f32 %v909
        %v915 = vsel %vm914, %v909, %v913
        %v916 = vmul.f32 %v905, %v915
        %v917 = vmul.f32 %v906, %v915
        %v918 = vmul.f32 %v907, %v915
        %v919 = vmul.f32 %v908, %v915
        %v920 = vmax.f32 %v916, 0.0
        %v921 = vmax.f32 %v917, 0.0
        %v922 = vmax.f32 %v918, 0.0
        %v923 = vmax.f32 %v919, 0.0
        %v924 = vsub.f32 %v851, %v897
        %v925 = vsub.f32 %v852, %v898
        %v926 = vsub.f32 %v853, %v899
        %v927 = vsub.f32 %v854, %v900
        %v928 = vrsqrt.pop %v920
        %v929 = vmul.f32 %v928, %v920
        %v930 = vmul.f32 %v929, %v928
        %v931 = vmul.f32 0.5, %v930
        %v932 = vsub.f32 1.5, %v931
        %v933 = vmul.f32 %v928, %v932
        %v934 = vmul.f32 %v920, %v933
        %vm935 = vcmp.eq.f32.partialorder %v920, inf
        %v936 = vsel %vm935, %v920, %v934
        %vm937 = vcmp.eq.f32.partialorder %v920, 0.0
        %v938 = vand.u32 %v920, 2147483648
        %v939 = vsel %vm937, %v938, %v936
        %v940 = vrsqrt.pop %v921
        %v941 = vmul.f32 %v940, %v921
        %v942 = vmul.f32 %v941, %v940
        %v943 = vmul.f32 0.5, %v942
        %v944 = vsub.f32 1.5, %v943
        %v945 = vmul.f32 %v940, %v944
        %v946 = vmul.f32 %v921, %v945
        %vm947 = vcmp.eq.f32.partialorder %v921, inf
        %v948 = vsel %vm947, %v921, %v946
        %vm949 = vcmp.eq.f32.partialorder %v921, 0.0
        %v950 = vand.u32 %v921, 2147483648
        %v951 = vsel %vm949, %v950, %v948
        %v952 = vrsqrt.pop %v922
        %v953 = vmul.f32 %v952, %v922
        %v954 = vmul.f32 %v953, %v952
        %v955 = vmul.f32 0.5, %v954
        %v956 = vsub.f32 1.5, %v955
        %v957 = vmul.f32 %v952, %v956
        %v958 = vmul.f32 %v922, %v957
        %vm959 = vcmp.eq.f32.partialorder %v922, inf
        %v960 = vsel %vm959, %v922, %v958
        %vm961 = vcmp.eq.f32.partialorder %v922, 0.0
        %v962 = vand.u32 %v922, 2147483648
        %v963 = vsel %vm961, %v962, %v960
        %v964 = vrsqrt.pop %v923
        %v965 = vmul.f32 %v964, %v923
        %v966 = vmul.f32 %v965, %v964
        %v967 = vmul.f32 0.5, %v966
        %v968 = vsub.f32 1.5, %v967
        %v969 = vmul.f32 %v964, %v968
        %v970 = vmul.f32 %v923, %v969
        %vm971 = vcmp.eq.f32.partialorder %v923, inf
        %v972 = vsel %vm971, %v923, %v970
        %vm973 = vcmp.eq.f32.partialorder %v923, 0.0
        %v974 = vand.u32 %v923, 2147483648
        %v975 = vsel %vm973, %v974, %v972
        %v976 = vadd.f32 %v939, 1e-06
        %v977 = vadd.f32 %v951, 1e-06
        %v978 = vadd.f32 %v963, 1e-06
        %v979 = vadd.f32 %v975, 1e-06
        %v981 = vperm.slane %v859, 0
        %v983 = vrcp.pop %v976
        %v984 = vmul.f32 %v976, %v983
        %v985 = vsub.f32 1.0, %v984
        %v986 = vmul.f32 %v983, %v985
        %v987 = vadd.f32 %v983, %v986
        %vm988 = vweird.f32 %v976
        %vm989 = vweird.f32 %v983
        %vm990 = vmor %vm988, %vm989
        %v991 = vsel %vm990, %v983, %v987
        %v992 = vand.u32 2147483647, %v976
        %vm993 = vcmp.eq.f32.partialorder %v992, 8.507059e+37
        %v994 = vand.u32 %v976, 2147483648
        %v995 = vor.u32 1.1754944e-38, %v994
        %v996 = vsel %vm993, %v995, %v991
        %v997 = vmul.f32 %v981, %v996
        %v998 = vrcp.pop %v977
        %v999 = vmul.f32 %v977, %v998
        %v1000 = vsub.f32 1.0, %v999
        %v1001 = vmul.f32 %v998, %v1000
        %v1002 = vadd.f32 %v998, %v1001
        %vm1003 = vweird.f32 %v977
        %vm1004 = vweird.f32 %v998
        %vm1005 = vmor %vm1003, %vm1004
        %v1006 = vsel %vm1005, %v998, %v1002
        %v1007 = vand.u32 2147483647, %v977
        %vm1008 = vcmp.eq.f32.partialorder %v1007, 8.507059e+37
        %v1009 = vand.u32 %v977, 2147483648
        %v1010 = vor.u32 1.1754944e-38, %v1009
        %v1011 = vsel %vm1008, %v1010, %v1006
        %v1012 = vmul.f32 %v981, %v1011
        %v1013 = vrcp.pop %v978
        %v1014 = vmul.f32 %v978, %v1013
        %v1015 = vsub.f32 1.0, %v1014
        %v1016 = vmul.f32 %v1013, %v1015
        %v1017 = vadd.f32 %v1013, %v1016
        %vm1018 = vweird.f32 %v978
        %vm1019 = vweird.f32 %v1013
        %vm1020 = vmor %vm1018, %vm1019
        %v1021 = vsel %vm1020, %v1013, %v1017
        %v1022 = vand.u32 2147483647, %v978
        %vm1023 = vcmp.eq.f32.partialorder %v1022, 8.507059e+37
        %v1024 = vand.u32 %v978, 2147483648
        %v1025 = vor.u32 1.1754944e-38, %v1024
        %v1026 = vsel %vm1023, %v1025, %v1021
        %v1027 = vmul.f32 %v981, %v1026
        %v1028 = vrcp.pop %v979
        %v1029 = vmul.f32 %v979, %v1028
        %v1030 = vsub.f32 1.0, %v1029
        %v1031 = vmul.f32 %v1028, %v1030
        %v1032 = vadd.f32 %v1028, %v1031
        %vm1033 = vweird.f32 %v979
        %vm1034 = vweird.f32 %v1028
        %vm1035 = vmor %vm1033, %vm1034
        %v1036 = vsel %vm1035, %v1028, %v1032
        %v1037 = vand.u32 2147483647, %v979
        %vm1038 = vcmp.eq.f32.partialorder %v1037, 8.507059e+37
        %v1039 = vand.u32 %v979, 2147483648
        %v1040 = vor.u32 1.1754944e-38, %v1039
        %v1041 = vsel %vm1038, %v1040, %v1036
        %v1042 = vmul.f32 %v981, %v1041
        %v1043 = vmul.f32 %v924, %v997
        %v1044 = vmul.f32 %v925, %v1012
        %v1045 = vmul.f32 %v926, %v1027
        %v1046 = vmul.f32 %v927, %v1042
        %v1048 = vperm.slane %v860, 0
        %v1050 = vadd.f32 %v1043, %v1048
        %v1051 = vadd.f32 %v1044, %v1048
        %v1052 = vadd.f32 %v1045, %v1048
        %v1053 = vadd.f32 %v1046, %v1048
        %v1054 = vld [vmem:[%s6] sm:$0xff]
        %v1055 = vld [vmem:[%s6 + $0x8] sm:$0xff]
        %v1056 = vld [vmem:[%s6 + $0x10] sm:$0xff]
        %v1057 = vld [vmem:[%s6 + $0x18] sm:$0xff]
        %v1058 = vld [vmem:[%s7] sm:$0x1]
        %v1060 = vperm.slane %v1058, 0
        %v1063 = vsel %vm861, %v1050, 0
        %v1066 = vsel %vm861, %v1051, 0
        %v1069 = vsel %vm861, %v1052, 0
        %v1072 = vsel %vm861, %v1053, 0
        %1074 = vmatpush.msra.mxu0 0.0
        %1075 = vmatpush.msra.mxu0 0.0
        %1076 = vmatpush.msra.mxu0 0.0
        %1077 = vmatpush.msra.mxu0 0.0
        %1078 = vmatpush.msra.mxu0 0.0
        %1079 = vmatpush.msra.mxu0 0.0
        %1080 = vmatpush.msra.mxu0 0.0
        %1081 = vmatpush.msra.mxu0 0.0
        %1082 = vmatpush.msra.mxu0 0.0
        %1083 = vmatpush.msra.mxu0 0.0
        %1084 = vmatpush.msra.mxu0 0.0
        %1085 = vmatpush.msra.mxu0 0.0
        %1086 = vmatpush.msra.mxu0 %v1057
        %1087 = vmatpush.msra.mxu0 %v1056
        %1088 = vmatpush.msra.mxu0 %v1055
        %1089 = vmatpush.msra.mxu0 %v1054
        %1090 = vmatmul.f32.gmra.mxu0 %v1063
        %v1091 = vpop.f32.mrf.mxu0
        %v1092 = vadd.f32 %v1060, %v1091
        %1093 = vmatmul.f32.gmra.mxu0 %v1066
        %v1094 = vpop.f32.mrf.mxu0
        %v1095 = vadd.f32 %v1060, %v1094
        %1096 = vmatmul.f32.gmra.mxu0 %v1069
        %v1097 = vpop.f32.mrf.mxu0
        %v1098 = vadd.f32 %v1060, %v1097
        %1099 = vmatmul.f32.gmra.mxu0 %v1072
        %v1100 = vpop.f32.mrf.mxu0
        %v1101 = vadd.f32 %v1060, %v1100
        %1102 = vdwg.mxu0
        %v1103 = vld [vmem:[%s2] sm:$0x1]
        %v1104 = vld [vmem:[%s8] sm:$0xff]
        %v1105 = vld [vmem:[%s8 + $0x8] sm:$0xff]
        %v1106 = vld [vmem:[%s8 + $0x10] sm:$0xff]
        %v1107 = vld [vmem:[%s8 + $0x18] sm:$0xff]
        %v1108 = vld [vmem:[%s9] sm:$0x1]
        %v1110 = vrot.slane %v1092, 7
        %1111 = vrot.lane.b32.xlu0 %v1092, 96
        %v1112 = vpop.permute.xlu0 %1111
        %vm1113 = vcmask 130048
        %v1114 = vsel %vm1113, %v1110, 0
        %v1116 = vsel %vm1113, %v1112, 0
        %1118 = vmatpush.xpose.msra.mxu0 0.0
        %1119 = vmatpush.xpose.msra.mxu0 0.0
        %1120 = vmatpush.xpose.msra.mxu0 0.0
        %1121 = vmatpush.xpose.msra.mxu0 0.0
        %1122 = vmatpush.xpose.msra.mxu0 0.0
        %1123 = vmatpush.xpose.msra.mxu0 0.0
        %1124 = vmatpush.xpose.msra.mxu0 0.0
        %1125 = vmatpush.xpose.msra.mxu0 0.0
        %1126 = vmatpush.xpose.msra.mxu0 0.0
        %1127 = vmatpush.xpose.msra.mxu0 0.0
        %1128 = vmatpush.xpose.msra.mxu0 0.0
        %1129 = vmatpush.xpose.msra.mxu0 0.0
        %1130 = vmatpush.xpose.msra.mxu0 0.0
        %1131 = vmatpush.xpose.msra.mxu0 0.0
        %1132 = vmatpush.xpose.msra.mxu0 0.0
        %1133 = vmatpush.xpose.msra.mxu0 %v1116
        %1134 = vmatmul.f32.gmra.mxu0 %v1114
        %v1135 = vpop.f32.mrf.mxu0
        %v1136 = vadd.f32 0.0, %v1135
        %1137 = vdwg.mxu0
        %v1139 = vrot.slane %v1095, 7
        %1140 = vrot.lane.b32.xlu0 %v1095, 96
        %v1141 = vpop.permute.xlu0 %1140
        %v1142 = vsel %vm1113, %v1139, 0
        %v1144 = vsel %vm1113, %v1141, 0
        %1146 = vmatpush.xpose.msra.mxu0 0.0
        %1147 = vmatpush.xpose.msra.mxu0 0.0
        %1148 = vmatpush.xpose.msra.mxu0 0.0
        %1149 = vmatpush.xpose.msra.mxu0 0.0
        %1150 = vmatpush.xpose.msra.mxu0 0.0
        %1151 = vmatpush.xpose.msra.mxu0 0.0
        %1152 = vmatpush.xpose.msra.mxu0 0.0
        %1153 = vmatpush.xpose.msra.mxu0 0.0
        %1154 = vmatpush.xpose.msra.mxu0 0.0
        %1155 = vmatpush.xpose.msra.mxu0 0.0
        %1156 = vmatpush.xpose.msra.mxu0 0.0
        %1157 = vmatpush.xpose.msra.mxu0 0.0
        %1158 = vmatpush.xpose.msra.mxu0 0.0
        %1159 = vmatpush.xpose.msra.mxu0 0.0
        %1160 = vmatpush.xpose.msra.mxu0 0.0
        %1161 = vmatpush.xpose.msra.mxu0 %v1144
        %1162 = vmatmul.f32.gmra.mxu0 %v1142
        %v1163 = vpop.f32.mrf.mxu0
        %v1164 = vadd.f32 0.0, %v1163
        %1165 = vdwg.mxu0
        %v1167 = vrot.slane %v1098, 7
        %1168 = vrot.lane.b32.xlu0 %v1098, 96
        %v1169 = vpop.permute.xlu0 %1168
        %v1170 = vsel %vm1113, %v1167, 0
        %v1172 = vsel %vm1113, %v1169, 0
        %1174 = vmatpush.xpose.msra.mxu0 0.0
        %1175 = vmatpush.xpose.msra.mxu0 0.0
        %1176 = vmatpush.xpose.msra.mxu0 0.0
        %1177 = vmatpush.xpose.msra.mxu0 0.0
        %1178 = vmatpush.xpose.msra.mxu0 0.0
        %1179 = vmatpush.xpose.msra.mxu0 0.0
        %1180 = vmatpush.xpose.msra.mxu0 0.0
        %1181 = vmatpush.xpose.msra.mxu0 0.0
        %1182 = vmatpush.xpose.msra.mxu0 0.0
        %1183 = vmatpush.xpose.msra.mxu0 0.0
        %1184 = vmatpush.xpose.msra.mxu0 0.0
        %1185 = vmatpush.xpose.msra.mxu0 0.0
        %1186 = vmatpush.xpose.msra.mxu0 0.0
        %1187 = vmatpush.xpose.msra.mxu0 0.0
        %1188 = vmatpush.xpose.msra.mxu0 0.0
        %1189 = vmatpush.xpose.msra.mxu0 %v1172
        %1190 = vmatmul.f32.gmra.mxu0 %v1170
        %v1191 = vpop.f32.mrf.mxu0
        %v1192 = vadd.f32 0.0, %v1191
        %1193 = vdwg.mxu0
        %v1195 = vrot.slane %v1101, 7
        %1196 = vrot.lane.b32.xlu0 %v1101, 96
        %v1197 = vpop.permute.xlu0 %1196
        %v1198 = vsel %vm1113, %v1195, 0
        %v1200 = vsel %vm1113, %v1197, 0
        %1202 = vmatpush.xpose.msra.mxu0 0.0
        %1203 = vmatpush.xpose.msra.mxu0 0.0
        %1204 = vmatpush.xpose.msra.mxu0 0.0
        %1205 = vmatpush.xpose.msra.mxu0 0.0
        %1206 = vmatpush.xpose.msra.mxu0 0.0
        %1207 = vmatpush.xpose.msra.mxu0 0.0
        %1208 = vmatpush.xpose.msra.mxu0 0.0
        %1209 = vmatpush.xpose.msra.mxu0 0.0
        %1210 = vmatpush.xpose.msra.mxu0 0.0
        %1211 = vmatpush.xpose.msra.mxu0 0.0
        %1212 = vmatpush.xpose.msra.mxu0 0.0
        %1213 = vmatpush.xpose.msra.mxu0 0.0
        %1214 = vmatpush.xpose.msra.mxu0 0.0
        %1215 = vmatpush.xpose.msra.mxu0 0.0
        %1216 = vmatpush.xpose.msra.mxu0 0.0
        %1217 = vmatpush.xpose.msra.mxu0 %v1200
        %1218 = vmatmul.f32.gmra.mxu0 %v1198
        %v1219 = vpop.f32.mrf.mxu0
        %v1220 = vadd.f32 0.0, %v1219
        %1221 = vdwg.mxu0
        %v1222 = vmul.f32 %v1136, 0.25
        %v1223 = vmul.f32 %v1164, 0.25
        %v1224 = vmul.f32 %v1192, 0.25
        %v1225 = vmul.f32 %v1220, 0.25
        %v1226 = vadd.f32 %v1222, %v1103
        %v1227 = vadd.f32 %v1223, %v1103
        %v1228 = vadd.f32 %v1224, %v1103
        %v1229 = vadd.f32 %v1225, %v1103
        %vm1230 = vcmask 57344
        %v1231 = vsel %vm1230, %v1226, -inf
        %1232 = vmax.xlane.f32.xlu0 %v1231
        %v1233 = vpop.xlane.xlu0 %1232
        %v1234 = vsel %vm1230, %v1227, -inf
        %1235 = vmax.xlane.f32.xlu0 %v1234
        %v1236 = vpop.xlane.xlu0 %1235
        %v1237 = vsel %vm1230, %v1228, -inf
        %1238 = vmax.xlane.f32.xlu0 %v1237
        %v1239 = vpop.xlane.xlu0 %1238
        %v1240 = vsel %vm1230, %v1229, -inf
        %1241 = vmax.xlane.f32.xlu0 %v1240
        %v1242 = vpop.xlane.xlu0 %1241
        %v1243 = vsub.f32 %v1226, %v1233
        %v1244 = vsub.f32 %v1227, %v1236
        %v1245 = vsub.f32 %v1228, %v1239
        %v1246 = vsub.f32 %v1229, %v1242
        %v1247 = vmul.f32 %v1243, 1.442695
        %v1248 = vpow.pop %v1247
        %v1249 = vmul.f32 %v1244, 1.442695
        %v1250 = vpow.pop %v1249
        %v1251 = vmul.f32 %v1245, 1.442695
        %v1252 = vpow.pop %v1251
        %v1253 = vmul.f32 %v1246, 1.442695
        %v1254 = vpow.pop %v1253
        %v1255 = vsel %vm1230, %v1248, 0.0
        %1256 = vadd.xlane.f32.xlu0 %v1255
        %v1257 = vpop.xlane.xlu0 %1256
        %v1258 = vsel %vm1230, %v1250, 0.0
        %1259 = vadd.xlane.f32.xlu0 %v1258
        %v1260 = vpop.xlane.xlu0 %1259
        %v1261 = vsel %vm1230, %v1252, 0.0
        %1262 = vadd.xlane.f32.xlu0 %v1261
        %v1263 = vpop.xlane.xlu0 %1262
        %v1264 = vsel %vm1230, %v1254, 0.0
        %1265 = vadd.xlane.f32.xlu0 %v1264
        %v1266 = vpop.xlane.xlu0 %1265
        %v1267 = vrcp.pop %v1257
        %v1268 = vrcp.pop %v1260
        %v1269 = vrcp.pop %v1263
        %v1270 = vrcp.pop %v1266
        %v1271 = vmul.f32 %v1248, %v1267
        %v1272 = vmul.f32 %v1250, %v1268
        %v1273 = vmul.f32 %v1252, %v1269
        %v1274 = vmul.f32 %v1254, %v1270
        %1275 = vrot.lane.b32.xlu0 %v1092, 64
        %v1276 = vpop.permute.xlu0 %1275
        %vm1278 = vcmask 64512
        %v1280 = vsel %vm1278, %v1271, 0
        %1282 = vmatpush.msra.mxu0 0.0
        %1283 = vmatpush.msra.mxu0 0.0
        %1284 = vmatpush.msra.mxu0 0.0
        %1285 = vmatpush.msra.mxu0 0.0
        %1286 = vmatpush.msra.mxu0 0.0
        %1287 = vmatpush.msra.mxu0 0.0
        %1288 = vmatpush.msra.mxu0 0.0
        %1289 = vmatpush.msra.mxu0 0.0
        %1290 = vmatpush.msra.mxu0 0.0
        %1291 = vmatpush.msra.mxu0 0.0
        %1292 = vmatpush.msra.mxu0 0.0
        %1293 = vmatpush.msra.mxu0 0.0
        %1294 = vmatpush.msra.mxu0 0.0
        %1295 = vmatpush.msra.mxu0 0.0
        %1296 = vmatpush.msra.mxu0 0.0
        %1297 = vmatpush.msra.mxu0 %v1276
        %1298 = vmatmul.f32.gmra.mxu0 %v1280
        %v1299 = vpop.f32.mrf.mxu0
        %v1300 = vadd.f32 0.0, %v1299
        %1301 = vdwg.mxu0
        %1302 = vrot.lane.b32.xlu0 %v1095, 64
        %v1303 = vpop.permute.xlu0 %1302
        %v1306 = vsel %vm1278, %v1272, 0
        %1308 = vmatpush.msra.mxu0 0.0
        %1309 = vmatpush.msra.mxu0 0.0
        %1310 = vmatpush.msra.mxu0 0.0
        %1311 = vmatpush.msra.mxu0 0.0
        %1312 = vmatpush.msra.mxu0 0.0
        %1313 = vmatpush.msra.mxu0 0.0
        %1314 = vmatpush.msra.mxu0 0.0
        %1315 = vmatpush.msra.mxu0 0.0
        %1316 = vmatpush.msra.mxu0 0.0
        %1317 = vmatpush.msra.mxu0 0.0
        %1318 = vmatpush.msra.mxu0 0.0
        %1319 = vmatpush.msra.mxu0 0.0
        %1320 = vmatpush.msra.mxu0 0.0
        %1321 = vmatpush.msra.mxu0 0.0
        %1322 = vmatpush.msra.mxu0 0.0
        %1323 = vmatpush.msra.mxu0 %v1303
        %1324 = vmatmul.f32.gmra.mxu0 %v1306
        %v1325 = vpop.f32.mrf.mxu0
        %v1326 = vadd.f32 0.0, %v1325
        %1327 = vdwg.mxu0
        %1328 = vrot.lane.b32.xlu0 %v1098, 64
        %v1329 = vpop.permute.xlu0 %1328
        %v1332 = vsel %vm1278, %v1273, 0
        %1334 = vmatpush.msra.mxu0 0.0
        %1335 = vmatpush.msra.mxu0 0.0
        %1336 = vmatpush.msra.mxu0 0.0
        %1337 = vmatpush.msra.mxu0 0.0
        %1338 = vmatpush.msra.mxu0 0.0
        %1339 = vmatpush.msra.mxu0 0.0
        %1340 = vmatpush.msra.mxu0 0.0
        %1341 = vmatpush.msra.mxu0 0.0
        %1342 = vmatpush.msra.mxu0 0.0
        %1343 = vmatpush.msra.mxu0 0.0
        %1344 = vmatpush.msra.mxu0 0.0
        %1345 = vmatpush.msra.mxu0 0.0
        %1346 = vmatpush.msra.mxu0 0.0
        %1347 = vmatpush.msra.mxu0 0.0
        %1348 = vmatpush.msra.mxu0 0.0
        %1349 = vmatpush.msra.mxu0 %v1329
        %1350 = vmatmul.f32.gmra.mxu0 %v1332
        %v1351 = vpop.f32.mrf.mxu0
        %v1352 = vadd.f32 0.0, %v1351
        %1353 = vdwg.mxu0
        %1354 = vrot.lane.b32.xlu0 %v1101, 64
        %v1355 = vpop.permute.xlu0 %1354
        %v1358 = vsel %vm1278, %v1274, 0
        %1360 = vmatpush.msra.mxu0 0.0
        %1361 = vmatpush.msra.mxu0 0.0
        %1362 = vmatpush.msra.mxu0 0.0
        %1363 = vmatpush.msra.mxu0 0.0
        %1364 = vmatpush.msra.mxu0 0.0
        %1365 = vmatpush.msra.mxu0 0.0
        %1366 = vmatpush.msra.mxu0 0.0
        %1367 = vmatpush.msra.mxu0 0.0
        %1368 = vmatpush.msra.mxu0 0.0
        %1369 = vmatpush.msra.mxu0 0.0
        %1370 = vmatpush.msra.mxu0 0.0
        %1371 = vmatpush.msra.mxu0 0.0
        %1372 = vmatpush.msra.mxu0 0.0
        %1373 = vmatpush.msra.mxu0 0.0
        %1374 = vmatpush.msra.mxu0 0.0
        %1375 = vmatpush.msra.mxu0 %v1355
        %1376 = vmatmul.f32.gmra.mxu0 %v1358
        %v1377 = vpop.f32.mrf.mxu0
        %v1378 = vadd.f32 0.0, %v1377
        %1379 = vdwg.mxu0
        %1380 = vrot.lane.b32.xlu0 %v1110, 112
        %v1381 = vpop.permute.xlu0 %1380
        %1382 = vrot.lane.b32.xlu0 %v1092, 80
        %v1383 = vpop.permute.xlu0 %1382
        %v1384 = vsel %vm1113, %v1381, 0
        %v1386 = vsel %vm1113, %v1383, 0
        %1388 = vmatpush.xpose.msra.mxu0 0.0
        %1389 = vmatpush.xpose.msra.mxu0 0.0
        %1390 = vmatpush.xpose.msra.mxu0 0.0
        %1391 = vmatpush.xpose.msra.mxu0 0.0
        %1392 = vmatpush.xpose.msra.mxu0 0.0
        %1393 = vmatpush.xpose.msra.mxu0 0.0
        %1394 = vmatpush.xpose.msra.mxu0 0.0
        %1395 = vmatpush.xpose.msra.mxu0 0.0
        %1396 = vmatpush.xpose.msra.mxu0 0.0
        %1397 = vmatpush.xpose.msra.mxu0 0.0
        %1398 = vmatpush.xpose.msra.mxu0 0.0
        %1399 = vmatpush.xpose.msra.mxu0 0.0
        %1400 = vmatpush.xpose.msra.mxu0 0.0
        %1401 = vmatpush.xpose.msra.mxu0 0.0
        %1402 = vmatpush.xpose.msra.mxu0 0.0
        %1403 = vmatpush.xpose.msra.mxu0 %v1386
        %1404 = vmatmul.f32.gmra.mxu0 %v1384
        %v1405 = vpop.f32.mrf.mxu0
        %v1406 = vadd.f32 0.0, %v1405
        %1407 = vdwg.mxu0
        %1408 = vrot.lane.b32.xlu0 %v1139, 112
        %v1409 = vpop.permute.xlu0 %1408
        %1410 = vrot.lane.b32.xlu0 %v1095, 80
        %v1411 = vpop.permute.xlu0 %1410
        %v1412 = vsel %vm1113, %v1409, 0
        %v1414 = vsel %vm1113, %v1411, 0
        %1416 = vmatpush.xpose.msra.mxu0 0.0
        %1417 = vmatpush.xpose.msra.mxu0 0.0
        %1418 = vmatpush.xpose.msra.mxu0 0.0
        %1419 = vmatpush.xpose.msra.mxu0 0.0
        %1420 = vmatpush.xpose.msra.mxu0 0.0
        %1421 = vmatpush.xpose.msra.mxu0 0.0
        %1422 = vmatpush.xpose.msra.mxu0 0.0
        %1423 = vmatpush.xpose.msra.mxu0 0.0
        %1424 = vmatpush.xpose.msra.mxu0 0.0
        %1425 = vmatpush.xpose.msra.mxu0 0.0
        %1426 = vmatpush.xpose.msra.mxu0 0.0
        %1427 = vmatpush.xpose.msra.mxu0 0.0
        %1428 = vmatpush.xpose.msra.mxu0 0.0
        %1429 = vmatpush.xpose.msra.mxu0 0.0
        %1430 = vmatpush.xpose.msra.mxu0 0.0
        %1431 = vmatpush.xpose.msra.mxu0 %v1414
        %1432 = vmatmul.f32.gmra.mxu0 %v1412
        %v1433 = vpop.f32.mrf.mxu0
        %v1434 = vadd.f32 0.0, %v1433
        %1435 = vdwg.mxu0
        %1436 = vrot.lane.b32.xlu0 %v1167, 112
        %v1437 = vpop.permute.xlu0 %1436
        %1438 = vrot.lane.b32.xlu0 %v1098, 80
        %v1439 = vpop.permute.xlu0 %1438
        %v1440 = vsel %vm1113, %v1437, 0
        %v1442 = vsel %vm1113, %v1439, 0
        %1444 = vmatpush.xpose.msra.mxu0 0.0
        %1445 = vmatpush.xpose.msra.mxu0 0.0
        %1446 = vmatpush.xpose.msra.mxu0 0.0
        %1447 = vmatpush.xpose.msra.mxu0 0.0
        %1448 = vmatpush.xpose.msra.mxu0 0.0
        %1449 = vmatpush.xpose.msra.mxu0 0.0
        %1450 = vmatpush.xpose.msra.mxu0 0.0
        %1451 = vmatpush.xpose.msra.mxu0 0.0
        %1452 = vmatpush.xpose.msra.mxu0 0.0
        %1453 = vmatpush.xpose.msra.mxu0 0.0
        %1454 = vmatpush.xpose.msra.mxu0 0.0
        %1455 = vmatpush.xpose.msra.mxu0 0.0
        %1456 = vmatpush.xpose.msra.mxu0 0.0
        %1457 = vmatpush.xpose.msra.mxu0 0.0
        %1458 = vmatpush.xpose.msra.mxu0 0.0
        %1459 = vmatpush.xpose.msra.mxu0 %v1442
        %1460 = vmatmul.f32.gmra.mxu0 %v1440
        %v1461 = vpop.f32.mrf.mxu0
        %v1462 = vadd.f32 0.0, %v1461
        %1463 = vdwg.mxu0
        %1464 = vrot.lane.b32.xlu0 %v1195, 112
        %v1465 = vpop.permute.xlu0 %1464
        %1466 = vrot.lane.b32.xlu0 %v1101, 80
        %v1467 = vpop.permute.xlu0 %1466
        %v1468 = vsel %vm1113, %v1465, 0
        %v1470 = vsel %vm1113, %v1467, 0
        %1472 = vmatpush.xpose.msra.mxu0 0.0
        %1473 = vmatpush.xpose.msra.mxu0 0.0
        %1474 = vmatpush.xpose.msra.mxu0 0.0
        %1475 = vmatpush.xpose.msra.mxu0 0.0
        %1476 = vmatpush.xpose.msra.mxu0 0.0
        %1477 = vmatpush.xpose.msra.mxu0 0.0
        %1478 = vmatpush.xpose.msra.mxu0 0.0
        %1479 = vmatpush.xpose.msra.mxu0 0.0
        %1480 = vmatpush.xpose.msra.mxu0 0.0
        %1481 = vmatpush.xpose.msra.mxu0 0.0
        %1482 = vmatpush.xpose.msra.mxu0 0.0
        %1483 = vmatpush.xpose.msra.mxu0 0.0
        %1484 = vmatpush.xpose.msra.mxu0 0.0
        %1485 = vmatpush.xpose.msra.mxu0 0.0
        %1486 = vmatpush.xpose.msra.mxu0 0.0
        %1487 = vmatpush.xpose.msra.mxu0 %v1470
        %1488 = vmatmul.f32.gmra.mxu0 %v1468
        %v1489 = vpop.f32.mrf.mxu0
        %v1490 = vadd.f32 0.0, %v1489
        %1491 = vdwg.mxu0
        %v1492 = vmul.f32 %v1406, 0.25
        %v1493 = vmul.f32 %v1434, 0.25
        %v1494 = vmul.f32 %v1462, 0.25
        %v1495 = vmul.f32 %v1490, 0.25
        %v1496 = vadd.f32 %v1492, %v1103
        %v1497 = vadd.f32 %v1493, %v1103
        %v1498 = vadd.f32 %v1494, %v1103
        %v1499 = vadd.f32 %v1495, %v1103
        %v1500 = vsel %vm1230, %v1496, -inf
        %1501 = vmax.xlane.f32.xlu0 %v1500
        %v1502 = vpop.xlane.xlu0 %1501
        %v1503 = vsel %vm1230, %v1497, -inf
        %1504 = vmax.xlane.f32.xlu0 %v1503
        %v1505 = vpop.xlane.xlu0 %1504
        %v1506 = vsel %vm1230, %v1498, -inf
        %1507 = vmax.xlane.f32.xlu0 %v1506
        %v1508 = vpop.xlane.xlu0 %1507
        %v1509 = vsel %vm1230, %v1499, -inf
        %1510 = vmax.xlane.f32.xlu0 %v1509
        %v1511 = vpop.xlane.xlu0 %1510
        %v1512 = vsub.f32 %v1496, %v1502
        %v1513 = vsub.f32 %v1497, %v1505
        %v1514 = vsub.f32 %v1498, %v1508
        %v1515 = vsub.f32 %v1499, %v1511
        %v1516 = vmul.f32 %v1512, 1.442695
        %v1517 = vpow.pop %v1516
        %v1518 = vmul.f32 %v1513, 1.442695
        %v1519 = vpow.pop %v1518
        %v1520 = vmul.f32 %v1514, 1.442695
        %v1521 = vpow.pop %v1520
        %v1522 = vmul.f32 %v1515, 1.442695
        %v1523 = vpow.pop %v1522
        %v1524 = vsel %vm1230, %v1517, 0.0
        %1525 = vadd.xlane.f32.xlu0 %v1524
        %v1526 = vpop.xlane.xlu0 %1525
        %v1527 = vsel %vm1230, %v1519, 0.0
        %1528 = vadd.xlane.f32.xlu0 %v1527
        %v1529 = vpop.xlane.xlu0 %1528
        %v1530 = vsel %vm1230, %v1521, 0.0
        %1531 = vadd.xlane.f32.xlu0 %v1530
        %v1532 = vpop.xlane.xlu0 %1531
        %v1533 = vsel %vm1230, %v1523, 0.0
        %1534 = vadd.xlane.f32.xlu0 %v1533
        %v1535 = vpop.xlane.xlu0 %1534
        %v1536 = vrcp.pop %v1526
        %v1537 = vrcp.pop %v1529
        %v1538 = vrcp.pop %v1532
        %v1539 = vrcp.pop %v1535
        %v1540 = vmul.f32 %v1517, %v1536
        %v1541 = vmul.f32 %v1519, %v1537
        %v1542 = vmul.f32 %v1521, %v1538
        %v1543 = vmul.f32 %v1523, %v1539
        %1544 = vrot.lane.b32.xlu0 %v1092, 48
        %v1545 = vpop.permute.xlu0 %1544
        %v1548 = vsel %vm1278, %v1540, 0
        %1550 = vmatpush.msra.mxu0 0.0
        %1551 = vmatpush.msra.mxu0 0.0
        %1552 = vmatpush.msra.mxu0 0.0
        %1553 = vmatpush.msra.mxu0 0.0
        %1554 = vmatpush.msra.mxu0 0.0
        %1555 = vmatpush.msra.mxu0 0.0
        %1556 = vmatpush.msra.mxu0 0.0
        %1557 = vmatpush.msra.mxu0 0.0
        %1558 = vmatpush.msra.mxu0 0.0
        %1559 = vmatpush.msra.mxu0 0.0
        %1560 = vmatpush.msra.mxu0 0.0
        %1561 = vmatpush.msra.mxu0 0.0
        %1562 = vmatpush.msra.mxu0 0.0
        %1563 = vmatpush.msra.mxu0 0.0
        %1564 = vmatpush.msra.mxu0 0.0
        %1565 = vmatpush.msra.mxu0 %v1545
        %1566 = vmatmul.f32.gmra.mxu0 %v1548
        %v1567 = vpop.f32.mrf.mxu0
        %v1568 = vadd.f32 0.0, %v1567
        %1569 = vdwg.mxu0
        %1570 = vrot.lane.b32.xlu0 %v1095, 48
        %v1571 = vpop.permute.xlu0 %1570
        %v1574 = vsel %vm1278, %v1541, 0
        %1576 = vmatpush.msra.mxu0 0.0
        %1577 = vmatpush.msra.mxu0 0.0
        %1578 = vmatpush.msra.mxu0 0.0
        %1579 = vmatpush.msra.mxu0 0.0
        %1580 = vmatpush.msra.mxu0 0.0
        %1581 = vmatpush.msra.mxu0 0.0
        %1582 = vmatpush.msra.mxu0 0.0
        %1583 = vmatpush.msra.mxu0 0.0
        %1584 = vmatpush.msra.mxu0 0.0
        %1585 = vmatpush.msra.mxu0 0.0
        %1586 = vmatpush.msra.mxu0 0.0
        %1587 = vmatpush.msra.mxu0 0.0
        %1588 = vmatpush.msra.mxu0 0.0
        %1589 = vmatpush.msra.mxu0 0.0
        %1590 = vmatpush.msra.mxu0 0.0
        %1591 = vmatpush.msra.mxu0 %v1571
        %1592 = vmatmul.f32.gmra.mxu0 %v1574
        %v1593 = vpop.f32.mrf.mxu0
        %v1594 = vadd.f32 0.0, %v1593
        %1595 = vdwg.mxu0
        %1596 = vrot.lane.b32.xlu0 %v1098, 48
        %v1597 = vpop.permute.xlu0 %1596
        %v1600 = vsel %vm1278, %v1542, 0
        %1602 = vmatpush.msra.mxu0 0.0
        %1603 = vmatpush.msra.mxu0 0.0
        %1604 = vmatpush.msra.mxu0 0.0
        %1605 = vmatpush.msra.mxu0 0.0
        %1606 = vmatpush.msra.mxu0 0.0
        %1607 = vmatpush.msra.mxu0 0.0
        %1608 = vmatpush.msra.mxu0 0.0
        %1609 = vmatpush.msra.mxu0 0.0
        %1610 = vmatpush.msra.mxu0 0.0
        %1611 = vmatpush.msra.mxu0 0.0
        %1612 = vmatpush.msra.mxu0 0.0
        %1613 = vmatpush.msra.mxu0 0.0
        %1614 = vmatpush.msra.mxu0 0.0
        %1615 = vmatpush.msra.mxu0 0.0
        %1616 = vmatpush.msra.mxu0 0.0
        %1617 = vmatpush.msra.mxu0 %v1597
        %1618 = vmatmul.f32.gmra.mxu0 %v1600
        %v1619 = vpop.f32.mrf.mxu0
        %v1620 = vadd.f32 0.0, %v1619
        %1621 = vdwg.mxu0
        %1622 = vrot.lane.b32.xlu0 %v1101, 48
        %v1623 = vpop.permute.xlu0 %1622
        %v1626 = vsel %vm1278, %v1543, 0
        %1628 = vmatpush.msra.mxu0 0.0
        %1629 = vmatpush.msra.mxu0 0.0
        %1630 = vmatpush.msra.mxu0 0.0
        %1631 = vmatpush.msra.mxu0 0.0
        %1632 = vmatpush.msra.mxu0 0.0
        %1633 = vmatpush.msra.mxu0 0.0
        %1634 = vmatpush.msra.mxu0 0.0
        %1635 = vmatpush.msra.mxu0 0.0
        %1636 = vmatpush.msra.mxu0 0.0
        %1637 = vmatpush.msra.mxu0 0.0
        %1638 = vmatpush.msra.mxu0 0.0
        %1639 = vmatpush.msra.mxu0 0.0
        %1640 = vmatpush.msra.mxu0 0.0
        %1641 = vmatpush.msra.mxu0 0.0
        %1642 = vmatpush.msra.mxu0 0.0
        %1643 = vmatpush.msra.mxu0 %v1623
        %1644 = vmatmul.f32.gmra.mxu0 %v1626
        %v1645 = vpop.f32.mrf.mxu0
        %v1646 = vadd.f32 0.0, %v1645
        %1647 = vdwg.mxu0
        %v1652 = vrot.slane %v1594, 7
        %vm1653 = vcmask 1041409
        %v1654 = vsel %vm1653, %v1652, %v1568
        %v1655 = vrot.slane %v1620, 6
        %vm1656 = vcmask 1042434
        %v1657 = vsel %vm1656, %v1655, %v1654
        %v1658 = vrot.slane %v1646, 5
        %vm1659 = vcmask 1043459
        %v1660 = vsel %vm1659, %v1658, %v1657
        %v1661 = vsel %vm1113, %v1660, 0
        %1663 = vmatpush.msra.mxu0 0.0
        %1664 = vmatpush.msra.mxu0 0.0
        %1665 = vmatpush.msra.mxu0 0.0
        %1666 = vmatpush.msra.mxu0 0.0
        %1667 = vmatpush.msra.mxu0 0.0
        %1668 = vmatpush.msra.mxu0 0.0
        %1669 = vmatpush.msra.mxu0 0.0
        %1670 = vmatpush.msra.mxu0 0.0
        %1671 = vmatpush.msra.mxu0 0.0
        %1672 = vmatpush.msra.mxu0 0.0
        %1673 = vmatpush.msra.mxu0 0.0
        %1674 = vmatpush.msra.mxu0 0.0
        %1675 = vmatpush.msra.mxu0 0.0
        %1676 = vmatpush.msra.mxu0 0.0
        %1677 = vmatpush.msra.mxu0 %v1107
        %1678 = vmatpush.msra.mxu0 %v1106
        %1679 = vmatmul.f32.gmra.mxu0 %v1661
        %v1680 = vpop.f32.mrf.mxu0
        %v1681 = vadd.f32 0.0, %v1680
        %1682 = vdwg.mxu0
        %v1687 = vrot.slane %v1326, 7
        %v1688 = vsel %vm1653, %v1687, %v1300
        %v1689 = vrot.slane %v1352, 6
        %v1690 = vsel %vm1656, %v1689, %v1688
        %v1691 = vrot.slane %v1378, 5
        %v1692 = vsel %vm1659, %v1691, %v1690
        %v1693 = vsel %vm1113, %v1692, 0
        %1695 = vmatpush.msra.mxu0 0.0
        %1696 = vmatpush.msra.mxu0 0.0
        %1697 = vmatpush.msra.mxu0 0.0
        %1698 = vmatpush.msra.mxu0 0.0
        %1699 = vmatpush.msra.mxu0 0.0
        %1700 = vmatpush.msra.mxu0 0.0
        %1701 = vmatpush.msra.mxu0 0.0
        %1702 = vmatpush.msra.mxu0 0.0
        %1703 = vmatpush.msra.mxu0 0.0
        %1704 = vmatpush.msra.mxu0 0.0
        %1705 = vmatpush.msra.mxu0 0.0
        %1706 = vmatpush.msra.mxu0 0.0
        %1707 = vmatpush.msra.mxu0 0.0
        %1708 = vmatpush.msra.mxu0 0.0
        %1709 = vmatpush.msra.mxu0 %v1105
        %1710 = vmatpush.msra.mxu0 %v1104
        %1711 = vmatmul.f32.gmra.mxu0 %v1693
        %v1712 = vpop.f32.mrf.mxu0
        %v1713 = vadd.f32 %v1681, %v1712
        %1714 = vdwg.mxu0
        %v1716 = vperm.slane %v1108, 0
        %v1718 = vadd.f32 %v1713, %v1716
        %v1720 = vrot.slane %v1718, 1
        %v1721 = vrot.slane %v1718, 2
        %v1722 = vrot.slane %v1718, 3
        %v1723 = vrot.slane %v1718, 4
        %v1728 = vadd.f32 %v851, %v1720
        %v1729 = vadd.f32 %v852, %v1721
        %v1730 = vadd.f32 %v853, %v1722
        %v1731 = vadd.f32 %v854, %v1723
        %v1732 = vld [vmem:[%s10] sm:$0x1]
        %v1733 = vld [vmem:[%s11] sm:$0x1]
        %v1738 = vrot.slane %v1729, 7
        %v1739 = vrot.slane %v1730, 6
        %v1740 = vsel %vm1653, %v1739, %v1738
        %v1741 = vrot.slane %v1731, 5
        %v1742 = vsel %vm1656, %v1741, %v1740
        %vm1745 = vcmask 261127
        %v1746 = vsel %vm1745, %v1728, 0.0
        %1747 = vadd.xlane.f32.xlu0 %v1746
        %v1748 = vpop.xlane.xlu0 %1747
        %vm1749 = vcmask 256000
        %v1750 = vsel %vm1749, %v1742, 0.0
        %1751 = vadd.xlane.f32.xlu0 %v1750
        %v1752 = vpop.xlane.xlu0 %1751
        %v1753 = vmul.f32 %v1728, %v1728
        %v1754 = vmul.f32 %v1729, %v1729
        %v1755 = vmul.f32 %v1730, %v1730
        %v1756 = vmul.f32 %v1731, %v1731
        %v1761 = vrot.slane %v1754, 7
        %v1762 = vrot.slane %v1755, 6
        %v1763 = vsel %vm1653, %v1762, %v1761
        %v1764 = vrot.slane %v1756, 5
        %v1765 = vsel %vm1656, %v1764, %v1763
        %v1768 = vsel %vm1745, %v1753, 0.0
        %1769 = vadd.xlane.f32.xlu0 %v1768
        %v1770 = vpop.xlane.xlu0 %1769
        %v1771 = vsel %vm1749, %v1765, 0.0
        %1772 = vadd.xlane.f32.xlu0 %v1771
        %v1773 = vpop.xlane.xlu0 %1772
        %v1774 = vmul.f32 %v1748, %v896
        %v1775 = vmul.f32 %v1752, %v896
        %v1776 = vmul.f32 %v1748, %v1774
        %v1777 = vmul.f32 %v1752, %v1775
        %v1778 = vsub.f32 %v1770, %v1776
        %v1779 = vsub.f32 %v1773, %v1777
        %v1780 = vmul.f32 %v1778, %v915
        %v1781 = vmul.f32 %v1779, %v915
        %v1782 = vmax.f32 %v1780, 0.0
        %v1783 = vmax.f32 %v1781, 0.0
        %v1786 = vrot.slane %v1775, 1
        %v1787 = vrot.slane %v1775, 2
        %v1788 = vrot.slane %v1775, 3
        %v1793 = vsub.f32 %v1728, %v1774
        %v1794 = vsub.f32 %v1729, %v1786
        %v1795 = vsub.f32 %v1730, %v1787
        %v1796 = vsub.f32 %v1731, %v1788
        %v1797 = vrsqrt.pop %v1782
        %v1798 = vmul.f32 %v1797, %v1782
        %v1799 = vmul.f32 %v1798, %v1797
        %v1800 = vmul.f32 0.5, %v1799
        %v1801 = vsub.f32 1.5, %v1800
        %v1802 = vmul.f32 %v1797, %v1801
        %v1803 = vmul.f32 %v1782, %v1802
        %vm1804 = vcmp.eq.f32.partialorder %v1782, inf
        %v1805 = vsel %vm1804, %v1782, %v1803
        %vm1806 = vcmp.eq.f32.partialorder %v1782, 0.0
        %v1807 = vand.u32 %v1782, 2147483648
        %v1808 = vsel %vm1806, %v1807, %v1805
        %v1809 = vrsqrt.pop %v1783
        %v1810 = vmul.f32 %v1809, %v1783
        %v1811 = vmul.f32 %v1810, %v1809
        %v1812 = vmul.f32 0.5, %v1811
        %v1813 = vsub.f32 1.5, %v1812
        %v1814 = vmul.f32 %v1809, %v1813
        %v1815 = vmul.f32 %v1783, %v1814
        %vm1816 = vcmp.eq.f32.partialorder %v1783, inf
        %v1817 = vsel %vm1816, %v1783, %v1815
        %vm1818 = vcmp.eq.f32.partialorder %v1783, 0.0
        %v1819 = vand.u32 %v1783, 2147483648
        %v1820 = vsel %vm1818, %v1819, %v1817
        %v1821 = vadd.f32 %v1808, 1e-06
        %v1822 = vadd.f32 %v1820, 1e-06
        %v1824 = vperm.slane %v1732, 0
        %v1826 = vrcp.pop %v1821
        %v1827 = vmul.f32 %v1821, %v1826
        %v1828 = vsub.f32 1.0, %v1827
        %v1829 = vmul.f32 %v1826, %v1828
        %v1830 = vadd.f32 %v1826, %v1829
        %vm1831 = vweird.f32 %v1821
        %vm1832 = vweird.f32 %v1826
        %vm1833 = vmor %vm1831, %vm1832
        %v1834 = vsel %vm1833, %v1826, %v1830
        %v1835 = vand.u32 2147483647, %v1821
        %vm1836 = vcmp.eq.f32.partialorder %v1835, 8.507059e+37
        %v1837 = vand.u32 %v1821, 2147483648
        %v1838 = vor.u32 1.1754944e-38, %v1837
        %v1839 = vsel %vm1836, %v1838, %v1834
        %v1840 = vmul.f32 %v1824, %v1839
        %v1841 = vrcp.pop %v1822
        %v1842 = vmul.f32 %v1822, %v1841
        %v1843 = vsub.f32 1.0, %v1842
        %v1844 = vmul.f32 %v1841, %v1843
        %v1845 = vadd.f32 %v1841, %v1844
        %vm1846 = vweird.f32 %v1822
        %vm1847 = vweird.f32 %v1841
        %vm1848 = vmor %vm1846, %vm1847
        %v1849 = vsel %vm1848, %v1841, %v1845
        %v1850 = vand.u32 2147483647, %v1822
        %vm1851 = vcmp.eq.f32.partialorder %v1850, 8.507059e+37
        %v1852 = vand.u32 %v1822, 2147483648
        %v1853 = vor.u32 1.1754944e-38, %v1852
        %v1854 = vsel %vm1851, %v1853, %v1849
        %v1855 = vmul.f32 %v1824, %v1854
        %v1858 = vrot.slane %v1855, 1
        %v1859 = vrot.slane %v1855, 2
        %v1860 = vrot.slane %v1855, 3
        %v1865 = vmul.f32 %v1793, %v1840
        %v1866 = vmul.f32 %v1794, %v1858
        %v1867 = vmul.f32 %v1795, %v1859
        %v1868 = vmul.f32 %v1796, %v1860
        %v1870 = vperm.slane %v1733, 0
        %v1872 = vadd.f32 %v1865, %v1870
        %v1873 = vadd.f32 %v1866, %v1870
        %v1874 = vadd.f32 %v1867, %v1870
        %v1875 = vadd.f32 %v1868, %v1870
        %v1876 = vld [vmem:[%s12] sm:$0xff]
        %v1877 = vld [vmem:[%s12 + $0x8] sm:$0xff]
        %v1878 = vld [vmem:[%s12 + $0x10] sm:$0xff]
        %v1879 = vld [vmem:[%s12 + $0x18] sm:$0xff]
        %v1880 = vld [vmem:[%s13] sm:$0x1]
        %v1882 = vperm.slane %v1880, 0
        %v1888 = vrot.slane %v1872, 7
        %v1889 = vrot.slane %v1873, 6
        %v1890 = vsel %vm1653, %v1889, %v1888
        %v1891 = vrot.slane %v1874, 5
        %v1892 = vsel %vm1656, %v1891, %v1890
        %v1893 = vrot.slane %v1875, 4
        %v1894 = vsel %vm1659, %v1893, %v1892
        %v1895 = vsel %vm861, %v1894, 0
        %1897 = vmatpush.msra.mxu0 0.0
        %1898 = vmatpush.msra.mxu0 0.0
        %1899 = vmatpush.msra.mxu0 0.0
        %1900 = vmatpush.msra.mxu0 0.0
        %1901 = vmatpush.msra.mxu0 0.0
        %1902 = vmatpush.msra.mxu0 0.0
        %1903 = vmatpush.msra.mxu0 0.0
        %1904 = vmatpush.msra.mxu0 0.0
        %1905 = vmatpush.msra.mxu0 0.0
        %1906 = vmatpush.msra.mxu0 0.0
        %1907 = vmatpush.msra.mxu0 0.0
        %1908 = vmatpush.msra.mxu0 0.0
        %1909 = vmatpush.msra.mxu0 %v1879
        %1910 = vmatpush.msra.mxu0 %v1878
        %1911 = vmatpush.msra.mxu0 %v1877
        %1912 = vmatpush.msra.mxu0 %v1876
        %1913 = vmatmul.f32.gmra.mxu0 %v1895
        %v1914 = vpop.f32.mrf.mxu0
        %v1915 = vadd.f32 %v1882, %v1914
        %1916 = vdwg.mxu0
        %v1917 = vld [vmem:[%s14] sm:$0xff]
        %v1918 = vld [vmem:[%s14 + $0x8] sm:$0xff]
        %v1919 = vld [vmem:[%s14 + $0x10] sm:$0xff]
        %v1920 = vld [vmem:[%s14 + $0x18] sm:$0xff]
        %v1921 = vld [vmem:[%s15] sm:$0x1]
        %v1923 = vperm.slane %v1921, 0
        %v1926 = vsel %vm861, %v855, 0
        %v1929 = vsel %vm861, %v856, 0
        %v1932 = vsel %vm861, %v857, 0
        %v1935 = vsel %vm861, %v858, 0
        %1937 = vmatpush.msra.mxu0 0.0
        %1938 = vmatpush.msra.mxu0 0.0
        %1939 = vmatpush.msra.mxu0 0.0
        %1940 = vmatpush.msra.mxu0 0.0
        %1941 = vmatpush.msra.mxu0 0.0
        %1942 = vmatpush.msra.mxu0 0.0
        %1943 = vmatpush.msra.mxu0 0.0
        %1944 = vmatpush.msra.mxu0 0.0
        %1945 = vmatpush.msra.mxu0 0.0
        %1946 = vmatpush.msra.mxu0 0.0
        %1947 = vmatpush.msra.mxu0 0.0
        %1948 = vmatpush.msra.mxu0 0.0
        %1949 = vmatpush.msra.mxu0 %v1920
        %1950 = vmatpush.msra.mxu0 %v1919
        %1951 = vmatpush.msra.mxu0 %v1918
        %1952 = vmatpush.msra.mxu0 %v1917
        %1953 = vmatmul.f32.gmra.mxu0 %v1926
        %v1954 = vpop.f32.mrf.mxu0
        %v1955 = vadd.f32 %v1923, %v1954
        %1956 = vmatmul.f32.gmra.mxu0 %v1929
        %v1957 = vpop.f32.mrf.mxu0
        %v1958 = vadd.f32 %v1923, %v1957
        %1959 = vmatmul.f32.gmra.mxu0 %v1932
        %v1960 = vpop.f32.mrf.mxu0
        %v1961 = vadd.f32 %v1923, %v1960
        %1962 = vmatmul.f32.gmra.mxu0 %v1935
        %v1963 = vpop.f32.mrf.mxu0
        %v1964 = vadd.f32 %v1923, %v1963
        %1965 = vdwg.mxu0
        %v1966 = vld [vmem:[%s3] sm:$0x1]
        %v1967 = vld [vmem:[%s16] sm:$0xff]
        %v1968 = vld [vmem:[%s16 + $0x8] sm:$0xff]
        %v1969 = vld [vmem:[%s16 + $0x10] sm:$0xff]
        %v1970 = vld [vmem:[%s16 + $0x18] sm:$0xff]
        %v1971 = vld [vmem:[#allocation2] sm:$0x1]
        %v1973 = vrot.slane %v1915, 1
        %v1974 = vrot.slane %v1915, 2
        %v1975 = vrot.slane %v1915, 3
        %v1976 = vsel %vm1113, %v1915, 0
        %v1979 = vsel %vm1113, %v1955, 0
        %1981 = vmatpush.xpose.msra.mxu0 0.0
        %1982 = vmatpush.xpose.msra.mxu0 0.0
        %1983 = vmatpush.xpose.msra.mxu0 0.0
        %1984 = vmatpush.xpose.msra.mxu0 0.0
        %1985 = vmatpush.xpose.msra.mxu0 0.0
        %1986 = vmatpush.xpose.msra.mxu0 0.0
        %1987 = vmatpush.xpose.msra.mxu0 0.0
        %1988 = vmatpush.xpose.msra.mxu0 0.0
        %1989 = vmatpush.xpose.msra.mxu0 0.0
        %1990 = vmatpush.xpose.msra.mxu0 0.0
        %1991 = vmatpush.xpose.msra.mxu0 0.0
        %1992 = vmatpush.xpose.msra.mxu0 0.0
        %1993 = vmatpush.xpose.msra.mxu0 0.0
        %1994 = vmatpush.xpose.msra.mxu0 0.0
        %1995 = vmatpush.xpose.msra.mxu0 0.0
        %1996 = vmatpush.xpose.msra.mxu0 %v1979
        %1997 = vmatmul.f32.gmra.mxu0 %v1976
        %v1998 = vpop.f32.mrf.mxu0
        %v1999 = vadd.f32 0.0, %v1998
        %2000 = vdwg.mxu0
        %v2001 = vsel %vm1113, %v1973, 0
        %v2004 = vsel %vm1113, %v1958, 0
        %2006 = vmatpush.xpose.msra.mxu0 0.0
        %2007 = vmatpush.xpose.msra.mxu0 0.0
        %2008 = vmatpush.xpose.msra.mxu0 0.0
        %2009 = vmatpush.xpose.msra.mxu0 0.0
        %2010 = vmatpush.xpose.msra.mxu0 0.0
        %2011 = vmatpush.xpose.msra.mxu0 0.0
        %2012 = vmatpush.xpose.msra.mxu0 0.0
        %2013 = vmatpush.xpose.msra.mxu0 0.0
        %2014 = vmatpush.xpose.msra.mxu0 0.0
        %2015 = vmatpush.xpose.msra.mxu0 0.0
        %2016 = vmatpush.xpose.msra.mxu0 0.0
        %2017 = vmatpush.xpose.msra.mxu0 0.0
        %2018 = vmatpush.xpose.msra.mxu0 0.0
        %2019 = vmatpush.xpose.msra.mxu0 0.0
        %2020 = vmatpush.xpose.msra.mxu0 0.0
        %2021 = vmatpush.xpose.msra.mxu0 %v2004
        %2022 = vmatmul.f32.gmra.mxu0 %v2001
        %v2023 = vpop.f32.mrf.mxu0
        %v2024 = vadd.f32 0.0, %v2023
        %2025 = vdwg.mxu0
        %v2026 = vsel %vm1113, %v1974, 0
        %v2029 = vsel %vm1113, %v1961, 0
        %2031 = vmatpush.xpose.msra.mxu0 0.0
        %2032 = vmatpush.xpose.msra.mxu0 0.0
        %2033 = vmatpush.xpose.msra.mxu0 0.0
        %2034 = vmatpush.xpose.msra.mxu0 0.0
        %2035 = vmatpush.xpose.msra.mxu0 0.0
        %2036 = vmatpush.xpose.msra.mxu0 0.0
        %2037 = vmatpush.xpose.msra.mxu0 0.0
        %2038 = vmatpush.xpose.msra.mxu0 0.0
        %2039 = vmatpush.xpose.msra.mxu0 0.0
        %2040 = vmatpush.xpose.msra.mxu0 0.0
        %2041 = vmatpush.xpose.msra.mxu0 0.0
        %2042 = vmatpush.xpose.msra.mxu0 0.0
        %2043 = vmatpush.xpose.msra.mxu0 0.0
        %2044 = vmatpush.xpose.msra.mxu0 0.0
        %2045 = vmatpush.xpose.msra.mxu0 0.0
        %2046 = vmatpush.xpose.msra.mxu0 %v2029
        %2047 = vmatmul.f32.gmra.mxu0 %v2026
        %v2048 = vpop.f32.mrf.mxu0
        %v2049 = vadd.f32 0.0, %v2048
        %2050 = vdwg.mxu0
        %v2051 = vsel %vm1113, %v1975, 0
        %v2054 = vsel %vm1113, %v1964, 0
        %2056 = vmatpush.xpose.msra.mxu0 0.0
        %2057 = vmatpush.xpose.msra.mxu0 0.0
        %2058 = vmatpush.xpose.msra.mxu0 0.0
        %2059 = vmatpush.xpose.msra.mxu0 0.0
        %2060 = vmatpush.xpose.msra.mxu0 0.0
        %2061 = vmatpush.xpose.msra.mxu0 0.0
        %2062 = vmatpush.xpose.msra.mxu0 0.0
        %2063 = vmatpush.xpose.msra.mxu0 0.0
        %2064 = vmatpush.xpose.msra.mxu0 0.0
        %2065 = vmatpush.xpose.msra.mxu0 0.0
        %2066 = vmatpush.xpose.msra.mxu0 0.0
        %2067 = vmatpush.xpose.msra.mxu0 0.0
        %2068 = vmatpush.xpose.msra.mxu0 0.0
        %2069 = vmatpush.xpose.msra.mxu0 0.0
        %2070 = vmatpush.xpose.msra.mxu0 0.0
        %2071 = vmatpush.xpose.msra.mxu0 %v2054
        %2072 = vmatmul.f32.gmra.mxu0 %v2051
        %v2073 = vpop.f32.mrf.mxu0
        %v2074 = vadd.f32 0.0, %v2073
        %2075 = vdwg.mxu0
        %v2076 = vmul.f32 %v1999, 0.25
        %v2077 = vmul.f32 %v2024, 0.25
        %v2078 = vmul.f32 %v2049, 0.25
        %v2079 = vmul.f32 %v2074, 0.25
        %v2080 = vadd.f32 %v2076, %v1966
        %v2081 = vadd.f32 %v2077, %v1966
        %v2082 = vadd.f32 %v2078, %v1966
        %v2083 = vadd.f32 %v2079, %v1966
        %v2084 = vsel %vm1230, %v2080, -inf
        %2085 = vmax.xlane.f32.xlu0 %v2084
        %v2086 = vpop.xlane.xlu0 %2085
        %v2087 = vsel %vm1230, %v2081, -inf
        %2088 = vmax.xlane.f32.xlu0 %v2087
        %v2089 = vpop.xlane.xlu0 %2088
        %v2090 = vsel %vm1230, %v2082, -inf
        %2091 = vmax.xlane.f32.xlu0 %v2090
        %v2092 = vpop.xlane.xlu0 %2091
        %v2093 = vsel %vm1230, %v2083, -inf
        %2094 = vmax.xlane.f32.xlu0 %v2093
        %v2095 = vpop.xlane.xlu0 %2094
        %v2096 = vsub.f32 %v2080, %v2086
        %v2097 = vsub.f32 %v2081, %v2089
        %v2098 = vsub.f32 %v2082, %v2092
        %v2099 = vsub.f32 %v2083, %v2095
        %v2100 = vmul.f32 %v2096, 1.442695
        %v2101 = vpow.pop %v2100
        %v2102 = vmul.f32 %v2097, 1.442695
        %v2103 = vpow.pop %v2102
        %v2104 = vmul.f32 %v2098, 1.442695
        %v2105 = vpow.pop %v2104
        %v2106 = vmul.f32 %v2099, 1.442695
        %v2107 = vpow.pop %v2106
        %v2108 = vsel %vm1230, %v2101, 0.0
        %2109 = vadd.xlane.f32.xlu0 %v2108
        %v2110 = vpop.xlane.xlu0 %2109
        %v2111 = vsel %vm1230, %v2103, 0.0
        %2112 = vadd.xlane.f32.xlu0 %v2111
        %v2113 = vpop.xlane.xlu0 %2112
        %v2114 = vsel %vm1230, %v2105, 0.0
        %2115 = vadd.xlane.f32.xlu0 %v2114
        %v2116 = vpop.xlane.xlu0 %2115
        %v2117 = vsel %vm1230, %v2107, 0.0
        %2118 = vadd.xlane.f32.xlu0 %v2117
        %v2119 = vpop.xlane.xlu0 %2118
        %v2120 = vrcp.pop %v2110
        %v2121 = vrcp.pop %v2113
        %v2122 = vrcp.pop %v2116
        %v2123 = vrcp.pop %v2119
        %v2124 = vmul.f32 %v2101, %v2120
        %v2125 = vmul.f32 %v2103, %v2121
        %v2126 = vmul.f32 %v2105, %v2122
        %v2127 = vmul.f32 %v2107, %v2123
        %2128 = vrot.lane.b32.xlu0 %v1955, 96
        %v2129 = vpop.permute.xlu0 %2128
        %v2132 = vsel %vm1278, %v2124, 0
        %2134 = vmatpush.msra.mxu0 0.0
        %2135 = vmatpush.msra.mxu0 0.0
        %2136 = vmatpush.msra.mxu0 0.0
        %2137 = vmatpush.msra.mxu0 0.0
        %2138 = vmatpush.msra.mxu0 0.0
        %2139 = vmatpush.msra.mxu0 0.0
        %2140 = vmatpush.msra.mxu0 0.0
        %2141 = vmatpush.msra.mxu0 0.0
        %2142 = vmatpush.msra.mxu0 0.0
        %2143 = vmatpush.msra.mxu0 0.0
        %2144 = vmatpush.msra.mxu0 0.0
        %2145 = vmatpush.msra.mxu0 0.0
        %2146 = vmatpush.msra.mxu0 0.0
        %2147 = vmatpush.msra.mxu0 0.0
        %2148 = vmatpush.msra.mxu0 0.0
        %2149 = vmatpush.msra.mxu0 %v2129
        %2150 = vmatmul.f32.gmra.mxu0 %v2132
        %v2151 = vpop.f32.mrf.mxu0
        %v2152 = vadd.f32 0.0, %v2151
        %2153 = vdwg.mxu0
        %2154 = vrot.lane.b32.xlu0 %v1958, 96
        %v2155 = vpop.permute.xlu0 %2154
        %v2158 = vsel %vm1278, %v2125, 0
        %2160 = vmatpush.msra.mxu0 0.0
        %2161 = vmatpush.msra.mxu0 0.0
        %2162 = vmatpush.msra.mxu0 0.0
        %2163 = vmatpush.msra.mxu0 0.0
        %2164 = vmatpush.msra.mxu0 0.0
        %2165 = vmatpush.msra.mxu0 0.0
        %2166 = vmatpush.msra.mxu0 0.0
        %2167 = vmatpush.msra.mxu0 0.0
        %2168 = vmatpush.msra.mxu0 0.0
        %2169 = vmatpush.msra.mxu0 0.0
        %2170 = vmatpush.msra.mxu0 0.0
        %2171 = vmatpush.msra.mxu0 0.0
        %2172 = vmatpush.msra.mxu0 0.0
        %2173 = vmatpush.msra.mxu0 0.0
        %2174 = vmatpush.msra.mxu0 0.0
        %2175 = vmatpush.msra.mxu0 %v2155
        %2176 = vmatmul.f32.gmra.mxu0 %v2158
        %v2177 = vpop.f32.mrf.mxu0
        %v2178 = vadd.f32 0.0, %v2177
        %2179 = vdwg.mxu0
        %2180 = vrot.lane.b32.xlu0 %v1961, 96
        %v2181 = vpop.permute.xlu0 %2180
        %v2184 = vsel %vm1278, %v2126, 0
        %2186 = vmatpush.msra.mxu0 0.0
        %2187 = vmatpush.msra.mxu0 0.0
        %2188 = vmatpush.msra.mxu0 0.0
        %2189 = vmatpush.msra.mxu0 0.0
        %2190 = vmatpush.msra.mxu0 0.0
        %2191 = vmatpush.msra.mxu0 0.0
        %2192 = vmatpush.msra.mxu0 0.0
        %2193 = vmatpush.msra.mxu0 0.0
        %2194 = vmatpush.msra.mxu0 0.0
        %2195 = vmatpush.msra.mxu0 0.0
        %2196 = vmatpush.msra.mxu0 0.0
        %2197 = vmatpush.msra.mxu0 0.0
        %2198 = vmatpush.msra.mxu0 0.0
        %2199 = vmatpush.msra.mxu0 0.0
        %2200 = vmatpush.msra.mxu0 0.0
        %2201 = vmatpush.msra.mxu0 %v2181
        %2202 = vmatmul.f32.gmra.mxu0 %v2184
        %v2203 = vpop.f32.mrf.mxu0
        %v2204 = vadd.f32 0.0, %v2203
        %2205 = vdwg.mxu0
        %2206 = vrot.lane.b32.xlu0 %v1964, 96
        %v2207 = vpop.permute.xlu0 %2206
        %v2210 = vsel %vm1278, %v2127, 0
        %2212 = vmatpush.msra.mxu0 0.0
        %2213 = vmatpush.msra.mxu0 0.0
        %2214 = vmatpush.msra.mxu0 0.0
        %2215 = vmatpush.msra.mxu0 0.0
        %2216 = vmatpush.msra.mxu0 0.0
        %2217 = vmatpush.msra.mxu0 0.0
        %2218 = vmatpush.msra.mxu0 0.0
        %2219 = vmatpush.msra.mxu0 0.0
        %2220 = vmatpush.msra.mxu0 0.0
        %2221 = vmatpush.msra.mxu0 0.0
        %2222 = vmatpush.msra.mxu0 0.0
        %2223 = vmatpush.msra.mxu0 0.0
        %2224 = vmatpush.msra.mxu0 0.0
        %2225 = vmatpush.msra.mxu0 0.0
        %2226 = vmatpush.msra.mxu0 0.0
        %2227 = vmatpush.msra.mxu0 %v2207
        %2228 = vmatmul.f32.gmra.mxu0 %v2210
        %v2229 = vpop.f32.mrf.mxu0
        %v2230 = vadd.f32 0.0, %v2229
        %2231 = vdwg.mxu0
        %v2232 = vperm.slane %v1915, 0
        %2233 = vrot.lane.b32.xlu0 %v2232, 112
        %v2234 = vpop.permute.xlu0 %2233
        %2235 = vrot.lane.b32.xlu0 %v1955, 112
        %v2236 = vpop.permute.xlu0 %2235
        %v2237 = vsel %vm1113, %v2234, 0
        %v2239 = vsel %vm1113, %v2236, 0
        %2241 = vmatpush.xpose.msra.mxu0 0.0
        %2242 = vmatpush.xpose.msra.mxu0 0.0
        %2243 = vmatpush.xpose.msra.mxu0 0.0
        %2244 = vmatpush.xpose.msra.mxu0 0.0
        %2245 = vmatpush.xpose.msra.mxu0 0.0
        %2246 = vmatpush.xpose.msra.mxu0 0.0
        %2247 = vmatpush.xpose.msra.mxu0 0.0
        %2248 = vmatpush.xpose.msra.mxu0 0.0
        %2249 = vmatpush.xpose.msra.mxu0 0.0
        %2250 = vmatpush.xpose.msra.mxu0 0.0
        %2251 = vmatpush.xpose.msra.mxu0 0.0
        %2252 = vmatpush.xpose.msra.mxu0 0.0
        %2253 = vmatpush.xpose.msra.mxu0 0.0
        %2254 = vmatpush.xpose.msra.mxu0 0.0
        %2255 = vmatpush.xpose.msra.mxu0 0.0
        %2256 = vmatpush.xpose.msra.mxu0 %v2239
        %2257 = vmatmul.f32.gmra.mxu0 %v2237
        %v2258 = vpop.f32.mrf.mxu0
        %v2259 = vadd.f32 0.0, %v2258
        %2260 = vdwg.mxu0
        %v2261 = vperm.slane %v1973, 0
        %2262 = vrot.lane.b32.xlu0 %v2261, 112
        %v2263 = vpop.permute.xlu0 %2262
        %2264 = vrot.lane.b32.xlu0 %v1958, 112
        %v2265 = vpop.permute.xlu0 %2264
        %v2266 = vsel %vm1113, %v2263, 0
        %v2268 = vsel %vm1113, %v2265, 0
        %2270 = vmatpush.xpose.msra.mxu0 0.0
        %2271 = vmatpush.xpose.msra.mxu0 0.0
        %2272 = vmatpush.xpose.msra.mxu0 0.0
        %2273 = vmatpush.xpose.msra.mxu0 0.0
        %2274 = vmatpush.xpose.msra.mxu0 0.0
        %2275 = vmatpush.xpose.msra.mxu0 0.0
        %2276 = vmatpush.xpose.msra.mxu0 0.0
        %2277 = vmatpush.xpose.msra.mxu0 0.0
        %2278 = vmatpush.xpose.msra.mxu0 0.0
        %2279 = vmatpush.xpose.msra.mxu0 0.0
        %2280 = vmatpush.xpose.msra.mxu0 0.0
        %2281 = vmatpush.xpose.msra.mxu0 0.0
        %2282 = vmatpush.xpose.msra.mxu0 0.0
        %2283 = vmatpush.xpose.msra.mxu0 0.0
        %2284 = vmatpush.xpose.msra.mxu0 0.0
        %2285 = vmatpush.xpose.msra.mxu0 %v2268
        %2286 = vmatmul.f32.gmra.mxu0 %v2266
        %v2287 = vpop.f32.mrf.mxu0
        %v2288 = vadd.f32 0.0, %v2287
        %2289 = vdwg.mxu0
        %v2290 = vperm.slane %v1974, 0
        %2291 = vrot.lane.b32.xlu0 %v2290, 112
        %v2292 = vpop.permute.xlu0 %2291
        %2293 = vrot.lane.b32.xlu0 %v1961, 112
        %v2294 = vpop.permute.xlu0 %2293
        %v2295 = vsel %vm1113, %v2292, 0
        %v2297 = vsel %vm1113, %v2294, 0
        %2299 = vmatpush.xpose.msra.mxu0 0.0
        %2300 = vmatpush.xpose.msra.mxu0 0.0
        %2301 = vmatpush.xpose.msra.mxu0 0.0
        %2302 = vmatpush.xpose.msra.mxu0 0.0
        %2303 = vmatpush.xpose.msra.mxu0 0.0
        %2304 = vmatpush.xpose.msra.mxu0 0.0
        %2305 = vmatpush.xpose.msra.mxu0 0.0
        %2306 = vmatpush.xpose.msra.mxu0 0.0
        %2307 = vmatpush.xpose.msra.mxu0 0.0
        %2308 = vmatpush.xpose.msra.mxu0 0.0
        %2309 = vmatpush.xpose.msra.mxu0 0.0
        %2310 = vmatpush.xpose.msra.mxu0 0.0
        %2311 = vmatpush.xpose.msra.mxu0 0.0
        %2312 = vmatpush.xpose.msra.mxu0 0.0
        %2313 = vmatpush.xpose.msra.mxu0 0.0
        %2314 = vmatpush.xpose.msra.mxu0 %v2297
        %2315 = vmatmul.f32.gmra.mxu0 %v2295
        %v2316 = vpop.f32.mrf.mxu0
        %v2317 = vadd.f32 0.0, %v2316
        %2318 = vdwg.mxu0
        %v2319 = vperm.slane %v1975, 0
        %2320 = vrot.lane.b32.xlu0 %v2319, 112
        %v2321 = vpop.permute.xlu0 %2320
        %2322 = vrot.lane.b32.xlu0 %v1964, 112
        %v2323 = vpop.permute.xlu0 %2322
        %v2324 = vsel %vm1113, %v2321, 0
        %v2326 = vsel %vm1113, %v2323, 0
        %2328 = vmatpush.xpose.msra.mxu0 0.0
        %2329 = vmatpush.xpose.msra.mxu0 0.0
        %2330 = vmatpush.xpose.msra.mxu0 0.0
        %2331 = vmatpush.xpose.msra.mxu0 0.0
        %2332 = vmatpush.xpose.msra.mxu0 0.0
        %2333 = vmatpush.xpose.msra.mxu0 0.0
        %2334 = vmatpush.xpose.msra.mxu0 0.0
        %2335 = vmatpush.xpose.msra.mxu0 0.0
        %2336 = vmatpush.xpose.msra.mxu0 0.0
        %2337 = vmatpush.xpose.msra.mxu0 0.0
        %2338 = vmatpush.xpose.msra.mxu0 0.0
        %2339 = vmatpush.xpose.msra.mxu0 0.0
        %2340 = vmatpush.xpose.msra.mxu0 0.0
        %2341 = vmatpush.xpose.msra.mxu0 0.0
        %2342 = vmatpush.xpose.msra.mxu0 0.0
        %2343 = vmatpush.xpose.msra.mxu0 %v2326
        %2344 = vmatmul.f32.gmra.mxu0 %v2324
        %v2345 = vpop.f32.mrf.mxu0
        %v2346 = vadd.f32 0.0, %v2345
        %2347 = vdwg.mxu0
        %v2348 = vmul.f32 %v2259, 0.25
        %v2349 = vmul.f32 %v2288, 0.25
        %v2350 = vmul.f32 %v2317, 0.25
        %v2351 = vmul.f32 %v2346, 0.25
        %v2352 = vadd.f32 %v2348, %v1966
        %v2353 = vadd.f32 %v2349, %v1966
        %v2354 = vadd.f32 %v2350, %v1966
        %v2355 = vadd.f32 %v2351, %v1966
        %v2356 = vsel %vm1230, %v2352, -inf
        %2357 = vmax.xlane.f32.xlu0 %v2356
        %v2358 = vpop.xlane.xlu0 %2357
        %v2359 = vsel %vm1230, %v2353, -inf
        %2360 = vmax.xlane.f32.xlu0 %v2359
        %v2361 = vpop.xlane.xlu0 %2360
        %v2362 = vsel %vm1230, %v2354, -inf
        %2363 = vmax.xlane.f32.xlu0 %v2362
        %v2364 = vpop.xlane.xlu0 %2363
        %v2365 = vsel %vm1230, %v2355, -inf
        %2366 = vmax.xlane.f32.xlu0 %v2365
        %v2367 = vpop.xlane.xlu0 %2366
        %v2368 = vsub.f32 %v2352, %v2358
        %v2369 = vsub.f32 %v2353, %v2361
        %v2370 = vsub.f32 %v2354, %v2364
        %v2371 = vsub.f32 %v2355, %v2367
        %v2372 = vmul.f32 %v2368, 1.442695
        %v2373 = vpow.pop %v2372
        %v2374 = vmul.f32 %v2369, 1.442695
        %v2375 = vpow.pop %v2374
        %v2376 = vmul.f32 %v2370, 1.442695
        %v2377 = vpow.pop %v2376
        %v2378 = vmul.f32 %v2371, 1.442695
        %v2379 = vpow.pop %v2378
        %v2380 = vsel %vm1230, %v2373, 0.0
        %2381 = vadd.xlane.f32.xlu0 %v2380
        %v2382 = vpop.xlane.xlu0 %2381
        %v2383 = vsel %vm1230, %v2375, 0.0
        %2384 = vadd.xlane.f32.xlu0 %v2383
        %v2385 = vpop.xlane.xlu0 %2384
        %v2386 = vsel %vm1230, %v2377, 0.0
        %2387 = vadd.xlane.f32.xlu0 %v2386
        %v2388 = vpop.xlane.xlu0 %2387
        %v2389 = vsel %vm1230, %v2379, 0.0
        %2390 = vadd.xlane.f32.xlu0 %v2389
        %v2391 = vpop.xlane.xlu0 %2390
        %v2392 = vrcp.pop %v2382
        %v2393 = vrcp.pop %v2385
        %v2394 = vrcp.pop %v2388
        %v2395 = vrcp.pop %v2391
        %v2396 = vmul.f32 %v2373, %v2392
        %v2397 = vmul.f32 %v2375, %v2393
        %v2398 = vmul.f32 %v2377, %v2394
        %v2399 = vmul.f32 %v2379, %v2395
        %2400 = vrot.lane.b32.xlu0 %v1955, 80
        %v2401 = vpop.permute.xlu0 %2400
        %v2404 = vsel %vm1278, %v2396, 0
        %2406 = vmatpush.msra.mxu0 0.0
        %2407 = vmatpush.msra.mxu0 0.0
        %2408 = vmatpush.msra.mxu0 0.0
        %2409 = vmatpush.msra.mxu0 0.0
        %2410 = vmatpush.msra.mxu0 0.0
        %2411 = vmatpush.msra.mxu0 0.0
        %2412 = vmatpush.msra.mxu0 0.0
        %2413 = vmatpush.msra.mxu0 0.0
        %2414 = vmatpush.msra.mxu0 0.0
        %2415 = vmatpush.msra.mxu0 0.0
        %2416 = vmatpush.msra.mxu0 0.0
        %2417 = vmatpush.msra.mxu0 0.0
        %2418 = vmatpush.msra.mxu0 0.0
        %2419 = vmatpush.msra.mxu0 0.0
        %2420 = vmatpush.msra.mxu0 0.0
        %2421 = vmatpush.msra.mxu0 %v2401
        %2422 = vmatmul.f32.gmra.mxu0 %v2404
        %v2423 = vpop.f32.mrf.mxu0
        %v2424 = vadd.f32 0.0, %v2423
        %2425 = vdwg.mxu0
        %2426 = vrot.lane.b32.xlu0 %v1958, 80
        %v2427 = vpop.permute.xlu0 %2426
        %v2430 = vsel %vm1278, %v2397, 0
        %2432 = vmatpush.msra.mxu0 0.0
        %2433 = vmatpush.msra.mxu0 0.0
        %2434 = vmatpush.msra.mxu0 0.0
        %2435 = vmatpush.msra.mxu0 0.0
        %2436 = vmatpush.msra.mxu0 0.0
        %2437 = vmatpush.msra.mxu0 0.0
        %2438 = vmatpush.msra.mxu0 0.0
        %2439 = vmatpush.msra.mxu0 0.0
        %2440 = vmatpush.msra.mxu0 0.0
        %2441 = vmatpush.msra.mxu0 0.0
        %2442 = vmatpush.msra.mxu0 0.0
        %2443 = vmatpush.msra.mxu0 0.0
        %2444 = vmatpush.msra.mxu0 0.0
        %2445 = vmatpush.msra.mxu0 0.0
        %2446 = vmatpush.msra.mxu0 0.0
        %2447 = vmatpush.msra.mxu0 %v2427
        %2448 = vmatmul.f32.gmra.mxu0 %v2430
        %v2449 = vpop.f32.mrf.mxu0
        %v2450 = vadd.f32 0.0, %v2449
        %2451 = vdwg.mxu0
        %2452 = vrot.lane.b32.xlu0 %v1961, 80
        %v2453 = vpop.permute.xlu0 %2452
        %v2456 = vsel %vm1278, %v2398, 0
        %2458 = vmatpush.msra.mxu0 0.0
        %2459 = vmatpush.msra.mxu0 0.0
        %2460 = vmatpush.msra.mxu0 0.0
        %2461 = vmatpush.msra.mxu0 0.0
        %2462 = vmatpush.msra.mxu0 0.0
        %2463 = vmatpush.msra.mxu0 0.0
        %2464 = vmatpush.msra.mxu0 0.0
        %2465 = vmatpush.msra.mxu0 0.0
        %2466 = vmatpush.msra.mxu0 0.0
        %2467 = vmatpush.msra.mxu0 0.0
        %2468 = vmatpush.msra.mxu0 0.0
        %2469 = vmatpush.msra.mxu0 0.0
        %2470 = vmatpush.msra.mxu0 0.0
        %2471 = vmatpush.msra.mxu0 0.0
        %2472 = vmatpush.msra.mxu0 0.0
        %2473 = vmatpush.msra.mxu0 %v2453
        %2474 = vmatmul.f32.gmra.mxu0 %v2456
        %v2475 = vpop.f32.mrf.mxu0
        %v2476 = vadd.f32 0.0, %v2475
        %2477 = vdwg.mxu0
        %2478 = vrot.lane.b32.xlu0 %v1964, 80
        %v2479 = vpop.permute.xlu0 %2478
        %v2482 = vsel %vm1278, %v2399, 0
        %2484 = vmatpush.msra.mxu0 0.0
        %2485 = vmatpush.msra.mxu0 0.0
        %2486 = vmatpush.msra.mxu0 0.0
        %2487 = vmatpush.msra.mxu0 0.0
        %2488 = vmatpush.msra.mxu0 0.0
        %2489 = vmatpush.msra.mxu0 0.0
        %2490 = vmatpush.msra.mxu0 0.0
        %2491 = vmatpush.msra.mxu0 0.0
        %2492 = vmatpush.msra.mxu0 0.0
        %2493 = vmatpush.msra.mxu0 0.0
        %2494 = vmatpush.msra.mxu0 0.0
        %2495 = vmatpush.msra.mxu0 0.0
        %2496 = vmatpush.msra.mxu0 0.0
        %2497 = vmatpush.msra.mxu0 0.0
        %2498 = vmatpush.msra.mxu0 0.0
        %2499 = vmatpush.msra.mxu0 %v2479
        %2500 = vmatmul.f32.gmra.mxu0 %v2482
        %v2501 = vpop.f32.mrf.mxu0
        %v2502 = vadd.f32 0.0, %v2501
        %2503 = vdwg.mxu0
        %v2508 = vrot.slane %v2450, 7
        %v2509 = vsel %vm1653, %v2508, %v2424
        %v2510 = vrot.slane %v2476, 6
        %v2511 = vsel %vm1656, %v2510, %v2509
        %v2512 = vrot.slane %v2502, 5
        %v2513 = vsel %vm1659, %v2512, %v2511
        %v2514 = vsel %vm1113, %v2513, 0
        %2516 = vmatpush.msra.mxu0 0.0
        %2517 = vmatpush.msra.mxu0 0.0
        %2518 = vmatpush.msra.mxu0 0.0
        %2519 = vmatpush.msra.mxu0 0.0
        %2520 = vmatpush.msra.mxu0 0.0
        %2521 = vmatpush.msra.mxu0 0.0
        %2522 = vmatpush.msra.mxu0 0.0
        %2523 = vmatpush.msra.mxu0 0.0
        %2524 = vmatpush.msra.mxu0 0.0
        %2525 = vmatpush.msra.mxu0 0.0
        %2526 = vmatpush.msra.mxu0 0.0
        %2527 = vmatpush.msra.mxu0 0.0
        %2528 = vmatpush.msra.mxu0 0.0
        %2529 = vmatpush.msra.mxu0 0.0
        %2530 = vmatpush.msra.mxu0 %v1970
        %2531 = vmatpush.msra.mxu0 %v1969
        %2532 = vmatmul.f32.gmra.mxu0 %v2514
        %v2533 = vpop.f32.mrf.mxu0
        %v2534 = vadd.f32 0.0, %v2533
        %2535 = vdwg.mxu0
        %v2540 = vrot.slane %v2178, 7
        %v2541 = vsel %vm1653, %v2540, %v2152
        %v2542 = vrot.slane %v2204, 6
        %v2543 = vsel %vm1656, %v2542, %v2541
        %v2544 = vrot.slane %v2230, 5
        %v2545 = vsel %vm1659, %v2544, %v2543
        %v2546 = vsel %vm1113, %v2545, 0
        %2548 = vmatpush.msra.mxu0 0.0
        %2549 = vmatpush.msra.mxu0 0.0
        %2550 = vmatpush.msra.mxu0 0.0
        %2551 = vmatpush.msra.mxu0 0.0
        %2552 = vmatpush.msra.mxu0 0.0
        %2553 = vmatpush.msra.mxu0 0.0
        %2554 = vmatpush.msra.mxu0 0.0
        %2555 = vmatpush.msra.mxu0 0.0
        %2556 = vmatpush.msra.mxu0 0.0
        %2557 = vmatpush.msra.mxu0 0.0
        %2558 = vmatpush.msra.mxu0 0.0
        %2559 = vmatpush.msra.mxu0 0.0
        %2560 = vmatpush.msra.mxu0 0.0
        %2561 = vmatpush.msra.mxu0 0.0
        %2562 = vmatpush.msra.mxu0 %v1968
        %2563 = vmatpush.msra.mxu0 %v1967
        %2564 = vmatmul.f32.gmra.mxu0 %v2546
        %v2565 = vpop.f32.mrf.mxu0
        %v2566 = vadd.f32 %v2534, %v2565
        %2567 = vdwg.mxu0
        %v2569 = vperm.slane %v1971, 0
        %v2571 = vadd.f32 %v2566, %v2569
        %v2573 = vrot.slane %v2571, 1
        %v2574 = vrot.slane %v2571, 2
        %v2575 = vrot.slane %v2571, 3
        %v2576 = vrot.slane %v2571, 4
        %v2581 = vadd.f32 %v1728, %v2573
        %v2582 = vadd.f32 %v1729, %v2574
        %v2583 = vadd.f32 %v1730, %v2575
        %v2584 = vadd.f32 %v1731, %v2576
        %v2585 = vld [vmem:[#allocation5] sm:$0x1]
        %v2586 = vld [vmem:[#allocation7] sm:$0x1]
        %v2591 = vrot.slane %v2582, 7
        %v2592 = vrot.slane %v2583, 6
        %v2593 = vsel %vm1653, %v2592, %v2591
        %v2594 = vrot.slane %v2584, 5
        %v2595 = vsel %vm1656, %v2594, %v2593
        %v2598 = vsel %vm1745, %v2581, 0.0
        %2599 = vadd.xlane.f32.xlu0 %v2598
        %v2600 = vpop.xlane.xlu0 %2599
        %v2601 = vsel %vm1749, %v2595, 0.0
        %2602 = vadd.xlane.f32.xlu0 %v2601
        %v2603 = vpop.xlane.xlu0 %2602
        %v2604 = vmul.f32 %v2581, %v2581
        %v2605 = vmul.f32 %v2582, %v2582
        %v2606 = vmul.f32 %v2583, %v2583
        %v2607 = vmul.f32 %v2584, %v2584
        %v2612 = vrot.slane %v2605, 7
        %v2613 = vrot.slane %v2606, 6
        %v2614 = vsel %vm1653, %v2613, %v2612
        %v2615 = vrot.slane %v2607, 5
        %v2616 = vsel %vm1656, %v2615, %v2614
        %v2619 = vsel %vm1745, %v2604, 0.0
        %2620 = vadd.xlane.f32.xlu0 %v2619
        %v2621 = vpop.xlane.xlu0 %2620
        %v2622 = vsel %vm1749, %v2616, 0.0
        %2623 = vadd.xlane.f32.xlu0 %v2622
        %v2624 = vpop.xlane.xlu0 %2623
        %v2625 = vmul.f32 %v2600, %v896
        %v2626 = vmul.f32 %v2603, %v896
        %v2627 = vmul.f32 %v2600, %v2625
        %v2628 = vmul.f32 %v2603, %v2626
        %v2629 = vsub.f32 %v2621, %v2627
        %v2630 = vsub.f32 %v2624, %v2628
        %v2631 = vmul.f32 %v2629, %v915
        %v2632 = vmul.f32 %v2630, %v915
        %v2633 = vmax.f32 %v2631, 0.0
        %v2634 = vmax.f32 %v2632, 0.0
        %v2637 = vrot.slane %v2626, 1
        %v2638 = vrot.slane %v2626, 2
        %v2639 = vrot.slane %v2626, 3
        %v2644 = vsub.f32 %v2581, %v2625
        %v2645 = vsub.f32 %v2582, %v2637
        %v2646 = vsub.f32 %v2583, %v2638
        %v2647 = vsub.f32 %v2584, %v2639
        %v2648 = vrsqrt.pop %v2633
        %v2649 = vmul.f32 %v2648, %v2633
        %v2650 = vmul.f32 %v2649, %v2648
        %v2651 = vmul.f32 0.5, %v2650
        %v2652 = vsub.f32 1.5, %v2651
        %v2653 = vmul.f32 %v2648, %v2652
        %v2654 = vmul.f32 %v2633, %v2653
        %vm2655 = vcmp.eq.f32.partialorder %v2633, inf
        %v2656 = vsel %vm2655, %v2633, %v2654
        %vm2657 = vcmp.eq.f32.partialorder %v2633, 0.0
        %v2658 = vand.u32 %v2633, 2147483648
        %v2659 = vsel %vm2657, %v2658, %v2656
        %v2660 = vrsqrt.pop %v2634
        %v2661 = vmul.f32 %v2660, %v2634
        %v2662 = vmul.f32 %v2661, %v2660
        %v2663 = vmul.f32 0.5, %v2662
        %v2664 = vsub.f32 1.5, %v2663
        %v2665 = vmul.f32 %v2660, %v2664
        %v2666 = vmul.f32 %v2634, %v2665
        %vm2667 = vcmp.eq.f32.partialorder %v2634, inf
        %v2668 = vsel %vm2667, %v2634, %v2666
        %vm2669 = vcmp.eq.f32.partialorder %v2634, 0.0
        %v2670 = vand.u32 %v2634, 2147483648
        %v2671 = vsel %vm2669, %v2670, %v2668
        %v2672 = vadd.f32 %v2659, 1e-06
        %v2673 = vadd.f32 %v2671, 1e-06
        %v2675 = vperm.slane %v2585, 0
        %v2677 = vrcp.pop %v2672
        %v2678 = vmul.f32 %v2672, %v2677
        %v2679 = vsub.f32 1.0, %v2678
        %v2680 = vmul.f32 %v2677, %v2679
        %v2681 = vadd.f32 %v2677, %v2680
        %vm2682 = vweird.f32 %v2672
        %vm2683 = vweird.f32 %v2677
        %vm2684 = vmor %vm2682, %vm2683
        %v2685 = vsel %vm2684, %v2677, %v2681
        %v2686 = vand.u32 2147483647, %v2672
        %vm2687 = vcmp.eq.f32.partialorder %v2686, 8.507059e+37
        %v2688 = vand.u32 %v2672, 2147483648
        %v2689 = vor.u32 1.1754944e-38, %v2688
        %v2690 = vsel %vm2687, %v2689, %v2685
        %v2691 = vmul.f32 %v2675, %v2690
        %v2692 = vrcp.pop %v2673
        %v2693 = vmul.f32 %v2673, %v2692
        %v2694 = vsub.f32 1.0, %v2693
        %v2695 = vmul.f32 %v2692, %v2694
        %v2696 = vadd.f32 %v2692, %v2695
        %vm2697 = vweird.f32 %v2673
        %vm2698 = vweird.f32 %v2692
        %vm2699 = vmor %vm2697, %vm2698
        %v2700 = vsel %vm2699, %v2692, %v2696
        %v2701 = vand.u32 2147483647, %v2673
        %vm2702 = vcmp.eq.f32.partialorder %v2701, 8.507059e+37
        %v2703 = vand.u32 %v2673, 2147483648
        %v2704 = vor.u32 1.1754944e-38, %v2703
        %v2705 = vsel %vm2702, %v2704, %v2700
        %v2706 = vmul.f32 %v2675, %v2705
        %v2709 = vrot.slane %v2706, 1
        %v2710 = vrot.slane %v2706, 2
        %v2711 = vrot.slane %v2706, 3
        %v2716 = vmul.f32 %v2644, %v2691
        %v2717 = vmul.f32 %v2645, %v2709
        %v2718 = vmul.f32 %v2646, %v2710
        %v2719 = vmul.f32 %v2647, %v2711
        %v2721 = vperm.slane %v2586, 0
        %v2723 = vadd.f32 %v2716, %v2721
        %v2724 = vadd.f32 %v2717, %v2721
        %v2725 = vadd.f32 %v2718, %v2721
        %v2726 = vadd.f32 %v2719, %v2721
        %v2727 = vld [vmem:[#allocation8] sm:$0xff]
        %v2728 = vld [vmem:[#allocation8 + $0x8] sm:$0xff]
        %v2729 = vld [vmem:[#allocation8 + $0x10] sm:$0xff]
        %v2730 = vld [vmem:[#allocation8 + $0x18] sm:$0xff]
        %v2731 = vld [vmem:[#allocation10] sm:$0x1]
        %v2733 = vperm.slane %v2731, 0
        %v2739 = vrot.slane %v2723, 7
        %v2740 = vrot.slane %v2724, 6
        %v2741 = vsel %vm1653, %v2740, %v2739
        %v2742 = vrot.slane %v2725, 5
        %v2743 = vsel %vm1656, %v2742, %v2741
        %v2744 = vrot.slane %v2726, 4
        %v2745 = vsel %vm1659, %v2744, %v2743
        %v2746 = vsel %vm861, %v2745, 0
        %2748 = vmatpush.msra.mxu0 0.0
        %2749 = vmatpush.msra.mxu0 0.0
        %2750 = vmatpush.msra.mxu0 0.0
        %2751 = vmatpush.msra.mxu0 0.0
        %2752 = vmatpush.msra.mxu0 0.0
        %2753 = vmatpush.msra.mxu0 0.0
        %2754 = vmatpush.msra.mxu0 0.0
        %2755 = vmatpush.msra.mxu0 0.0
        %2756 = vmatpush.msra.mxu0 0.0
        %2757 = vmatpush.msra.mxu0 0.0
        %2758 = vmatpush.msra.mxu0 0.0
        %2759 = vmatpush.msra.mxu0 0.0
        %2760 = vmatpush.msra.mxu0 %v2730
        %2761 = vmatpush.msra.mxu0 %v2729
        %2762 = vmatpush.msra.mxu0 %v2728
        %2763 = vmatpush.msra.mxu0 %v2727
        %2764 = vmatmul.f32.gmra.mxu0 %v2746
        %v2765 = vpop.f32.mrf.mxu0
        %v2766 = vadd.f32 %v2733, %v2765
        %2767 = vdwg.mxu0
        %v2768 = vmax.f32 %v2766, 0.0
        %v2769 = vld [vmem:[%s22] sm:$0xff]
        %v2770 = vld [vmem:[%s22 + $0x8] sm:$0xff]
        %v2771 = vld [vmem:[%s22 + $0x10] sm:$0xff]
        %v2772 = vld [vmem:[%s22 + $0x18] sm:$0xff]
        %v2773 = vld [vmem:[%s22 + $0x20] sm:$0xff]
        %v2774 = vld [vmem:[%s22 + $0x28] sm:$0xff]
        %v2775 = vld [vmem:[%s22 + $0x30] sm:$0xff]
        %v2776 = vld [vmem:[%s22 + $0x38] sm:$0xff]
        %v2777 = vld [vmem:[#allocation11] sm:$0x1]
        %v2779 = vperm.slane %v2777, 0
        %vm2781 = vcmask 523264
        %v2783 = vsel %vm2781, %v2768, 0
        %2785 = vmatpush.msra.mxu0 0.0
        %2786 = vmatpush.msra.mxu0 0.0
        %2787 = vmatpush.msra.mxu0 0.0
        %2788 = vmatpush.msra.mxu0 0.0
        %2789 = vmatpush.msra.mxu0 0.0
        %2790 = vmatpush.msra.mxu0 0.0
        %2791 = vmatpush.msra.mxu0 0.0
        %2792 = vmatpush.msra.mxu0 0.0
        %2793 = vmatpush.msra.mxu0 %v2776
        %2794 = vmatpush.msra.mxu0 %v2775
        %2795 = vmatpush.msra.mxu0 %v2774
        %2796 = vmatpush.msra.mxu0 %v2773
        %2797 = vmatpush.msra.mxu0 %v2772
        %2798 = vmatpush.msra.mxu0 %v2771
        %2799 = vmatpush.msra.mxu0 %v2770
        %2800 = vmatpush.msra.mxu0 %v2769
        %2801 = vmatmul.f32.gmra.mxu0 %v2783
        %v2802 = vpop.f32.mrf.mxu0
        %v2803 = vadd.f32 %v2779, %v2802
        %2804 = vdwg.mxu0
        %v2806 = vrot.slane %v2803, 1
        %v2807 = vrot.slane %v2803, 2
        %v2808 = vrot.slane %v2803, 3
        %v2809 = vrot.slane %v2803, 4
        %v2814 = vadd.f32 %v2581, %v2806
        %v2815 = vadd.f32 %v2582, %v2807
        %v2816 = vadd.f32 %v2583, %v2808
        %v2817 = vadd.f32 %v2584, %v2809
        %2818 = vst.msk [vmem:[%s837 - $0x7] sm:$0x80] %vm1745, %v2814
        %2819 = vst.msk [vmem:[%s837 - $0x6] sm:$0x80] %vm1745, %v2815
        %2820 = vst.msk [vmem:[%s837 - $0x5] sm:$0x80] %vm1745, %v2816
        %2821 = vst.msk [vmem:[%s837 - $0x4] sm:$0x80] %vm1745, %v2817
        %s2822 = sand.u32 %s564, 1
        %s2823 = scalar_lea.sflag [#allocation4], %s2822
        %s2824 = sand.u32 %s564, 1
        %s2825 = smul.addr %s2824, 4
        %s2826 = scalar_lea.vmem [#allocation13], %s2825
        // Predicated region
        $region141: #{decoder_layer.1} parent=115 // pred_check
          %p2827 = pneg %p574
        $region142: #{decoder_layer.1} parent=115 // pred_check_branch
          %2829 = sbr.rel (%p2827) target = $region144
        $region143: #{decoder_layer.1} parent=115 // pred_region
          %s2830 = smul.u32 4, %s42
          %2832 = vsyncadd %s2823, 0
          %s2833 = scalar_lea.hbm %s24, %s2830
          %s2834 = sshll.u32 %s2826, 4
          %s2835 = int_to_ptr.vmem [resolvable:$true] %s2834
          %s2836 = sshll.u32 %s2833, 4
          %s2837 = int_to_ptr.hbm [resolvable:$true] %s2836
          %2842 = dma.vmem_to_hbm [thread:$0]  %s2835, 64, %s2837, %s2823, 16, 16, 1
        $region144: #{decoder_layer.1} parent=115 // pred_fallthru
          _
      $region116: #{decoder_layer.1} parent=5 // pred_fallthru
        _
      %p2843 = scmp.le.s32.totalorder 2, %s37
      // Predicated region
      $region145: #{decoder_layer.1} parent=5 // pred_check
        %p2844 = pneg %p2843
      $region146: #{decoder_layer.1} parent=5 // pred_check_branch
        %2846 = sbr.rel (%p2844) target = $region148
      $region147: #{decoder_layer.1} parent=5 // pred_region
        %s2847 = ssub.s32 %s37, 2
        // Predicated region
        $region149: #{decoder_layer.1} parent=147 // pred_check
          %p2848 = pneg %p580
        $region150: #{decoder_layer.1} parent=147 // pred_check_branch
          %2850 = sbr.rel (%p2848) target = $region152
        $region151: #{decoder_layer.1} parent=147 // pred_region
          %s2851 = sand.u32 %s565, 1
          %s2852 = scalar_lea.sflag [#allocation4], %s2851
          %s2853 = sand.u32 %s565, 1
          %s2854 = smul.addr %s2853, 4
          %s2855 = scalar_lea.vmem [#allocation13], %s2854
          %2857 = dma.done %s2852, 64
        $region152: #{decoder_layer.1} parent=147 // pred_fallthru
          _
      $region148: #{decoder_layer.1} parent=5 // pred_fallthru
        _
    $region6: #{decoder_layer.1} parent=1 // loop_footer
      %s41 = sadd.s32 1, %s37
    $region7: #{decoder_layer.1} parent=1 // loop_footer_branch
      %36 = sbr.rel target = $region3
    $region8: #{decoder_layer.1} parent=1 // loop_exit
      _
    %2858 = vsyncpa [#allocation3], 1
    %s2859 = scalar_lea.sflag [#allocation3], 1
    %2860 = vsyncpa %s2859, 1
    %2861 = vsyncpa [#allocation6], 1
    %2862 = vsyncpa [#allocation9], 1
    %2863 = vsyncpa [#allocation12], 1
    %2864 = vsyncpa [#allocation4], 1
    %s2865 = scalar_lea.sflag [#allocation4], 1
    %2866 = vsyncpa %s2865, 1

</llo_original>
